<compile_context>
chip_gen: v6e
topology: v6e:2x2x1
jax: 0.10.0
libtpu: 0.0.40
codegen_flags: <defaults>
</compile_context>

<pallas_src>
import functools

import jax
import jax.numpy as jnp
import numpy as np
from jax.experimental import pallas as pl
from jax.experimental.pallas import tpu as pltpu

EPS = 1e-5                              # PyTorch BatchNorm2d default eps
VMEM_LIMIT_BYTES = 48 * 1024 * 1024     # below v7x's 64 MiB physical VMEM


# ------------------------------- Pallas kernel -------------------------------
def _dense_block_kernel(*refs, Cin, G, L, TH, W):
    """Whole DenseBlock, fused.

    refs layout:
      refs[0]                      x main tile          (TH, W, Cin)
      refs[1      : 1+L]           x halo rows above, t=1..L   (1, W, Cin) each
      refs[1+L    : 1+2L]          x halo rows below, t=1..L   (1, W, Cin) each
      refs[1+2L   : 1+2L+6L]       per-layer constants, 6 per layer:
                                     s1 (1,cin_j) f32, b1 (1,cin_j) f32,
                                     w1 (cin_j,G) bf16, cb1 (1,G) f32,
                                     w3 (9G,G)  bf16, cb3 (1,G) f32
      refs[1+8L]                   o_ref   (TH, W, Cin + L*G)
      refs[2+8L]                   pad_ref VMEM scratch (TH+2L, W+2, G) f32
    """
    x_main = refs[0]
    x_tops = refs[1:1 + L]                 # t = 1..L (t=1 closest to tile)
    x_bots = refs[1 + L:1 + 2 * L]         # t = 1..L
    layer_refs = [refs[1 + 2 * L + 6 * j: 1 + 2 * L + 6 * (j + 1)]
                  for j in range(L)]
    o_ref = refs[1 + 8 * L]
    pad_ref = refs[2 + 8 * L]

    i = pl.program_id(1)
    nt = pl.num_programs(1)
    top_ok = (i > 0).astype(jnp.float32)        # rows above the image are zero
    bot_ok = (i < nt - 1).astype(jnp.float32)   # rows below the image are zero

    # Extended x covering image rows [i*TH - L, i*TH + TH + L) (clamped rows are
    # later masked to zero where they fall outside the image).
    rows = [x_tops[t][...] for t in range(L - 1, -1, -1)]   # farthest halo first
    rows.append(x_main[...])
    rows += [x_bots[t][...] for t in range(L)]
    x_ext = jnp.concatenate(rows, axis=0).astype(jnp.float32)   # (TH+2L, W, Cin)

    feats = [x_ext]          # feats[0]: TH+2L rows; feats[k+1]: TH+2(L-1-k) rows
    for j in range(L):
        s1_ref, b1_ref, w1_ref, cb1_ref, w3_ref, cb3_ref = layer_refs[j]
        need = TH + 2 * (L - j)      # rows of this layer's (pointwise/conv) input

        # In-register dense concat of the trimmed feature parts.
        parts = [x_ext[j: j + need]]
        for k in range(j):
            trim = j - k - 1
            parts.append(feats[k + 1][trim: trim + need])
        xin = parts[0] if len(parts) == 1 else jnp.concatenate(parts, axis=-1)
        cin = Cin + j * G
        xin2 = xin.reshape(need * W, cin)

        # BN1 (folded) + ReLU in f32; 1x1 conv (+folded BN2) + ReLU on the MXU.
        h1 = jnp.maximum(xin2 * s1_ref[0:1, :] + b1_ref[0:1, :], 0.0)
        y = jnp.dot(h1.astype(jnp.bfloat16), w1_ref[...],
                    preferred_element_type=jnp.float32)
        h2 = jnp.maximum(y + cb1_ref[0:1, :], 0.0).reshape(need, W, G)

        # Zero the rows that fall outside the image: the 3x3 conv zero-pads its
        # input h2 (not BN(zero-padded x)).  Only the first/last row tile can
        # have out-of-image rows (TH >= L enforced by the wrapper).
        m = L - j
        h2 = jnp.concatenate(
            [h2[:m] * top_ok, h2[m:need - m], h2[need - m:] * bot_ok], axis=0)

        # 3x3 conv: spatially padded VMEM scratch (reused across layers), then
        # pack the 9 shifted windows along channels -> ONE (rows*W,9G)x(9G,G)
        # MXU matmul.
        zc = jnp.zeros((need, 1, G), jnp.float32)
        pad_ref[0:need, 0:1, :] = zc
        pad_ref[0:need, W + 1:W + 2, :] = zc
        pad_ref[0:need, 1:W + 1, :] = h2

        out_rows = need - 2
        wins = [pad_ref[dh:dh + out_rows, dw:dw + W, :]
                for dh in range(3) for dw in range(3)]
        winc = jnp.concatenate(wins, axis=-1).reshape(out_rows * W, 9 * G)
        acc = jnp.dot(winc.astype(jnp.bfloat16), w3_ref[...],
                      preferred_element_type=jnp.float32)
        feats.append((acc + cb3_ref[0:1, :]).reshape(out_rows, W, G))

    # Final dense concat of [x, f_0, ..., f_{L-1}] tile rows, single full store.
    out_parts = [x_ext[L: L + TH]]
    for j in range(L):
        trim = L - 1 - j
        out_parts.append(feats[j + 1][trim: trim + TH])
    o_ref[...] = jnp.concatenate(out_parts, axis=-1).astype(o_ref.dtype)


# ------------------------------- host wrappers --------------------------------
def _fold_bn(gamma, beta, mean, var):
    scale = gamma * jax.lax.rsqrt(var + EPS)
    return scale, beta - mean * scale


@functools.partial(jax.jit, static_argnames=("row_tile",))
def dense_block_forward(x_nchw, layers, *, row_tile=8):
    """Forward of DenseBlock.  Input/output in NCHW (PyTorch convention)."""
    x = jnp.transpose(x_nchw, (0, 2, 3, 1))          # NHWC, channels on lanes
    N, H, W, Cin = x.shape
    L = len(layers)
    G = int(layers[0]["cb1"].shape[0])
    TH = row_tile
    assert H % TH == 0, f"row_tile {TH} must divide H={H}"
    T = H // TH
    assert T == 1 or TH >= L, "row_tile must be >= num_layers (halo depth)"
    Ctot = Cin + L * G

    def body_idx(n, i):
        return (n, i, 0, 0)

    def const_idx(n, i):
        return (0, 0)

    def make_top(t):                    # image row t above the tile (clamped)
        def idx(n, i):
            return (n, jnp.maximum(i * TH - t, 0), 0, 0)
        return idx

    def make_bot(t):                    # image row t below the tile (clamped)
        def idx(n, i):
            return (n, jnp.minimum((i + 1) * TH - 1 + t, H - 1), 0, 0)
        return idx

    # Per-layer constants: fold BN1 into scale/bias, fold BN2 into the 1x1 conv,
    # pre-cast MXU operands (w1, w3) to bf16 on the host.
    const_args, const_specs = [], []
    for j, p in enumerate(layers):
        cin_j = Cin + j * G
        s1, b1 = _fold_bn(p["g1"], p["b1"], p["m1"], p["v1"])
        s2, b2 = _fold_bn(p["g2"], p["b2"], p["m2"], p["v2"])
        w1t = (p["w1"][:, :, 0, 0].T * s2[None, :]).astype(jnp.bfloat16)  # (cin,G)
        cb1 = p["cb1"] * s2 + b2                                          # (G,)
        # 3x3 weight packed (9G, G) with rows ordered (kh, kw, cin) to match the
        # in-kernel window packing order.
        w3f = jnp.transpose(p["w3"], (2, 3, 1, 0)).reshape(9 * G, G).astype(
            jnp.bfloat16)
        const_args += [s1.reshape(1, -1), b1.reshape(1, -1), w1t,
                       cb1.reshape(1, -1), w3f, p["cb3"].reshape(1, -1)]
        const_specs += [pl.BlockSpec((1, cin_j), const_idx),
                        pl.BlockSpec((1, cin_j), const_idx),
                        pl.BlockSpec((cin_j, G), const_idx),
                        pl.BlockSpec((1, G), const_idx),
                        pl.BlockSpec((9 * G, G), const_idx),
                        pl.BlockSpec((1, G), const_idx)]

    in_specs = (
        [pl.BlockSpec((None, TH, W, Cin), body_idx)]
        + [pl.BlockSpec((None, 1, W, Cin), make_top(t)) for t in range(1, L + 1)]
        + [pl.BlockSpec((None, 1, W, Cin), make_bot(t)) for t in range(1, L + 1)]
        + const_specs
    )

    kernel = functools.partial(_dense_block_kernel,
                               Cin=Cin, G=G, L=L, TH=TH, W=W)

    out = pl.pallas_call(
        kernel,
        out_shape=jax.ShapeDtypeStruct((N, H, W, Ctot), jnp.float32),
        grid=(N, T),
        in_specs=in_specs,
        out_specs=pl.BlockSpec((None, TH, W, Ctot), body_idx),
        scratch_shapes=[pltpu.VMEM((TH + 2 * L, W + 2, G), jnp.float32)],
        compiler_params=pltpu.CompilerParams(
            dimension_semantics=("parallel", "parallel"),
            vmem_limit_bytes=VMEM_LIMIT_BYTES,
        ),
    )(x, *([x] * (2 * L)), *const_args)

    return jnp.transpose(out, (0, 3, 1, 2))           # back to NCHW


# ------------------------ deterministic parameter init ------------------------
def make_dense_block_params(key, in_channels, growth_rate, num_layers):
    layers = []
    for i in range(num_layers):
        cin = in_channels + i * growth_rate
        g = growth_rate
        ks = jax.random.split(jax.random.fold_in(key, i), 12)
        layers.append(dict(
            g1=1.0 + 0.1 * jax.random.normal(ks[0], (cin,), jnp.float32),
            b1=0.1 * jax.random.normal(ks[1], (cin,), jnp.float32),
            m1=0.1 * jax.random.normal(ks[2], (cin,), jnp.float32),
            v1=1.0 + 0.1 * jax.random.uniform(ks[3], (cin,), jnp.float32),
            w1=0.3 * jax.random.normal(ks[4], (g, cin, 1, 1), jnp.float32),
            cb1=0.1 * jax.random.normal(ks[5], (g,), jnp.float32),
            g2=1.0 + 0.1 * jax.random.normal(ks[6], (g,), jnp.float32),
            b2=0.1 * jax.random.normal(ks[7], (g,), jnp.float32),
            m2=0.1 * jax.random.normal(ks[8], (g,), jnp.float32),
            v2=1.0 + 0.1 * jax.random.uniform(ks[9], (g,), jnp.float32),
            w3=0.3 * jax.random.normal(ks[10], (g, g, 3, 3), jnp.float32),
            cb3=0.1 * jax.random.normal(ks[11], (g,), jnp.float32),
        ))
    return layers


# --------------------------- pure-JAX reference (NCHW) ------------------------
def _ref_bn(x, g, b, m, v):
    r = lambda a: a.reshape(1, -1, 1, 1)
    return (x - r(m)) * r(g * jax.lax.rsqrt(v + EPS)) + r(b)


def _ref_conv(x, w, b, pad):
    out = jax.lax.conv_general_dilated(
        x, w, window_strides=(1, 1), padding=[(pad, pad), (pad, pad)],
        dimension_numbers=("NCHW", "OIHW", "NCHW"),
        precision=jax.lax.Precision.HIGHEST)
    return out + b.reshape(1, -1, 1, 1)


def ref_forward(x_nchw, layers):
    feats = [x_nchw]
    for p in layers:
        h = jnp.concatenate(feats, axis=1)
        h = jnp.maximum(_ref_bn(h, p["g1"], p["b1"], p["m1"], p["v1"]), 0.0)
        h = _ref_conv(h, p["w1"], p["cb1"], pad=0)
        h = jnp.maximum(_ref_bn(h, p["g2"], p["b2"], p["m2"], p["v2"]), 0.0)
        h = _ref_conv(h, p["w3"], p["cb3"], pad=1)
        feats.append(h)
    return jnp.concatenate(feats, axis=1)


# ------------------------------------ main -------------------------------------
if __name__ == "__main__":
    key = jax.random.PRNGKey(0)
    kx, kp = jax.random.split(key)

    N, Cin, H, W = 2, 4, 16, 16
    growth_rate, num_layers = 4, 3

    x = jax.random.normal(kx, (N, Cin, H, W), jnp.float32)
    params = make_dense_block_params(kp, Cin, growth_rate, num_layers)

    # row_tile=8 -> (batch=2, row_tiles=2) grid: exercises pipelining, megacore
    # parallelism and the multi-layer cross-tile halo path while staying far
    # under the v7x 64 MiB VMEM budget.
    out = jax.block_until_ready(dense_block_forward(x, params, row_tile=8))
    ref = jax.block_until_ready(ref_forward(x, params))

    assert out.shape == (N, Cin + growth_rate * num_layers, H, W), out.shape
    # Kernel uses bf16 MXU operands (f32 accumulation); tolerance vs. the f32
    # HIGHEST-precision reference is sized for bf16 rounding accumulated over
    # the 3-layer block.
    np.testing.assert_allclose(np.asarray(out), np.asarray(ref),
                               rtol=5e-2, atol=5e-2)
    print("KERNEL_OK")
</pallas_src>

<mosaic_0001>
module attributes {stable_mosaic.version = 11 : i64} {
  func.func @_dense_block_kernel(%arg0: i32, %arg1: i32, %arg2: memref<1x8x16x4xf32, #tpu.memory_space<vmem>>, %arg3: memref<1x1x16x4xf32, #tpu.memory_space<vmem>>, %arg4: memref<1x1x16x4xf32, #tpu.memory_space<vmem>>, %arg5: memref<1x1x16x4xf32, #tpu.memory_space<vmem>>, %arg6: memref<1x1x16x4xf32, #tpu.memory_space<vmem>>, %arg7: memref<1x1x16x4xf32, #tpu.memory_space<vmem>>, %arg8: memref<1x1x16x4xf32, #tpu.memory_space<vmem>>, %arg9: memref<1x4xf32, #tpu.memory_space<vmem>>, %arg10: memref<1x4xf32, #tpu.memory_space<vmem>>, %arg11: memref<4x4xbf16, #tpu.memory_space<vmem>>, %arg12: memref<1x4xf32, #tpu.memory_space<vmem>>, %arg13: memref<36x4xbf16, #tpu.memory_space<vmem>>, %arg14: memref<1x4xf32, #tpu.memory_space<vmem>>, %arg15: memref<1x8xf32, #tpu.memory_space<vmem>>, %arg16: memref<1x8xf32, #tpu.memory_space<vmem>>, %arg17: memref<8x4xbf16, #tpu.memory_space<vmem>>, %arg18: memref<1x4xf32, #tpu.memory_space<vmem>>, %arg19: memref<36x4xbf16, #tpu.memory_space<vmem>>, %arg20: memref<1x4xf32, #tpu.memory_space<vmem>>, %arg21: memref<1x12xf32, #tpu.memory_space<vmem>>, %arg22: memref<1x12xf32, #tpu.memory_space<vmem>>, %arg23: memref<12x4xbf16, #tpu.memory_space<vmem>>, %arg24: memref<1x4xf32, #tpu.memory_space<vmem>>, %arg25: memref<36x4xbf16, #tpu.memory_space<vmem>>, %arg26: memref<1x4xf32, #tpu.memory_space<vmem>>, %arg27: memref<1x8x16x16xf32, #tpu.memory_space<vmem>>, %arg28: memref<14x18x4xf32, #tpu.memory_space<vmem>>) attributes {dimension_semantics = [#tpu.dimension_semantics<parallel>, #tpu.dimension_semantics<parallel>], iteration_bounds = array<i64: 2, 2>, scalar_prefetch = 0 : i64, scratch_operands = 1 : i64, tpu.core_type = #tpu.core_type<tc>, window_params = [{transform_indices = @transform_0, window_bounds = array<i64: 1, 8, 16, 4>}, {transform_indices = @transform_1, window_bounds = array<i64: 1, 1, 16, 4>}, {transform_indices = @transform_2, window_bounds = array<i64: 1, 1, 16, 4>}, {transform_indices = @transform_3, window_bounds = array<i64: 1, 1, 16, 4>}, {transform_indices = @transform_4, window_bounds = array<i64: 1, 1, 16, 4>}, {transform_indices = @transform_5, window_bounds = array<i64: 1, 1, 16, 4>}, {transform_indices = @transform_6, window_bounds = array<i64: 1, 1, 16, 4>}, {pipeline_mode = #tpu.pipeline_mode<synchronous>, transform_indices = @transform_7, window_bounds = array<i64: 1, 4>}, {pipeline_mode = #tpu.pipeline_mode<synchronous>, transform_indices = @transform_8, window_bounds = array<i64: 1, 4>}, {pipeline_mode = #tpu.pipeline_mode<synchronous>, transform_indices = @transform_9, window_bounds = array<i64: 4, 4>}, {pipeline_mode = #tpu.pipeline_mode<synchronous>, transform_indices = @transform_10, window_bounds = array<i64: 1, 4>}, {pipeline_mode = #tpu.pipeline_mode<synchronous>, transform_indices = @transform_11, window_bounds = array<i64: 36, 4>}, {pipeline_mode = #tpu.pipeline_mode<synchronous>, transform_indices = @transform_12, window_bounds = array<i64: 1, 4>}, {pipeline_mode = #tpu.pipeline_mode<synchronous>, transform_indices = @transform_13, window_bounds = array<i64: 1, 8>}, {pipeline_mode = #tpu.pipeline_mode<synchronous>, transform_indices = @transform_14, window_bounds = array<i64: 1, 8>}, {pipeline_mode = #tpu.pipeline_mode<synchronous>, transform_indices = @transform_15, window_bounds = array<i64: 8, 4>}, {pipeline_mode = #tpu.pipeline_mode<synchronous>, transform_indices = @transform_16, window_bounds = array<i64: 1, 4>}, {pipeline_mode = #tpu.pipeline_mode<synchronous>, transform_indices = @transform_17, window_bounds = array<i64: 36, 4>}, {pipeline_mode = #tpu.pipeline_mode<synchronous>, transform_indices = @transform_18, window_bounds = array<i64: 1, 4>}, {pipeline_mode = #tpu.pipeline_mode<synchronous>, transform_indices = @transform_19, window_bounds = array<i64: 1, 12>}, {pipeline_mode = #tpu.pipeline_mode<synchronous>, transform_indices = @transform_20, window_bounds = array<i64: 1, 12>}, {pipeline_mode = #tpu.pipeline_mode<synchronous>, transform_indices = @transform_21, window_bounds = array<i64: 12, 4>}, {pipeline_mode = #tpu.pipeline_mode<synchronous>, transform_indices = @transform_22, window_bounds = array<i64: 1, 4>}, {pipeline_mode = #tpu.pipeline_mode<synchronous>, transform_indices = @transform_23, window_bounds = array<i64: 36, 4>}, {pipeline_mode = #tpu.pipeline_mode<synchronous>, transform_indices = @transform_24, window_bounds = array<i64: 1, 4>}, {transform_indices = @transform_25, window_bounds = array<i64: 1, 8, 16, 16>}]} {
    %c0_i32 = arith.constant 0 : i32
    %0 = arith.cmpi sgt, %arg1, %c0_i32 : i32
    %1 = arith.extui %0 : i1 to i32
    %2 = arith.sitofp %1 : i32 to f32
    %c1_i32 = arith.constant 1 : i32
    %3 = arith.cmpi slt, %arg1, %c1_i32 : i32
    %4 = arith.extui %3 : i1 to i32
    %5 = arith.sitofp %4 : i32 to f32
    %c0 = arith.constant 0 : index
    %c0_0 = arith.constant 0 : index
    %c0_1 = arith.constant 0 : index
    %c0_2 = arith.constant 0 : index
    %6 = vector.load %arg5[%c0, %c0_0, %c0_1, %c0_2] : memref<1x1x16x4xf32, #tpu.memory_space<vmem>>, vector<1x1x16x4xf32>
    %7 = vector.shape_cast %6 : vector<1x1x16x4xf32> to vector<1x16x4xf32>
    %c0_3 = arith.constant 0 : index
    %c0_4 = arith.constant 0 : index
    %c0_5 = arith.constant 0 : index
    %c0_6 = arith.constant 0 : index
    %8 = vector.load %arg4[%c0_3, %c0_4, %c0_5, %c0_6] : memref<1x1x16x4xf32, #tpu.memory_space<vmem>>, vector<1x1x16x4xf32>
    %9 = vector.shape_cast %8 : vector<1x1x16x4xf32> to vector<1x16x4xf32>
    %c0_7 = arith.constant 0 : index
    %c0_8 = arith.constant 0 : index
    %c0_9 = arith.constant 0 : index
    %c0_10 = arith.constant 0 : index
    %10 = vector.load %arg3[%c0_7, %c0_8, %c0_9, %c0_10] : memref<1x1x16x4xf32, #tpu.memory_space<vmem>>, vector<1x1x16x4xf32>
    %11 = vector.shape_cast %10 : vector<1x1x16x4xf32> to vector<1x16x4xf32>
    %c0_11 = arith.constant 0 : index
    %c0_12 = arith.constant 0 : index
    %c0_13 = arith.constant 0 : index
    %c0_14 = arith.constant 0 : index
    %12 = vector.load %arg2[%c0_11, %c0_12, %c0_13, %c0_14] : memref<1x8x16x4xf32, #tpu.memory_space<vmem>>, vector<1x8x16x4xf32>
    %13 = vector.shape_cast %12 : vector<1x8x16x4xf32> to vector<8x16x4xf32>
    %c0_15 = arith.constant 0 : index
    %c0_16 = arith.constant 0 : index
    %c0_17 = arith.constant 0 : index
    %c0_18 = arith.constant 0 : index
    %14 = vector.load %arg6[%c0_15, %c0_16, %c0_17, %c0_18] : memref<1x1x16x4xf32, #tpu.memory_space<vmem>>, vector<1x1x16x4xf32>
    %15 = vector.shape_cast %14 : vector<1x1x16x4xf32> to vector<1x16x4xf32>
    %c0_19 = arith.constant 0 : index
    %c0_20 = arith.constant 0 : index
    %c0_21 = arith.constant 0 : index
    %c0_22 = arith.constant 0 : index
    %16 = vector.load %arg7[%c0_19, %c0_20, %c0_21, %c0_22] : memref<1x1x16x4xf32, #tpu.memory_space<vmem>>, vector<1x1x16x4xf32>
    %17 = vector.shape_cast %16 : vector<1x1x16x4xf32> to vector<1x16x4xf32>
    %c0_23 = arith.constant 0 : index
    %c0_24 = arith.constant 0 : index
    %c0_25 = arith.constant 0 : index
    %c0_26 = arith.constant 0 : index
    %18 = vector.load %arg8[%c0_23, %c0_24, %c0_25, %c0_26] : memref<1x1x16x4xf32, #tpu.memory_space<vmem>>, vector<1x1x16x4xf32>
    %19 = vector.shape_cast %18 : vector<1x1x16x4xf32> to vector<1x16x4xf32>
    %20 = tpu.concatenate %7, %9, %11, %13, %15, %17, %19 in 0 : vector<1x16x4xf32>, vector<1x16x4xf32>, vector<1x16x4xf32>, vector<8x16x4xf32>, vector<1x16x4xf32>, vector<1x16x4xf32>, vector<1x16x4xf32> -> vector<14x16x4xf32>
    %21 = vector.shape_cast %20 : vector<14x16x4xf32> to vector<224x4xf32>
    %c0_27 = arith.constant 0 : index
    %c0_28 = arith.constant 0 : index
    %22 = vector.load %arg9[%c0_27, %c0_28] : memref<1x4xf32, #tpu.memory_space<vmem>>, vector<1x4xf32>
    %23 = vector.broadcast %22 : vector<1x4xf32> to vector<224x4xf32>
    %24 = arith.mulf %21, %23 : vector<224x4xf32>
    %c0_29 = arith.constant 0 : index
    %c0_30 = arith.constant 0 : index
    %25 = vector.load %arg10[%c0_29, %c0_30] : memref<1x4xf32, #tpu.memory_space<vmem>>, vector<1x4xf32>
    %26 = vector.broadcast %25 : vector<1x4xf32> to vector<224x4xf32>
    %27 = arith.addf %24, %26 : vector<224x4xf32>
    %cst = arith.constant 0.000000e+00 : f32
    %28 = vector.broadcast %cst : f32 to vector<224x4xf32>
    %29 = arith.maximumf %27, %28 : vector<224x4xf32>
    %30 = arith.truncf %29 : vector<224x4xf32> to vector<224x4xbf16>
    %c0_31 = arith.constant 0 : index
    %c0_32 = arith.constant 0 : index
    %31 = vector.load %arg11[%c0_31, %c0_32] : memref<4x4xbf16, #tpu.memory_space<vmem>>, vector<4x4xbf16>
    %cst_33 = arith.constant dense<0.000000e+00> : vector<224x4xf32>
    %32 = tpu.matmul %30, %31, %cst_33 {dimension_numbers = #tpu.dot_dimension_numbers<[1], [0], [0], [1], [0, 0, 1, 1], [], []>} : vector<224x4xbf16>, vector<4x4xbf16>, vector<224x4xf32> -> vector<224x4xf32>
    %c0_34 = arith.constant 0 : index
    %c0_35 = arith.constant 0 : index
    %33 = vector.load %arg12[%c0_34, %c0_35] : memref<1x4xf32, #tpu.memory_space<vmem>>, vector<1x4xf32>
    %34 = vector.broadcast %33 : vector<1x4xf32> to vector<224x4xf32>
    %35 = arith.addf %32, %34 : vector<224x4xf32>
    %cst_36 = arith.constant 0.000000e+00 : f32
    %36 = vector.broadcast %cst_36 : f32 to vector<224x4xf32>
    %37 = arith.maximumf %35, %36 : vector<224x4xf32>
    %38 = vector.shape_cast %37 : vector<224x4xf32> to vector<14x16x4xf32>
    %39 = vector.extract_strided_slice %38 {offsets = [0, 0, 0], sizes = [3, 16, 4], strides = [1, 1, 1]} : vector<14x16x4xf32> to vector<3x16x4xf32>
    %40 = vector.broadcast %2 : f32 to vector<3x16x4xf32>
    %41 = arith.mulf %39, %40 : vector<3x16x4xf32>
    %42 = vector.extract_strided_slice %38 {offsets = [3, 0, 0], sizes = [8, 16, 4], strides = [1, 1, 1]} : vector<14x16x4xf32> to vector<8x16x4xf32>
    %43 = vector.extract_strided_slice %38 {offsets = [11, 0, 0], sizes = [3, 16, 4], strides = [1, 1, 1]} : vector<14x16x4xf32> to vector<3x16x4xf32>
    %44 = vector.broadcast %5 : f32 to vector<3x16x4xf32>
    %45 = arith.mulf %43, %44 : vector<3x16x4xf32>
    %46 = tpu.concatenate %41, %42, %45 in 0 : vector<3x16x4xf32>, vector<8x16x4xf32>, vector<3x16x4xf32> -> vector<14x16x4xf32>
    %cst_37 = arith.constant 0.000000e+00 : f32
    %47 = vector.broadcast %cst_37 : f32 to vector<14x1x4xf32>
    %c0_38 = arith.constant 0 : index
    %c0_39 = arith.constant 0 : index
    %c0_40 = arith.constant 0 : index
    %48 = vector.load %arg28[%c0_38, %c0_39, %c0_40] : memref<14x18x4xf32, #tpu.memory_space<vmem>>, vector<14x1x4xf32>
    tpu.vector_store %arg28[%c0_38, %c0_39, %c0_40], %47 {strides = array<i32>} : memref<14x18x4xf32, #tpu.memory_space<vmem>>, vector<14x1x4xf32>,
    %c0_41 = arith.constant 0 : index
    %c17 = arith.constant 17 : index
    %c0_42 = arith.constant 0 : index
    %49 = vector.load %arg28[%c0_41, %c17, %c0_42] : memref<14x18x4xf32, #tpu.memory_space<vmem>>, vector<14x1x4xf32>
    tpu.vector_store %arg28[%c0_41, %c17, %c0_42], %47 {strides = array<i32>} : memref<14x18x4xf32, #tpu.memory_space<vmem>>, vector<14x1x4xf32>,
    %c0_43 = arith.constant 0 : index
    %c1 = arith.constant 1 : index
    %c0_44 = arith.constant 0 : index
    %50 = vector.load %arg28[%c0_43, %c1, %c0_44] : memref<14x18x4xf32, #tpu.memory_space<vmem>>, vector<14x16x4xf32>
    tpu.vector_store %arg28[%c0_43, %c1, %c0_44], %46 {strides = array<i32>} : memref<14x18x4xf32, #tpu.memory_space<vmem>>, vector<14x16x4xf32>,
    %c0_45 = arith.constant 0 : index
    %c0_46 = arith.constant 0 : index
    %c0_47 = arith.constant 0 : index
    %51 = vector.load %arg28[%c0_45, %c0_46, %c0_47] : memref<14x18x4xf32, #tpu.memory_space<vmem>>, vector<12x16x4xf32>
    %c0_48 = arith.constant 0 : index
    %c1_49 = arith.constant 1 : index
    %c0_50 = arith.constant 0 : index
    %52 = vector.load %arg28[%c0_48, %c1_49, %c0_50] : memref<14x18x4xf32, #tpu.memory_space<vmem>>, vector<12x16x4xf32>
    %c0_51 = arith.constant 0 : index
    %c2 = arith.constant 2 : index
    %c0_52 = arith.constant 0 : index
    %53 = vector.load %arg28[%c0_51, %c2, %c0_52] : memref<14x18x4xf32, #tpu.memory_space<vmem>>, vector<12x16x4xf32>
    %c1_53 = arith.constant 1 : index
    %c0_54 = arith.constant 0 : index
    %c0_55 = arith.constant 0 : index
    %54 = vector.load %arg28[%c1_53, %c0_54, %c0_55] : memref<14x18x4xf32, #tpu.memory_space<vmem>>, vector<12x16x4xf32>
    %c1_56 = arith.constant 1 : index
    %c1_57 = arith.constant 1 : index
    %c0_58 = arith.constant 0 : index
    %55 = vector.load %arg28[%c1_56, %c1_57, %c0_58] : memref<14x18x4xf32, #tpu.memory_space<vmem>>, vector<12x16x4xf32>
    %c1_59 = arith.constant 1 : index
    %c2_60 = arith.constant 2 : index
    %c0_61 = arith.constant 0 : index
    %56 = vector.load %arg28[%c1_59, %c2_60, %c0_61] : memref<14x18x4xf32, #tpu.memory_space<vmem>>, vector<12x16x4xf32>
    %c2_62 = arith.constant 2 : index
    %c0_63 = arith.constant 0 : index
    %c0_64 = arith.constant 0 : index
    %57 = vector.load %arg28[%c2_62, %c0_63, %c0_64] : memref<14x18x4xf32, #tpu.memory_space<vmem>>, vector<12x16x4xf32>
    %c2_65 = arith.constant 2 : index
    %c1_66 = arith.constant 1 : index
    %c0_67 = arith.constant 0 : index
    %58 = vector.load %arg28[%c2_65, %c1_66, %c0_67] : memref<14x18x4xf32, #tpu.memory_space<vmem>>, vector<12x16x4xf32>
    %c2_68 = arith.constant 2 : index
    %c2_69 = arith.constant 2 : index
    %c0_70 = arith.constant 0 : index
    %59 = vector.load %arg28[%c2_68, %c2_69, %c0_70] : memref<14x18x4xf32, #tpu.memory_space<vmem>>, vector<12x16x4xf32>
    %60 = tpu.concatenate %51, %52, %53, %54, %55, %56, %57, %58, %59 in 2 : vector<12x16x4xf32>, vector<12x16x4xf32>, vector<12x16x4xf32>, vector<12x16x4xf32>, vector<12x16x4xf32>, vector<12x16x4xf32>, vector<12x16x4xf32>, vector<12x16x4xf32>, vector<12x16x4xf32> -> vector<12x16x36xf32>
    %61 = vector.shape_cast %60 : vector<12x16x36xf32> to vector<192x36xf32>
    %62 = arith.truncf %61 : vector<192x36xf32> to vector<192x36xbf16>
    %c0_71 = arith.constant 0 : index
    %c0_72 = arith.constant 0 : index
    %63 = vector.load %arg13[%c0_71, %c0_72] : memref<36x4xbf16, #tpu.memory_space<vmem>>, vector<36x4xbf16>
    %cst_73 = arith.constant dense<0.000000e+00> : vector<192x4xf32>
    %64 = tpu.matmul %62, %63, %cst_73 {dimension_numbers = #tpu.dot_dimension_numbers<[1], [0], [0], [1], [0, 0, 1, 1], [], []>} : vector<192x36xbf16>, vector<36x4xbf16>, vector<192x4xf32> -> vector<192x4xf32>
    %c0_74 = arith.constant 0 : index
    %c0_75 = arith.constant 0 : index
    %65 = vector.load %arg14[%c0_74, %c0_75] : memref<1x4xf32, #tpu.memory_space<vmem>>, vector<1x4xf32>
    %66 = vector.broadcast %65 : vector<1x4xf32> to vector<192x4xf32>
    %67 = arith.addf %64, %66 : vector<192x4xf32>
    %68 = vector.shape_cast %67 : vector<192x4xf32> to vector<12x16x4xf32>
    %69 = vector.extract_strided_slice %20 {offsets = [1, 0, 0], sizes = [12, 16, 4], strides = [1, 1, 1]} : vector<14x16x4xf32> to vector<12x16x4xf32>
    %70 = tpu.concatenate %69, %68 in 2 : vector<12x16x4xf32>, vector<12x16x4xf32> -> vector<12x16x8xf32>
    %71 = vector.shape_cast %70 : vector<12x16x8xf32> to vector<192x8xf32>
    %c0_76 = arith.constant 0 : index
    %c0_77 = arith.constant 0 : index
    %72 = vector.load %arg15[%c0_76, %c0_77] : memref<1x8xf32, #tpu.memory_space<vmem>>, vector<1x8xf32>
    %73 = vector.broadcast %72 : vector<1x8xf32> to vector<192x8xf32>
    %74 = arith.mulf %71, %73 : vector<192x8xf32>
    %c0_78 = arith.constant 0 : index
    %c0_79 = arith.constant 0 : index
    %75 = vector.load %arg16[%c0_78, %c0_79] : memref<1x8xf32, #tpu.memory_space<vmem>>, vector<1x8xf32>
    %76 = vector.broadcast %75 : vector<1x8xf32> to vector<192x8xf32>
    %77 = arith.addf %74, %76 : vector<192x8xf32>
    %cst_80 = arith.constant 0.000000e+00 : f32
    %78 = vector.broadcast %cst_80 : f32 to vector<192x8xf32>
    %79 = arith.maximumf %77, %78 : vector<192x8xf32>
    %80 = arith.truncf %79 : vector<192x8xf32> to vector<192x8xbf16>
    %c0_81 = arith.constant 0 : index
    %c0_82 = arith.constant 0 : index
    %81 = vector.load %arg17[%c0_81, %c0_82] : memref<8x4xbf16, #tpu.memory_space<vmem>>, vector<8x4xbf16>
    %cst_83 = arith.constant dense<0.000000e+00> : vector<192x4xf32>
    %82 = tpu.matmul %80, %81, %cst_83 {dimension_numbers = #tpu.dot_dimension_numbers<[1], [0], [0], [1], [0, 0, 1, 1], [], []>} : vector<192x8xbf16>, vector<8x4xbf16>, vector<192x4xf32> -> vector<192x4xf32>
    %c0_84 = arith.constant 0 : index
    %c0_85 = arith.constant 0 : index
    %83 = vector.load %arg18[%c0_84, %c0_85] : memref<1x4xf32, #tpu.memory_space<vmem>>, vector<1x4xf32>
    %84 = vector.broadcast %83 : vector<1x4xf32> to vector<192x4xf32>
    %85 = arith.addf %82, %84 : vector<192x4xf32>
    %cst_86 = arith.constant 0.000000e+00 : f32
    %86 = vector.broadcast %cst_86 : f32 to vector<192x4xf32>
    %87 = arith.maximumf %85, %86 : vector<192x4xf32>
    %88 = vector.shape_cast %87 : vector<192x4xf32> to vector<12x16x4xf32>
    %89 = vector.extract_strided_slice %88 {offsets = [0, 0, 0], sizes = [2, 16, 4], strides = [1, 1, 1]} : vector<12x16x4xf32> to vector<2x16x4xf32>
    %90 = vector.broadcast %2 : f32 to vector<2x16x4xf32>
    %91 = arith.mulf %89, %90 : vector<2x16x4xf32>
    %92 = vector.extract_strided_slice %88 {offsets = [2, 0, 0], sizes = [8, 16, 4], strides = [1, 1, 1]} : vector<12x16x4xf32> to vector<8x16x4xf32>
    %93 = vector.extract_strided_slice %88 {offsets = [10, 0, 0], sizes = [2, 16, 4], strides = [1, 1, 1]} : vector<12x16x4xf32> to vector<2x16x4xf32>
    %94 = vector.broadcast %5 : f32 to vector<2x16x4xf32>
    %95 = arith.mulf %93, %94 : vector<2x16x4xf32>
    %96 = tpu.concatenate %91, %92, %95 in 0 : vector<2x16x4xf32>, vector<8x16x4xf32>, vector<2x16x4xf32> -> vector<12x16x4xf32>
    %cst_87 = arith.constant 0.000000e+00 : f32
    %97 = vector.broadcast %cst_87 : f32 to vector<12x1x4xf32>
    %c0_88 = arith.constant 0 : index
    %c0_89 = arith.constant 0 : index
    %c0_90 = arith.constant 0 : index
    %98 = vector.load %arg28[%c0_88, %c0_89, %c0_90] : memref<14x18x4xf32, #tpu.memory_space<vmem>>, vector<12x1x4xf32>
    tpu.vector_store %arg28[%c0_88, %c0_89, %c0_90], %97 {strides = array<i32>} : memref<14x18x4xf32, #tpu.memory_space<vmem>>, vector<12x1x4xf32>,
    %c0_91 = arith.constant 0 : index
    %c17_92 = arith.constant 17 : index
    %c0_93 = arith.constant 0 : index
    %99 = vector.load %arg28[%c0_91, %c17_92, %c0_93] : memref<14x18x4xf32, #tpu.memory_space<vmem>>, vector<12x1x4xf32>
    tpu.vector_store %arg28[%c0_91, %c17_92, %c0_93], %97 {strides = array<i32>} : memref<14x18x4xf32, #tpu.memory_space<vmem>>, vector<12x1x4xf32>,
    %c0_94 = arith.constant 0 : index
    %c1_95 = arith.constant 1 : index
    %c0_96 = arith.constant 0 : index
    %100 = vector.load %arg28[%c0_94, %c1_95, %c0_96] : memref<14x18x4xf32, #tpu.memory_space<vmem>>, vector<12x16x4xf32>
    tpu.vector_store %arg28[%c0_94, %c1_95, %c0_96], %96 {strides = array<i32>} : memref<14x18x4xf32, #tpu.memory_space<vmem>>, vector<12x16x4xf32>,
    %c0_97 = arith.constant 0 : index
    %c0_98 = arith.constant 0 : index
    %c0_99 = arith.constant 0 : index
    %101 = vector.load %arg28[%c0_97, %c0_98, %c0_99] : memref<14x18x4xf32, #tpu.memory_space<vmem>>, vector<10x16x4xf32>
    %c0_100 = arith.constant 0 : index
    %c1_101 = arith.constant 1 : index
    %c0_102 = arith.constant 0 : index
    %102 = vector.load %arg28[%c0_100, %c1_101, %c0_102] : memref<14x18x4xf32, #tpu.memory_space<vmem>>, vector<10x16x4xf32>
    %c0_103 = arith.constant 0 : index
    %c2_104 = arith.constant 2 : index
    %c0_105 = arith.constant 0 : index
    %103 = vector.load %arg28[%c0_103, %c2_104, %c0_105] : memref<14x18x4xf32, #tpu.memory_space<vmem>>, vector<10x16x4xf32>
    %c1_106 = arith.constant 1 : index
    %c0_107 = arith.constant 0 : index
    %c0_108 = arith.constant 0 : index
    %104 = vector.load %arg28[%c1_106, %c0_107, %c0_108] : memref<14x18x4xf32, #tpu.memory_space<vmem>>, vector<10x16x4xf32>
    %c1_109 = arith.constant 1 : index
    %c1_110 = arith.constant 1 : index
    %c0_111 = arith.constant 0 : index
    %105 = vector.load %arg28[%c1_109, %c1_110, %c0_111] : memref<14x18x4xf32, #tpu.memory_space<vmem>>, vector<10x16x4xf32>
    %c1_112 = arith.constant 1 : index
    %c2_113 = arith.constant 2 : index
    %c0_114 = arith.constant 0 : index
    %106 = vector.load %arg28[%c1_112, %c2_113, %c0_114] : memref<14x18x4xf32, #tpu.memory_space<vmem>>, vector<10x16x4xf32>
    %c2_115 = arith.constant 2 : index
    %c0_116 = arith.constant 0 : index
    %c0_117 = arith.constant 0 : index
    %107 = vector.load %arg28[%c2_115, %c0_116, %c0_117] : memref<14x18x4xf32, #tpu.memory_space<vmem>>, vector<10x16x4xf32>
    %c2_118 = arith.constant 2 : index
    %c1_119 = arith.constant 1 : index
    %c0_120 = arith.constant 0 : index
    %108 = vector.load %arg28[%c2_118, %c1_119, %c0_120] : memref<14x18x4xf32, #tpu.memory_space<vmem>>, vector<10x16x4xf32>
    %c2_121 = arith.constant 2 : index
    %c2_122 = arith.constant 2 : index
    %c0_123 = arith.constant 0 : index
    %109 = vector.load %arg28[%c2_121, %c2_122, %c0_123] : memref<14x18x4xf32, #tpu.memory_space<vmem>>, vector<10x16x4xf32>
    %110 = tpu.concatenate %101, %102, %103, %104, %105, %106, %107, %108, %109 in 2 : vector<10x16x4xf32>, vector<10x16x4xf32>, vector<10x16x4xf32>, vector<10x16x4xf32>, vector<10x16x4xf32>, vector<10x16x4xf32>, vector<10x16x4xf32>, vector<10x16x4xf32>, vector<10x16x4xf32> -> vector<10x16x36xf32>
    %111 = vector.shape_cast %110 : vector<10x16x36xf32> to vector<160x36xf32>
    %112 = arith.truncf %111 : vector<160x36xf32> to vector<160x36xbf16>
    %c0_124 = arith.constant 0 : index
    %c0_125 = arith.constant 0 : index
    %113 = vector.load %arg19[%c0_124, %c0_125] : memref<36x4xbf16, #tpu.memory_space<vmem>>, vector<36x4xbf16>
    %cst_126 = arith.constant dense<0.000000e+00> : vector<160x4xf32>
    %114 = tpu.matmul %112, %113, %cst_126 {dimension_numbers = #tpu.dot_dimension_numbers<[1], [0], [0], [1], [0, 0, 1, 1], [], []>} : vector<160x36xbf16>, vector<36x4xbf16>, vector<160x4xf32> -> vector<160x4xf32>
    %c0_127 = arith.constant 0 : index
    %c0_128 = arith.constant 0 : index
    %115 = vector.load %arg20[%c0_127, %c0_128] : memref<1x4xf32, #tpu.memory_space<vmem>>, vector<1x4xf32>
    %116 = vector.broadcast %115 : vector<1x4xf32> to vector<160x4xf32>
    %117 = arith.addf %114, %116 : vector<160x4xf32>
    %118 = vector.shape_cast %117 : vector<160x4xf32> to vector<10x16x4xf32>
    %119 = vector.extract_strided_slice %20 {offsets = [2, 0, 0], sizes = [10, 16, 4], strides = [1, 1, 1]} : vector<14x16x4xf32> to vector<10x16x4xf32>
    %120 = vector.extract_strided_slice %68 {offsets = [1, 0, 0], sizes = [10, 16, 4], strides = [1, 1, 1]} : vector<12x16x4xf32> to vector<10x16x4xf32>
    %121 = tpu.concatenate %119, %120, %118 in 2 : vector<10x16x4xf32>, vector<10x16x4xf32>, vector<10x16x4xf32> -> vector<10x16x12xf32>
    %122 = vector.shape_cast %121 : vector<10x16x12xf32> to vector<160x12xf32>
    %c0_129 = arith.constant 0 : index
    %c0_130 = arith.constant 0 : index
    %123 = vector.load %arg21[%c0_129, %c0_130] : memref<1x12xf32, #tpu.memory_space<vmem>>, vector<1x12xf32>
    %124 = vector.broadcast %123 : vector<1x12xf32> to vector<160x12xf32>
    %125 = arith.mulf %122, %124 : vector<160x12xf32>
    %c0_131 = arith.constant 0 : index
    %c0_132 = arith.constant 0 : index
    %126 = vector.load %arg22[%c0_131, %c0_132] : memref<1x12xf32, #tpu.memory_space<vmem>>, vector<1x12xf32>
    %127 = vector.broadcast %126 : vector<1x12xf32> to vector<160x12xf32>
    %128 = arith.addf %125, %127 : vector<160x12xf32>
    %cst_133 = arith.constant 0.000000e+00 : f32
    %129 = vector.broadcast %cst_133 : f32 to vector<160x12xf32>
    %130 = arith.maximumf %128, %129 : vector<160x12xf32>
    %131 = arith.truncf %130 : vector<160x12xf32> to vector<160x12xbf16>
    %c0_134 = arith.constant 0 : index
    %c0_135 = arith.constant 0 : index
    %132 = vector.load %arg23[%c0_134, %c0_135] : memref<12x4xbf16, #tpu.memory_space<vmem>>, vector<12x4xbf16>
    %cst_136 = arith.constant dense<0.000000e+00> : vector<160x4xf32>
    %133 = tpu.matmul %131, %132, %cst_136 {dimension_numbers = #tpu.dot_dimension_numbers<[1], [0], [0], [1], [0, 0, 1, 1], [], []>} : vector<160x12xbf16>, vector<12x4xbf16>, vector<160x4xf32> -> vector<160x4xf32>
    %c0_137 = arith.constant 0 : index
    %c0_138 = arith.constant 0 : index
    %134 = vector.load %arg24[%c0_137, %c0_138] : memref<1x4xf32, #tpu.memory_space<vmem>>, vector<1x4xf32>
    %135 = vector.broadcast %134 : vector<1x4xf32> to vector<160x4xf32>
    %136 = arith.addf %133, %135 : vector<160x4xf32>
    %cst_139 = arith.constant 0.000000e+00 : f32
    %137 = vector.broadcast %cst_139 : f32 to vector<160x4xf32>
    %138 = arith.maximumf %136, %137 : vector<160x4xf32>
    %139 = vector.shape_cast %138 : vector<160x4xf32> to vector<10x16x4xf32>
    %140 = vector.extract_strided_slice %139 {offsets = [0, 0, 0], sizes = [1, 16, 4], strides = [1, 1, 1]} : vector<10x16x4xf32> to vector<1x16x4xf32>
    %141 = vector.broadcast %2 : f32 to vector<1x16x4xf32>
    %142 = arith.mulf %140, %141 : vector<1x16x4xf32>
    %143 = vector.extract_strided_slice %139 {offsets = [1, 0, 0], sizes = [8, 16, 4], strides = [1, 1, 1]} : vector<10x16x4xf32> to vector<8x16x4xf32>
    %144 = vector.extract_strided_slice %139 {offsets = [9, 0, 0], sizes = [1, 16, 4], strides = [1, 1, 1]} : vector<10x16x4xf32> to vector<1x16x4xf32>
    %145 = vector.broadcast %5 : f32 to vector<1x16x4xf32>
    %146 = arith.mulf %144, %145 : vector<1x16x4xf32>
    %147 = tpu.concatenate %142, %143, %146 in 0 : vector<1x16x4xf32>, vector<8x16x4xf32>, vector<1x16x4xf32> -> vector<10x16x4xf32>
    %cst_140 = arith.constant 0.000000e+00 : f32
    %148 = vector.broadcast %cst_140 : f32 to vector<10x1x4xf32>
    %c0_141 = arith.constant 0 : index
    %c0_142 = arith.constant 0 : index
    %c0_143 = arith.constant 0 : index
    %149 = vector.load %arg28[%c0_141, %c0_142, %c0_143] : memref<14x18x4xf32, #tpu.memory_space<vmem>>, vector<10x1x4xf32>
    tpu.vector_store %arg28[%c0_141, %c0_142, %c0_143], %148 {strides = array<i32>} : memref<14x18x4xf32, #tpu.memory_space<vmem>>, vector<10x1x4xf32>,
    %c0_144 = arith.constant 0 : index
    %c17_145 = arith.constant 17 : index
    %c0_146 = arith.constant 0 : index
    %150 = vector.load %arg28[%c0_144, %c17_145, %c0_146] : memref<14x18x4xf32, #tpu.memory_space<vmem>>, vector<10x1x4xf32>
    tpu.vector_store %arg28[%c0_144, %c17_145, %c0_146], %148 {strides = array<i32>} : memref<14x18x4xf32, #tpu.memory_space<vmem>>, vector<10x1x4xf32>,
    %c0_147 = arith.constant 0 : index
    %c1_148 = arith.constant 1 : index
    %c0_149 = arith.constant 0 : index
    %151 = vector.load %arg28[%c0_147, %c1_148, %c0_149] : memref<14x18x4xf32, #tpu.memory_space<vmem>>, vector<10x16x4xf32>
    tpu.vector_store %arg28[%c0_147, %c1_148, %c0_149], %147 {strides = array<i32>} : memref<14x18x4xf32, #tpu.memory_space<vmem>>, vector<10x16x4xf32>,
    %c0_150 = arith.constant 0 : index
    %c0_151 = arith.constant 0 : index
    %c0_152 = arith.constant 0 : index
    %152 = vector.load %arg28[%c0_150, %c0_151, %c0_152] : memref<14x18x4xf32, #tpu.memory_space<vmem>>, vector<8x16x4xf32>
    %c0_153 = arith.constant 0 : index
    %c1_154 = arith.constant 1 : index
    %c0_155 = arith.constant 0 : index
    %153 = vector.load %arg28[%c0_153, %c1_154, %c0_155] : memref<14x18x4xf32, #tpu.memory_space<vmem>>, vector<8x16x4xf32>
    %c0_156 = arith.constant 0 : index
    %c2_157 = arith.constant 2 : index
    %c0_158 = arith.constant 0 : index
    %154 = vector.load %arg28[%c0_156, %c2_157, %c0_158] : memref<14x18x4xf32, #tpu.memory_space<vmem>>, vector<8x16x4xf32>
    %c1_159 = arith.constant 1 : index
    %c0_160 = arith.constant 0 : index
    %c0_161 = arith.constant 0 : index
    %155 = vector.load %arg28[%c1_159, %c0_160, %c0_161] : memref<14x18x4xf32, #tpu.memory_space<vmem>>, vector<8x16x4xf32>
    %c1_162 = arith.constant 1 : index
    %c1_163 = arith.constant 1 : index
    %c0_164 = arith.constant 0 : index
    %156 = vector.load %arg28[%c1_162, %c1_163, %c0_164] : memref<14x18x4xf32, #tpu.memory_space<vmem>>, vector<8x16x4xf32>
    %c1_165 = arith.constant 1 : index
    %c2_166 = arith.constant 2 : index
    %c0_167 = arith.constant 0 : index
    %157 = vector.load %arg28[%c1_165, %c2_166, %c0_167] : memref<14x18x4xf32, #tpu.memory_space<vmem>>, vector<8x16x4xf32>
    %c2_168 = arith.constant 2 : index
    %c0_169 = arith.constant 0 : index
    %c0_170 = arith.constant 0 : index
    %158 = vector.load %arg28[%c2_168, %c0_169, %c0_170] : memref<14x18x4xf32, #tpu.memory_space<vmem>>, vector<8x16x4xf32>
    %c2_171 = arith.constant 2 : index
    %c1_172 = arith.constant 1 : index
    %c0_173 = arith.constant 0 : index
    %159 = vector.load %arg28[%c2_171, %c1_172, %c0_173] : memref<14x18x4xf32, #tpu.memory_space<vmem>>, vector<8x16x4xf32>
    %c2_174 = arith.constant 2 : index
    %c2_175 = arith.constant 2 : index
    %c0_176 = arith.constant 0 : index
    %160 = vector.load %arg28[%c2_174, %c2_175, %c0_176] : memref<14x18x4xf32, #tpu.memory_space<vmem>>, vector<8x16x4xf32>
    %161 = tpu.concatenate %152, %153, %154, %155, %156, %157, %158, %159, %160 in 2 : vector<8x16x4xf32>, vector<8x16x4xf32>, vector<8x16x4xf32>, vector<8x16x4xf32>, vector<8x16x4xf32>, vector<8x16x4xf32>, vector<8x16x4xf32>, vector<8x16x4xf32>, vector<8x16x4xf32> -> vector<8x16x36xf32>
    %162 = vector.shape_cast %161 : vector<8x16x36xf32> to vector<128x36xf32>
    %163 = arith.truncf %162 : vector<128x36xf32> to vector<128x36xbf16>
    %c0_177 = arith.constant 0 : index
    %c0_178 = arith.constant 0 : index
    %164 = vector.load %arg25[%c0_177, %c0_178] : memref<36x4xbf16, #tpu.memory_space<vmem>>, vector<36x4xbf16>
    %cst_179 = arith.constant dense<0.000000e+00> : vector<128x4xf32>
    %165 = tpu.matmul %163, %164, %cst_179 {dimension_numbers = #tpu.dot_dimension_numbers<[1], [0], [0], [1], [0, 0, 1, 1], [], []>} : vector<128x36xbf16>, vector<36x4xbf16>, vector<128x4xf32> -> vector<128x4xf32>
    %c0_180 = arith.constant 0 : index
    %c0_181 = arith.constant 0 : index
    %166 = vector.load %arg26[%c0_180, %c0_181] : memref<1x4xf32, #tpu.memory_space<vmem>>, vector<1x4xf32>
    %167 = vector.broadcast %166 : vector<1x4xf32> to vector<128x4xf32>
    %168 = arith.addf %165, %167 : vector<128x4xf32>
    %169 = vector.shape_cast %168 : vector<128x4xf32> to vector<8x16x4xf32>
    %170 = vector.extract_strided_slice %20 {offsets = [3, 0, 0], sizes = [8, 16, 4], strides = [1, 1, 1]} : vector<14x16x4xf32> to vector<8x16x4xf32>
    %171 = vector.extract_strided_slice %68 {offsets = [2, 0, 0], sizes = [8, 16, 4], strides = [1, 1, 1]} : vector<12x16x4xf32> to vector<8x16x4xf32>
    %172 = vector.extract_strided_slice %118 {offsets = [1, 0, 0], sizes = [8, 16, 4], strides = [1, 1, 1]} : vector<10x16x4xf32> to vector<8x16x4xf32>
    %173 = tpu.concatenate %170, %171, %172, %169 in 2 : vector<8x16x4xf32>, vector<8x16x4xf32>, vector<8x16x4xf32>, vector<8x16x4xf32> -> vector<8x16x16xf32>
    %c0_182 = arith.constant 0 : index
    %c0_183 = arith.constant 0 : index
    %c0_184 = arith.constant 0 : index
    %c0_185 = arith.constant 0 : index
    %174 = vector.load %arg27[%c0_182, %c0_183, %c0_184, %c0_185] : memref<1x8x16x16xf32, #tpu.memory_space<vmem>>, vector<1x8x16x16xf32>
    %175 = vector.shape_cast %174 : vector<1x8x16x16xf32> to vector<8x16x16xf32>
    %176 = vector.shape_cast %173 : vector<8x16x16xf32> to vector<1x8x16x16xf32>
    tpu.vector_store %arg27[%c0_182, %c0_183, %c0_184, %c0_185], %176 {strides = array<i32>} : memref<1x8x16x16xf32, #tpu.memory_space<vmem>>, vector<1x8x16x16xf32>,
    return
  }
  func.func @transform_0(%arg0: i32, %arg1: i32) -> (i32, i32, i32, i32) {
    %c0_i32 = arith.constant 0 : i32
    %c0_i32_0 = arith.constant 0 : i32
    %c0_i32_1 = arith.constant 0 : i32
    return %arg0, %arg1, %c0_i32, %c0_i32_0 : i32, i32, i32, i32
  }
  func.func @transform_1(%arg0: i32, %arg1: i32) -> (i32, i32, i32, i32) {
    %c8_i32 = arith.constant 8 : i32
    %0 = arith.muli %arg1, %c8_i32 : i32
    %c1_i32 = arith.constant 1 : i32
    %1 = arith.subi %0, %c1_i32 : i32
    %c0_i32 = arith.constant 0 : i32
    %2 = arith.maxsi %1, %c0_i32 : i32
    %c0_i32_0 = arith.constant 0 : i32
    %c0_i32_1 = arith.constant 0 : i32
    %c0_i32_2 = arith.constant 0 : i32
    return %arg0, %2, %c0_i32_0, %c0_i32_1 : i32, i32, i32, i32
  }
  func.func @transform_2(%arg0: i32, %arg1: i32) -> (i32, i32, i32, i32) {
    %c8_i32 = arith.constant 8 : i32
    %0 = arith.muli %arg1, %c8_i32 : i32
    %c2_i32 = arith.constant 2 : i32
    %1 = arith.subi %0, %c2_i32 : i32
    %c0_i32 = arith.constant 0 : i32
    %2 = arith.maxsi %1, %c0_i32 : i32
    %c0_i32_0 = arith.constant 0 : i32
    %c0_i32_1 = arith.constant 0 : i32
    %c0_i32_2 = arith.constant 0 : i32
    return %arg0, %2, %c0_i32_0, %c0_i32_1 : i32, i32, i32, i32
  }
  func.func @transform_3(%arg0: i32, %arg1: i32) -> (i32, i32, i32, i32) {
    %c8_i32 = arith.constant 8 : i32
    %0 = arith.muli %arg1, %c8_i32 : i32
    %c3_i32 = arith.constant 3 : i32
    %1 = arith.subi %0, %c3_i32 : i32
    %c0_i32 = arith.constant 0 : i32
    %2 = arith.maxsi %1, %c0_i32 : i32
    %c0_i32_0 = arith.constant 0 : i32
    %c0_i32_1 = arith.constant 0 : i32
    %c0_i32_2 = arith.constant 0 : i32
    return %arg0, %2, %c0_i32_0, %c0_i32_1 : i32, i32, i32, i32
  }
  func.func @transform_4(%arg0: i32, %arg1: i32) -> (i32, i32, i32, i32) {
    %c1_i32 = arith.constant 1 : i32
    %0 = arith.addi %arg1, %c1_i32 : i32
    %c8_i32 = arith.constant 8 : i32
    %1 = arith.muli %0, %c8_i32 : i32
    %c1_i32_0 = arith.constant 1 : i32
    %2 = arith.subi %1, %c1_i32_0 : i32
    %c1_i32_1 = arith.constant 1 : i32
    %3 = arith.addi %2, %c1_i32_1 : i32
    %c15_i32 = arith.constant 15 : i32
    %4 = arith.minsi %3, %c15_i32 : i32
    %c0_i32 = arith.constant 0 : i32
    %c0_i32_2 = arith.constant 0 : i32
    %c0_i32_3 = arith.constant 0 : i32
    return %arg0, %4, %c0_i32, %c0_i32_2 : i32, i32, i32, i32
  }
  func.func @transform_5(%arg0: i32, %arg1: i32) -> (i32, i32, i32, i32) {
    %c1_i32 = arith.constant 1 : i32
    %0 = arith.addi %arg1, %c1_i32 : i32
    %c8_i32 = arith.constant 8 : i32
    %1 = arith.muli %0, %c8_i32 : i32
    %c1_i32_0 = arith.constant 1 : i32
    %2 = arith.subi %1, %c1_i32_0 : i32
    %c2_i32 = arith.constant 2 : i32
    %3 = arith.addi %2, %c2_i32 : i32
    %c15_i32 = arith.constant 15 : i32
    %4 = arith.minsi %3, %c15_i32 : i32
    %c0_i32 = arith.constant 0 : i32
    %c0_i32_1 = arith.constant 0 : i32
    %c0_i32_2 = arith.constant 0 : i32
    return %arg0, %4, %c0_i32, %c0_i32_1 : i32, i32, i32, i32
  }
  func.func @transform_6(%arg0: i32, %arg1: i32) -> (i32, i32, i32, i32) {
    %c1_i32 = arith.constant 1 : i32
    %0 = arith.addi %arg1, %c1_i32 : i32
    %c8_i32 = arith.constant 8 : i32
    %1 = arith.muli %0, %c8_i32 : i32
    %c1_i32_0 = arith.constant 1 : i32
    %2 = arith.subi %1, %c1_i32_0 : i32
    %c3_i32 = arith.constant 3 : i32
    %3 = arith.addi %2, %c3_i32 : i32
    %c15_i32 = arith.constant 15 : i32
    %4 = arith.minsi %3, %c15_i32 : i32
    %c0_i32 = arith.constant 0 : i32
    %c0_i32_1 = arith.constant 0 : i32
    %c0_i32_2 = arith.constant 0 : i32
    return %arg0, %4, %c0_i32, %c0_i32_1 : i32, i32, i32, i32
  }
  func.func @transform_7(%arg0: i32, %arg1: i32) -> (i32, i32) {
    %c0_i32 = arith.constant 0 : i32
    %c0_i32_0 = arith.constant 0 : i32
    %c0_i32_1 = arith.constant 0 : i32
    return %c0_i32, %c0_i32_0 : i32, i32
  }
  func.func @transform_8(%arg0: i32, %arg1: i32) -> (i32, i32) {
    %c0_i32 = arith.constant 0 : i32
    %c0_i32_0 = arith.constant 0 : i32
    %c0_i32_1 = arith.constant 0 : i32
    return %c0_i32, %c0_i32_0 : i32, i32
  }
  func.func @transform_9(%arg0: i32, %arg1: i32) -> (i32, i32) {
    %c0_i32 = arith.constant 0 : i32
    %c0_i32_0 = arith.constant 0 : i32
    %c0_i32_1 = arith.constant 0 : i32
    return %c0_i32, %c0_i32_0 : i32, i32
  }
  func.func @transform_10(%arg0: i32, %arg1: i32) -> (i32, i32) {
    %c0_i32 = arith.constant 0 : i32
    %c0_i32_0 = arith.constant 0 : i32
    %c0_i32_1 = arith.constant 0 : i32
    return %c0_i32, %c0_i32_0 : i32, i32
  }
  func.func @transform_11(%arg0: i32, %arg1: i32) -> (i32, i32) {
    %c0_i32 = arith.constant 0 : i32
    %c0_i32_0 = arith.constant 0 : i32
    %c0_i32_1 = arith.constant 0 : i32
    return %c0_i32, %c0_i32_0 : i32, i32
  }
  func.func @transform_12(%arg0: i32, %arg1: i32) -> (i32, i32) {
    %c0_i32 = arith.constant 0 : i32
    %c0_i32_0 = arith.constant 0 : i32
    %c0_i32_1 = arith.constant 0 : i32
    return %c0_i32, %c0_i32_0 : i32, i32
  }
  func.func @transform_13(%arg0: i32, %arg1: i32) -> (i32, i32) {
    %c0_i32 = arith.constant 0 : i32
    %c0_i32_0 = arith.constant 0 : i32
    %c0_i32_1 = arith.constant 0 : i32
    return %c0_i32, %c0_i32_0 : i32, i32
  }
  func.func @transform_14(%arg0: i32, %arg1: i32) -> (i32, i32) {
    %c0_i32 = arith.constant 0 : i32
    %c0_i32_0 = arith.constant 0 : i32
    %c0_i32_1 = arith.constant 0 : i32
    return %c0_i32, %c0_i32_0 : i32, i32
  }
  func.func @transform_15(%arg0: i32, %arg1: i32) -> (i32, i32) {
    %c0_i32 = arith.constant 0 : i32
    %c0_i32_0 = arith.constant 0 : i32
    %c0_i32_1 = arith.constant 0 : i32
    return %c0_i32, %c0_i32_0 : i32, i32
  }
  func.func @transform_16(%arg0: i32, %arg1: i32) -> (i32, i32) {
    %c0_i32 = arith.constant 0 : i32
    %c0_i32_0 = arith.constant 0 : i32
    %c0_i32_1 = arith.constant 0 : i32
    return %c0_i32, %c0_i32_0 : i32, i32
  }
  func.func @transform_17(%arg0: i32, %arg1: i32) -> (i32, i32) {
    %c0_i32 = arith.constant 0 : i32
    %c0_i32_0 = arith.constant 0 : i32
    %c0_i32_1 = arith.constant 0 : i32
    return %c0_i32, %c0_i32_0 : i32, i32
  }
  func.func @transform_18(%arg0: i32, %arg1: i32) -> (i32, i32) {
    %c0_i32 = arith.constant 0 : i32
    %c0_i32_0 = arith.constant 0 : i32
    %c0_i32_1 = arith.constant 0 : i32
    return %c0_i32, %c0_i32_0 : i32, i32
  }
  func.func @transform_19(%arg0: i32, %arg1: i32) -> (i32, i32) {
    %c0_i32 = arith.constant 0 : i32
    %c0_i32_0 = arith.constant 0 : i32
    %c0_i32_1 = arith.constant 0 : i32
    return %c0_i32, %c0_i32_0 : i32, i32
  }
  func.func @transform_20(%arg0: i32, %arg1: i32) -> (i32, i32) {
    %c0_i32 = arith.constant 0 : i32
    %c0_i32_0 = arith.constant 0 : i32
    %c0_i32_1 = arith.constant 0 : i32
    return %c0_i32, %c0_i32_0 : i32, i32
  }
  func.func @transform_21(%arg0: i32, %arg1: i32) -> (i32, i32) {
    %c0_i32 = arith.constant 0 : i32
    %c0_i32_0 = arith.constant 0 : i32
    %c0_i32_1 = arith.constant 0 : i32
    return %c0_i32, %c0_i32_0 : i32, i32
  }
  func.func @transform_22(%arg0: i32, %arg1: i32) -> (i32, i32) {
    %c0_i32 = arith.constant 0 : i32
    %c0_i32_0 = arith.constant 0 : i32
    %c0_i32_1 = arith.constant 0 : i32
    return %c0_i32, %c0_i32_0 : i32, i32
  }
  func.func @transform_23(%arg0: i32, %arg1: i32) -> (i32, i32) {
    %c0_i32 = arith.constant 0 : i32
    %c0_i32_0 = arith.constant 0 : i32
    %c0_i32_1 = arith.constant 0 : i32
    return %c0_i32, %c0_i32_0 : i32, i32
  }
  func.func @transform_24(%arg0: i32, %arg1: i32) -> (i32, i32) {
    %c0_i32 = arith.constant 0 : i32
    %c0_i32_0 = arith.constant 0 : i32
    %c0_i32_1 = arith.constant 0 : i32
    return %c0_i32, %c0_i32_0 : i32, i32
  }
  func.func @transform_25(%arg0: i32, %arg1: i32) -> (i32, i32, i32, i32) {
    %c0_i32 = arith.constant 0 : i32
    %c0_i32_0 = arith.constant 0 : i32
    %c0_i32_1 = arith.constant 0 : i32
    return %arg0, %arg1, %c0_i32, %c0_i32_0 : i32, i32, i32, i32
  }
}

</mosaic_0001>

<llo_original>
// kernel: dense_block_forward.1
$region0: #{dense_block_forward.1}
  #allocation0 [shape = 'u32[]', space=smem, size = 0x4, offset = 0x4, fixed_abs, tag = 'smem constant byte address 0x4 - core index']
  #allocation1 [shape = 'u32[144,128]{1,0:T(1,128)}', space=vmem, size = 0x12000, scoped, tag = 'internal scratch']
  #allocation2 [shape = 'f32[14,18,4]{2,1,0:T(8,128)}', space=vmem, size = 0x2a000, scoped, tag = 'scratch operand']
  %s0 = inlined_call_operand.vmem [shape: f32[2,16,16,4], index: 0, kind: input, shape index: {}, may-alias: {0,1,2,3,4,5,6}]
  %s1 = inlined_call_operand.vmem [shape: f32[2,16,16,4], index: 1, kind: input, shape index: {}, may-alias: {0,1,2,3,4,5,6}]
  %s2 = inlined_call_operand.vmem [shape: f32[2,16,16,4], index: 2, kind: input, shape index: {}, may-alias: {0,1,2,3,4,5,6}]
  %s3 = inlined_call_operand.vmem [shape: f32[2,16,16,4], index: 3, kind: input, shape index: {}, may-alias: {0,1,2,3,4,5,6}]
  %s4 = inlined_call_operand.vmem [shape: f32[2,16,16,4], index: 4, kind: input, shape index: {}, may-alias: {0,1,2,3,4,5,6}]
  %s5 = inlined_call_operand.vmem [shape: f32[2,16,16,4], index: 5, kind: input, shape index: {}, may-alias: {0,1,2,3,4,5,6}]
  %s6 = inlined_call_operand.vmem [shape: f32[2,16,16,4], index: 6, kind: input, shape index: {}, may-alias: {0,1,2,3,4,5,6}]
  %s7 = inlined_call_operand.vmem [shape: f32[1,4], index: 7, kind: input, shape index: {}]
  %s8 = inlined_call_operand.vmem [shape: f32[1,4], index: 8, kind: input, shape index: {}]
  %s9 = inlined_call_operand.vmem [shape: bf16[4,4], index: 9, kind: input, shape index: {}]
  %s10 = inlined_call_operand.vmem [shape: f32[1,4], index: 10, kind: input, shape index: {}]
  %s11 = inlined_call_operand.vmem [shape: bf16[36,4], index: 11, kind: input, shape index: {}]
  %s12 = inlined_call_operand.vmem [shape: f32[1,4], index: 12, kind: input, shape index: {}]
  %s13 = inlined_call_operand.vmem [shape: f32[1,8], index: 13, kind: input, shape index: {}]
  %s14 = inlined_call_operand.vmem [shape: f32[1,8], index: 14, kind: input, shape index: {}]
  %s15 = inlined_call_operand.vmem [shape: bf16[8,4], index: 15, kind: input, shape index: {}]
  %s16 = inlined_call_operand.vmem [shape: f32[1,4], index: 16, kind: input, shape index: {}]
  %s17 = inlined_call_operand.vmem [shape: bf16[36,4], index: 17, kind: input, shape index: {}]
  %s18 = inlined_call_operand.vmem [shape: f32[1,4], index: 18, kind: input, shape index: {}]
  %s19 = inlined_call_operand.vmem [shape: f32[1,12], index: 19, kind: input, shape index: {}]
  %s20 = inlined_call_operand.vmem [shape: f32[1,12], index: 20, kind: input, shape index: {}]
  %s21 = inlined_call_operand.vmem [shape: bf16[12,4], index: 21, kind: input, shape index: {}]
  %s22 = inlined_call_operand.vmem [shape: f32[1,4], index: 22, kind: input, shape index: {}]
  %s23 = inlined_call_operand.vmem [shape: bf16[36,4], index: 23, kind: input, shape index: {}]
  %s24 = inlined_call_operand.vmem [shape: f32[1,4], index: 24, kind: input, shape index: {}]
  %s25 = inlined_call_operand.vmem [shape: f32[2,16,16,16], index: 25, kind: output, shape index: {}]
  %s26 = sld [smem:[#allocation0]]
  $region133: #{dense_block_forward.1} parent=0
    _
  %s28 = ssub.s32 1, %s26
  %s29 = scalar_select 0, %s28, %s26
  loop: start=0, step=1, limit=6
  $region2: #{dense_block_forward.1} parent=0 // loop_pre_header
    _
  $region3: #{dense_block_forward.1} parent=0 // loop_header
    %s31 = sphi 0, %s35
    %p32 = scmp.ge.s32.totalorder %s31, 6
    %s38 = sphi 0, %s50
    %s39 = sphi 0, %s46
    %s40 = sphi 0, %s38
    %s41 = sphi 0, %s39
    %s42 = sphi 0, %s40
    %s43 = sphi 0, %s41
    %s55 = sphi 0, %s57
    %s58 = sphi 0, %s55
    %s59 = sphi 0, %s58
    %s75 = sphi 0, %s59
    %s91 = sphi 0, %s93
    %s94 = sphi 0, %s91
    %s95 = sphi 0, %s94
    %s111 = sphi 0, %s95
    %s127 = sphi 0, %s129
    %s130 = sphi 0, %s127
    %s131 = sphi 0, %s130
    %s147 = sphi 0, %s131
    %s163 = sphi 0, %s165
    %s166 = sphi 0, %s163
    %s167 = sphi 0, %s166
    %s183 = sphi 0, %s167
    %s199 = sphi 0, %s201
    %s202 = sphi 0, %s199
    %s203 = sphi 0, %s202
    %s219 = sphi 0, %s203
    %s237 = sphi 0, %s239
    %s240 = sphi 0, %s237
    %s241 = sphi 0, %s240
    %s257 = sphi 0, %s241
    %s275 = sphi 0, %s277
    %s278 = sphi 0, %s275
    %s279 = sphi 0, %s278
    %s295 = sphi 0, %s279
    %s299 = sphi 0, %s299
    %s301 = sphi 0, %s299
    %s302 = sphi 0, %s301
    %s316 = sphi 0, %s302
    %s320 = sphi 0, %s320
    %s322 = sphi 0, %s320
    %s323 = sphi 0, %s322
    %s337 = sphi 0, %s323
    %s341 = sphi 0, %s341
    %s343 = sphi 0, %s341
    %s344 = sphi 0, %s343
    %s358 = sphi 0, %s344
    %s362 = sphi 0, %s362
    %s364 = sphi 0, %s362
    %s365 = sphi 0, %s364
    %s379 = sphi 0, %s365
    %s383 = sphi 0, %s383
    %s385 = sphi 0, %s383
    %s386 = sphi 0, %s385
    %s400 = sphi 0, %s386
    %s404 = sphi 0, %s404
    %s406 = sphi 0, %s404
    %s407 = sphi 0, %s406
    %s421 = sphi 0, %s407
    %s425 = sphi 0, %s425
    %s427 = sphi 0, %s425
    %s428 = sphi 0, %s427
    %s442 = sphi 0, %s428
    %s446 = sphi 0, %s446
    %s448 = sphi 0, %s446
    %s449 = sphi 0, %s448
    %s463 = sphi 0, %s449
    %s467 = sphi 0, %s467
    %s469 = sphi 0, %s467
    %s470 = sphi 0, %s469
    %s484 = sphi 0, %s470
    %s488 = sphi 0, %s488
    %s490 = sphi 0, %s488
    %s491 = sphi 0, %s490
    %s505 = sphi 0, %s491
    %s509 = sphi 0, %s509
    %s511 = sphi 0, %s509
    %s512 = sphi 0, %s511
    %s526 = sphi 0, %s512
    %s530 = sphi 0, %s530
    %s532 = sphi 0, %s530
    %s533 = sphi 0, %s532
    %s547 = sphi 0, %s533
    %s551 = sphi 0, %s551
    %s553 = sphi 0, %s551
    %s554 = sphi 0, %s553
    %s568 = sphi 0, %s554
    %s572 = sphi 0, %s572
    %s574 = sphi 0, %s572
    %s575 = sphi 0, %s574
    %s589 = sphi 0, %s575
    %s593 = sphi 0, %s593
    %s595 = sphi 0, %s593
    %s596 = sphi 0, %s595
    %s610 = sphi 0, %s596
    %s614 = sphi 0, %s614
    %s616 = sphi 0, %s614
    %s617 = sphi 0, %s616
    %s631 = sphi 0, %s617
    %s635 = sphi 0, %s635
    %s637 = sphi 0, %s635
    %s638 = sphi 0, %s637
    %s652 = sphi 0, %s638
    %s656 = sphi 0, %s656
    %s658 = sphi 0, %s656
    %s659 = sphi 0, %s658
    %s673 = sphi 0, %s659
    %s681 = sphi 0, %s683
    %s684 = sphi 0, %s681
    %s685 = sphi 0, %s684
    %s701 = sphi 0, %s685
  $region4: #{dense_block_forward.1} parent=0 // loop_header_branch
    %34 = sbr.rel (%p32) target = $region8
  $region5: #{dense_block_forward.1} parent=0 // loop_body
    %s36 = ssub.s32 %s31, 1
    %s37 = ssub.s32 %s31, 2
    %s44 = sadd.s32 1, %s39
    %p45 = scmp.ge.s32.totalorder %s44, 2
    %s46 = scalar_select %p45, 0, %s44
    %s47 = sadd.s32 1, %s38
    %s48 = scalar_select %p45, %s47, %s38
    %p49 = scmp.ge.s32.totalorder %s48, 2
    %s50 = scalar_select %p49, 0, %s48
    %s51 = ssub.s32 %s38, %s50
    %s52 = ssub.s32 %s39, %s46
    %s53 = sor.u32 %s51, %s52
    %p54 = scmp.eq.s32.totalorder %s53, 0
    %s56 = sadd.s32 %s55, 1
    %s57 = scalar_select %p54, %s55, %s56
    %p60 = pneg %p54
    %p61 = scmp.eq.s32.totalorder %s31, 3
    %p62 = por %p60, %p61
    %p63 = scmp.ne.s32.totalorder %s55, %s58
    %p64 = scmp.eq.s32.totalorder %s31, 0
    %p65 = por %p63, %p64
    %p66 = scmp.ne.s32.totalorder %s55, %s58
    %p67 = scmp.eq.s32.totalorder %s36, 3
    %p68 = por %p66, %p67
    %p69 = scmp.ne.s32.totalorder %s58, %s59
    %p70 = scmp.eq.s32.totalorder %s36, 0
    %p71 = por %p69, %p70
    %p72 = scmp.ne.s32.totalorder %s58, %s59
    %p73 = scmp.eq.s32.totalorder %s37, 3
    %p74 = por %p72, %p73
    %p76 = scmp.ne.s32.totalorder %s59, %s75
    %p77 = scmp.eq.s32.totalorder %s37, 0
    %p78 = por %p76, %p77
    %s79 = smul.u32 %s39, 8
    %s80 = ssub.s32 %s79, 1
    %p81 = scmp.gt.s32.totalorder %s80, 0
    %s82 = scalar_select %p81, %s80, 0
    %s83 = smul.u32 %s46, 8
    %s84 = ssub.s32 %s83, 1
    %p85 = scmp.gt.s32.totalorder %s84, 0
    %s86 = scalar_select %p85, %s84, 0
    %s87 = ssub.s32 %s38, %s50
    %s88 = ssub.s32 %s82, %s86
    %s89 = sor.u32 %s87, %s88
    %p90 = scmp.eq.s32.totalorder %s89, 0
    %s92 = sadd.s32 %s91, 1
    %s93 = scalar_select %p90, %s91, %s92
    %p96 = pneg %p90
    %p97 = scmp.eq.s32.totalorder %s31, 3
    %p98 = por %p96, %p97
    %p99 = scmp.ne.s32.totalorder %s91, %s94
    %p100 = scmp.eq.s32.totalorder %s31, 0
    %p101 = por %p99, %p100
    %p102 = scmp.ne.s32.totalorder %s91, %s94
    %p103 = scmp.eq.s32.totalorder %s36, 3
    %p104 = por %p102, %p103
    %p105 = scmp.ne.s32.totalorder %s94, %s95
    %p106 = scmp.eq.s32.totalorder %s36, 0
    %p107 = por %p105, %p106
    %p108 = scmp.ne.s32.totalorder %s94, %s95
    %p109 = scmp.eq.s32.totalorder %s37, 3
    %p110 = por %p108, %p109
    %p112 = scmp.ne.s32.totalorder %s95, %s111
    %p113 = scmp.eq.s32.totalorder %s37, 0
    %p114 = por %p112, %p113
    %s115 = smul.u32 %s39, 8
    %s116 = ssub.s32 %s115, 2
    %p117 = scmp.gt.s32.totalorder %s116, 0
    %s118 = scalar_select %p117, %s116, 0
    %s119 = smul.u32 %s46, 8
    %s120 = ssub.s32 %s119, 2
    %p121 = scmp.gt.s32.totalorder %s120, 0
    %s122 = scalar_select %p121, %s120, 0
    %s123 = ssub.s32 %s38, %s50
    %s124 = ssub.s32 %s118, %s122
    %s125 = sor.u32 %s123, %s124
    %p126 = scmp.eq.s32.totalorder %s125, 0
    %s128 = sadd.s32 %s127, 1
    %s129 = scalar_select %p126, %s127, %s128
    %p132 = pneg %p126
    %p133 = scmp.eq.s32.totalorder %s31, 3
    %p134 = por %p132, %p133
    %p135 = scmp.ne.s32.totalorder %s127, %s130
    %p136 = scmp.eq.s32.totalorder %s31, 0
    %p137 = por %p135, %p136
    %p138 = scmp.ne.s32.totalorder %s127, %s130
    %p139 = scmp.eq.s32.totalorder %s36, 3
    %p140 = por %p138, %p139
    %p141 = scmp.ne.s32.totalorder %s130, %s131
    %p142 = scmp.eq.s32.totalorder %s36, 0
    %p143 = por %p141, %p142
    %p144 = scmp.ne.s32.totalorder %s130, %s131
    %p145 = scmp.eq.s32.totalorder %s37, 3
    %p146 = por %p144, %p145
    %p148 = scmp.ne.s32.totalorder %s131, %s147
    %p149 = scmp.eq.s32.totalorder %s37, 0
    %p150 = por %p148, %p149
    %s151 = smul.u32 %s39, 8
    %s152 = ssub.s32 %s151, 3
    %p153 = scmp.gt.s32.totalorder %s152, 0
    %s154 = scalar_select %p153, %s152, 0
    %s155 = smul.u32 %s46, 8
    %s156 = ssub.s32 %s155, 3
    %p157 = scmp.gt.s32.totalorder %s156, 0
    %s158 = scalar_select %p157, %s156, 0
    %s159 = ssub.s32 %s38, %s50
    %s160 = ssub.s32 %s154, %s158
    %s161 = sor.u32 %s159, %s160
    %p162 = scmp.eq.s32.totalorder %s161, 0
    %s164 = sadd.s32 %s163, 1
    %s165 = scalar_select %p162, %s163, %s164
    %p168 = pneg %p162
    %p169 = scmp.eq.s32.totalorder %s31, 3
    %p170 = por %p168, %p169
    %p171 = scmp.ne.s32.totalorder %s163, %s166
    %p172 = scmp.eq.s32.totalorder %s31, 0
    %p173 = por %p171, %p172
    %p174 = scmp.ne.s32.totalorder %s163, %s166
    %p175 = scmp.eq.s32.totalorder %s36, 3
    %p176 = por %p174, %p175
    %p177 = scmp.ne.s32.totalorder %s166, %s167
    %p178 = scmp.eq.s32.totalorder %s36, 0
    %p179 = por %p177, %p178
    %p180 = scmp.ne.s32.totalorder %s166, %s167
    %p181 = scmp.eq.s32.totalorder %s37, 3
    %p182 = por %p180, %p181
    %p184 = scmp.ne.s32.totalorder %s167, %s183
    %p185 = scmp.eq.s32.totalorder %s37, 0
    %p186 = por %p184, %p185
    %s187 = sadd.s32 %s39, 1
    %s188 = smul.u32 %s187, 8
    %p189 = scmp.lt.s32.totalorder %s188, 15
    %s190 = scalar_select %p189, %s188, 15
    %s191 = sadd.s32 %s46, 1
    %s192 = smul.u32 %s191, 8
    %p193 = scmp.lt.s32.totalorder %s192, 15
    %s194 = scalar_select %p193, %s192, 15
    %s195 = ssub.s32 %s38, %s50
    %s196 = ssub.s32 %s190, %s194
    %s197 = sor.u32 %s195, %s196
    %p198 = scmp.eq.s32.totalorder %s197, 0
    %s200 = sadd.s32 %s199, 1
    %s201 = scalar_select %p198, %s199, %s200
    %p204 = pneg %p198
    %p205 = scmp.eq.s32.totalorder %s31, 3
    %p206 = por %p204, %p205
    %p207 = scmp.ne.s32.totalorder %s199, %s202
    %p208 = scmp.eq.s32.totalorder %s31, 0
    %p209 = por %p207, %p208
    %p210 = scmp.ne.s32.totalorder %s199, %s202
    %p211 = scmp.eq.s32.totalorder %s36, 3
    %p212 = por %p210, %p211
    %p213 = scmp.ne.s32.totalorder %s202, %s203
    %p214 = scmp.eq.s32.totalorder %s36, 0
    %p215 = por %p213, %p214
    %p216 = scmp.ne.s32.totalorder %s202, %s203
    %p217 = scmp.eq.s32.totalorder %s37, 3
    %p218 = por %p216, %p217
    %p220 = scmp.ne.s32.totalorder %s203, %s219
    %p221 = scmp.eq.s32.totalorder %s37, 0
    %p222 = por %p220, %p221
    %s223 = sadd.s32 %s39, 1
    %s224 = smul.u32 %s223, 8
    %s225 = sadd.s32 %s224, 1
    %p226 = scmp.lt.s32.totalorder %s225, 15
    %s227 = scalar_select %p226, %s225, 15
    %s228 = sadd.s32 %s46, 1
    %s229 = smul.u32 %s228, 8
    %s230 = sadd.s32 %s229, 1
    %p231 = scmp.lt.s32.totalorder %s230, 15
    %s232 = scalar_select %p231, %s230, 15
    %s233 = ssub.s32 %s38, %s50
    %s234 = ssub.s32 %s227, %s232
    %s235 = sor.u32 %s233, %s234
    %p236 = scmp.eq.s32.totalorder %s235, 0
    %s238 = sadd.s32 %s237, 1
    %s239 = scalar_select %p236, %s237, %s238
    %p242 = pneg %p236
    %p243 = scmp.eq.s32.totalorder %s31, 3
    %p244 = por %p242, %p243
    %p245 = scmp.ne.s32.totalorder %s237, %s240
    %p246 = scmp.eq.s32.totalorder %s31, 0
    %p247 = por %p245, %p246
    %p248 = scmp.ne.s32.totalorder %s237, %s240
    %p249 = scmp.eq.s32.totalorder %s36, 3
    %p250 = por %p248, %p249
    %p251 = scmp.ne.s32.totalorder %s240, %s241
    %p252 = scmp.eq.s32.totalorder %s36, 0
    %p253 = por %p251, %p252
    %p254 = scmp.ne.s32.totalorder %s240, %s241
    %p255 = scmp.eq.s32.totalorder %s37, 3
    %p256 = por %p254, %p255
    %p258 = scmp.ne.s32.totalorder %s241, %s257
    %p259 = scmp.eq.s32.totalorder %s37, 0
    %p260 = por %p258, %p259
    %s261 = sadd.s32 %s39, 1
    %s262 = smul.u32 %s261, 8
    %s263 = sadd.s32 %s262, 2
    %p264 = scmp.lt.s32.totalorder %s263, 15
    %s265 = scalar_select %p264, %s263, 15
    %s266 = sadd.s32 %s46, 1
    %s267 = smul.u32 %s266, 8
    %s268 = sadd.s32 %s267, 2
    %p269 = scmp.lt.s32.totalorder %s268, 15
    %s270 = scalar_select %p269, %s268, 15
    %s271 = ssub.s32 %s38, %s50
    %s272 = ssub.s32 %s265, %s270
    %s273 = sor.u32 %s271, %s272
    %p274 = scmp.eq.s32.totalorder %s273, 0
    %s276 = sadd.s32 %s275, 1
    %s277 = scalar_select %p274, %s275, %s276
    %p280 = pneg %p274
    %p281 = scmp.eq.s32.totalorder %s31, 3
    %p282 = por %p280, %p281
    %p283 = scmp.ne.s32.totalorder %s275, %s278
    %p284 = scmp.eq.s32.totalorder %s31, 0
    %p285 = por %p283, %p284
    %p286 = scmp.ne.s32.totalorder %s275, %s278
    %p287 = scmp.eq.s32.totalorder %s36, 3
    %p288 = por %p286, %p287
    %p289 = scmp.ne.s32.totalorder %s278, %s279
    %p290 = scmp.eq.s32.totalorder %s36, 0
    %p291 = por %p289, %p290
    %p292 = scmp.ne.s32.totalorder %s278, %s279
    %p293 = scmp.eq.s32.totalorder %s37, 3
    %p294 = por %p292, %p293
    %p296 = scmp.ne.s32.totalorder %s279, %s295
    %p297 = scmp.eq.s32.totalorder %s37, 0
    %p298 = por %p296, %p297
    %s300 = sadd.s32 %s299, 1
    %p303 = scmp.eq.s32.totalorder %s31, 3
    %p304 = scmp.ne.s32.totalorder %s299, %s301
    %p305 = scmp.eq.s32.totalorder %s31, 0
    %p306 = por %p304, %p305
    %p307 = scmp.ne.s32.totalorder %s299, %s301
    %p308 = scmp.eq.s32.totalorder %s36, 3
    %p309 = por %p307, %p308
    %p310 = scmp.ne.s32.totalorder %s301, %s302
    %p311 = scmp.eq.s32.totalorder %s36, 0
    %p312 = por %p310, %p311
    %p313 = scmp.ne.s32.totalorder %s301, %s302
    %p314 = scmp.eq.s32.totalorder %s37, 3
    %p315 = por %p313, %p314
    %p317 = scmp.ne.s32.totalorder %s302, %s316
    %p318 = scmp.eq.s32.totalorder %s37, 0
    %p319 = por %p317, %p318
    %s321 = sadd.s32 %s320, 1
    %p324 = scmp.eq.s32.totalorder %s31, 3
    %p325 = scmp.ne.s32.totalorder %s320, %s322
    %p326 = scmp.eq.s32.totalorder %s31, 0
    %p327 = por %p325, %p326
    %p328 = scmp.ne.s32.totalorder %s320, %s322
    %p329 = scmp.eq.s32.totalorder %s36, 3
    %p330 = por %p328, %p329
    %p331 = scmp.ne.s32.totalorder %s322, %s323
    %p332 = scmp.eq.s32.totalorder %s36, 0
    %p333 = por %p331, %p332
    %p334 = scmp.ne.s32.totalorder %s322, %s323
    %p335 = scmp.eq.s32.totalorder %s37, 3
    %p336 = por %p334, %p335
    %p338 = scmp.ne.s32.totalorder %s323, %s337
    %p339 = scmp.eq.s32.totalorder %s37, 0
    %p340 = por %p338, %p339
    %s342 = sadd.s32 %s341, 1
    %p345 = scmp.eq.s32.totalorder %s31, 3
    %p346 = scmp.ne.s32.totalorder %s341, %s343
    %p347 = scmp.eq.s32.totalorder %s31, 0
    %p348 = por %p346, %p347
    %p349 = scmp.ne.s32.totalorder %s341, %s343
    %p350 = scmp.eq.s32.totalorder %s36, 3
    %p351 = por %p349, %p350
    %p352 = scmp.ne.s32.totalorder %s343, %s344
    %p353 = scmp.eq.s32.totalorder %s36, 0
    %p354 = por %p352, %p353
    %p355 = scmp.ne.s32.totalorder %s343, %s344
    %p356 = scmp.eq.s32.totalorder %s37, 3
    %p357 = por %p355, %p356
    %p359 = scmp.ne.s32.totalorder %s344, %s358
    %p360 = scmp.eq.s32.totalorder %s37, 0
    %p361 = por %p359, %p360
    %s363 = sadd.s32 %s362, 1
    %p366 = scmp.eq.s32.totalorder %s31, 3
    %p367 = scmp.ne.s32.totalorder %s362, %s364
    %p368 = scmp.eq.s32.totalorder %s31, 0
    %p369 = por %p367, %p368
    %p370 = scmp.ne.s32.totalorder %s362, %s364
    %p371 = scmp.eq.s32.totalorder %s36, 3
    %p372 = por %p370, %p371
    %p373 = scmp.ne.s32.totalorder %s364, %s365
    %p374 = scmp.eq.s32.totalorder %s36, 0
    %p375 = por %p373, %p374
    %p376 = scmp.ne.s32.totalorder %s364, %s365
    %p377 = scmp.eq.s32.totalorder %s37, 3
    %p378 = por %p376, %p377
    %p380 = scmp.ne.s32.totalorder %s365, %s379
    %p381 = scmp.eq.s32.totalorder %s37, 0
    %p382 = por %p380, %p381
    %s384 = sadd.s32 %s383, 1
    %p387 = scmp.eq.s32.totalorder %s31, 3
    %p388 = scmp.ne.s32.totalorder %s383, %s385
    %p389 = scmp.eq.s32.totalorder %s31, 0
    %p390 = por %p388, %p389
    %p391 = scmp.ne.s32.totalorder %s383, %s385
    %p392 = scmp.eq.s32.totalorder %s36, 3
    %p393 = por %p391, %p392
    %p394 = scmp.ne.s32.totalorder %s385, %s386
    %p395 = scmp.eq.s32.totalorder %s36, 0
    %p396 = por %p394, %p395
    %p397 = scmp.ne.s32.totalorder %s385, %s386
    %p398 = scmp.eq.s32.totalorder %s37, 3
    %p399 = por %p397, %p398
    %p401 = scmp.ne.s32.totalorder %s386, %s400
    %p402 = scmp.eq.s32.totalorder %s37, 0
    %p403 = por %p401, %p402
    %s405 = sadd.s32 %s404, 1
    %p408 = scmp.eq.s32.totalorder %s31, 3
    %p409 = scmp.ne.s32.totalorder %s404, %s406
    %p410 = scmp.eq.s32.totalorder %s31, 0
    %p411 = por %p409, %p410
    %p412 = scmp.ne.s32.totalorder %s404, %s406
    %p413 = scmp.eq.s32.totalorder %s36, 3
    %p414 = por %p412, %p413
    %p415 = scmp.ne.s32.totalorder %s406, %s407
    %p416 = scmp.eq.s32.totalorder %s36, 0
    %p417 = por %p415, %p416
    %p418 = scmp.ne.s32.totalorder %s406, %s407
    %p419 = scmp.eq.s32.totalorder %s37, 3
    %p420 = por %p418, %p419
    %p422 = scmp.ne.s32.totalorder %s407, %s421
    %p423 = scmp.eq.s32.totalorder %s37, 0
    %p424 = por %p422, %p423
    %s426 = sadd.s32 %s425, 1
    %p429 = scmp.eq.s32.totalorder %s31, 3
    %p430 = scmp.ne.s32.totalorder %s425, %s427
    %p431 = scmp.eq.s32.totalorder %s31, 0
    %p432 = por %p430, %p431
    %p433 = scmp.ne.s32.totalorder %s425, %s427
    %p434 = scmp.eq.s32.totalorder %s36, 3
    %p435 = por %p433, %p434
    %p436 = scmp.ne.s32.totalorder %s427, %s428
    %p437 = scmp.eq.s32.totalorder %s36, 0
    %p438 = por %p436, %p437
    %p439 = scmp.ne.s32.totalorder %s427, %s428
    %p440 = scmp.eq.s32.totalorder %s37, 3
    %p441 = por %p439, %p440
    %p443 = scmp.ne.s32.totalorder %s428, %s442
    %p444 = scmp.eq.s32.totalorder %s37, 0
    %p445 = por %p443, %p444
    %s447 = sadd.s32 %s446, 1
    %p450 = scmp.eq.s32.totalorder %s31, 3
    %p451 = scmp.ne.s32.totalorder %s446, %s448
    %p452 = scmp.eq.s32.totalorder %s31, 0
    %p453 = por %p451, %p452
    %p454 = scmp.ne.s32.totalorder %s446, %s448
    %p455 = scmp.eq.s32.totalorder %s36, 3
    %p456 = por %p454, %p455
    %p457 = scmp.ne.s32.totalorder %s448, %s449
    %p458 = scmp.eq.s32.totalorder %s36, 0
    %p459 = por %p457, %p458
    %p460 = scmp.ne.s32.totalorder %s448, %s449
    %p461 = scmp.eq.s32.totalorder %s37, 3
    %p462 = por %p460, %p461
    %p464 = scmp.ne.s32.totalorder %s449, %s463
    %p465 = scmp.eq.s32.totalorder %s37, 0
    %p466 = por %p464, %p465
    %s468 = sadd.s32 %s467, 1
    %p471 = scmp.eq.s32.totalorder %s31, 3
    %p472 = scmp.ne.s32.totalorder %s467, %s469
    %p473 = scmp.eq.s32.totalorder %s31, 0
    %p474 = por %p472, %p473
    %p475 = scmp.ne.s32.totalorder %s467, %s469
    %p476 = scmp.eq.s32.totalorder %s36, 3
    %p477 = por %p475, %p476
    %p478 = scmp.ne.s32.totalorder %s469, %s470
    %p479 = scmp.eq.s32.totalorder %s36, 0
    %p480 = por %p478, %p479
    %p481 = scmp.ne.s32.totalorder %s469, %s470
    %p482 = scmp.eq.s32.totalorder %s37, 3
    %p483 = por %p481, %p482
    %p485 = scmp.ne.s32.totalorder %s470, %s484
    %p486 = scmp.eq.s32.totalorder %s37, 0
    %p487 = por %p485, %p486
    %s489 = sadd.s32 %s488, 1
    %p492 = scmp.eq.s32.totalorder %s31, 3
    %p493 = scmp.ne.s32.totalorder %s488, %s490
    %p494 = scmp.eq.s32.totalorder %s31, 0
    %p495 = por %p493, %p494
    %p496 = scmp.ne.s32.totalorder %s488, %s490
    %p497 = scmp.eq.s32.totalorder %s36, 3
    %p498 = por %p496, %p497
    %p499 = scmp.ne.s32.totalorder %s490, %s491
    %p500 = scmp.eq.s32.totalorder %s36, 0
    %p501 = por %p499, %p500
    %p502 = scmp.ne.s32.totalorder %s490, %s491
    %p503 = scmp.eq.s32.totalorder %s37, 3
    %p504 = por %p502, %p503
    %p506 = scmp.ne.s32.totalorder %s491, %s505
    %p507 = scmp.eq.s32.totalorder %s37, 0
    %p508 = por %p506, %p507
    %s510 = sadd.s32 %s509, 1
    %p513 = scmp.eq.s32.totalorder %s31, 3
    %p514 = scmp.ne.s32.totalorder %s509, %s511
    %p515 = scmp.eq.s32.totalorder %s31, 0
    %p516 = por %p514, %p515
    %p517 = scmp.ne.s32.totalorder %s509, %s511
    %p518 = scmp.eq.s32.totalorder %s36, 3
    %p519 = por %p517, %p518
    %p520 = scmp.ne.s32.totalorder %s511, %s512
    %p521 = scmp.eq.s32.totalorder %s36, 0
    %p522 = por %p520, %p521
    %p523 = scmp.ne.s32.totalorder %s511, %s512
    %p524 = scmp.eq.s32.totalorder %s37, 3
    %p525 = por %p523, %p524
    %p527 = scmp.ne.s32.totalorder %s512, %s526
    %p528 = scmp.eq.s32.totalorder %s37, 0
    %p529 = por %p527, %p528
    %s531 = sadd.s32 %s530, 1
    %p534 = scmp.eq.s32.totalorder %s31, 3
    %p535 = scmp.ne.s32.totalorder %s530, %s532
    %p536 = scmp.eq.s32.totalorder %s31, 0
    %p537 = por %p535, %p536
    %p538 = scmp.ne.s32.totalorder %s530, %s532
    %p539 = scmp.eq.s32.totalorder %s36, 3
    %p540 = por %p538, %p539
    %p541 = scmp.ne.s32.totalorder %s532, %s533
    %p542 = scmp.eq.s32.totalorder %s36, 0
    %p543 = por %p541, %p542
    %p544 = scmp.ne.s32.totalorder %s532, %s533
    %p545 = scmp.eq.s32.totalorder %s37, 3
    %p546 = por %p544, %p545
    %p548 = scmp.ne.s32.totalorder %s533, %s547
    %p549 = scmp.eq.s32.totalorder %s37, 0
    %p550 = por %p548, %p549
    %s552 = sadd.s32 %s551, 1
    %p555 = scmp.eq.s32.totalorder %s31, 3
    %p556 = scmp.ne.s32.totalorder %s551, %s553
    %p557 = scmp.eq.s32.totalorder %s31, 0
    %p558 = por %p556, %p557
    %p559 = scmp.ne.s32.totalorder %s551, %s553
    %p560 = scmp.eq.s32.totalorder %s36, 3
    %p561 = por %p559, %p560
    %p562 = scmp.ne.s32.totalorder %s553, %s554
    %p563 = scmp.eq.s32.totalorder %s36, 0
    %p564 = por %p562, %p563
    %p565 = scmp.ne.s32.totalorder %s553, %s554
    %p566 = scmp.eq.s32.totalorder %s37, 3
    %p567 = por %p565, %p566
    %p569 = scmp.ne.s32.totalorder %s554, %s568
    %p570 = scmp.eq.s32.totalorder %s37, 0
    %p571 = por %p569, %p570
    %s573 = sadd.s32 %s572, 1
    %p576 = scmp.eq.s32.totalorder %s31, 3
    %p577 = scmp.ne.s32.totalorder %s572, %s574
    %p578 = scmp.eq.s32.totalorder %s31, 0
    %p579 = por %p577, %p578
    %p580 = scmp.ne.s32.totalorder %s572, %s574
    %p581 = scmp.eq.s32.totalorder %s36, 3
    %p582 = por %p580, %p581
    %p583 = scmp.ne.s32.totalorder %s574, %s575
    %p584 = scmp.eq.s32.totalorder %s36, 0
    %p585 = por %p583, %p584
    %p586 = scmp.ne.s32.totalorder %s574, %s575
    %p587 = scmp.eq.s32.totalorder %s37, 3
    %p588 = por %p586, %p587
    %p590 = scmp.ne.s32.totalorder %s575, %s589
    %p591 = scmp.eq.s32.totalorder %s37, 0
    %p592 = por %p590, %p591
    %s594 = sadd.s32 %s593, 1
    %p597 = scmp.eq.s32.totalorder %s31, 3
    %p598 = scmp.ne.s32.totalorder %s593, %s595
    %p599 = scmp.eq.s32.totalorder %s31, 0
    %p600 = por %p598, %p599
    %p601 = scmp.ne.s32.totalorder %s593, %s595
    %p602 = scmp.eq.s32.totalorder %s36, 3
    %p603 = por %p601, %p602
    %p604 = scmp.ne.s32.totalorder %s595, %s596
    %p605 = scmp.eq.s32.totalorder %s36, 0
    %p606 = por %p604, %p605
    %p607 = scmp.ne.s32.totalorder %s595, %s596
    %p608 = scmp.eq.s32.totalorder %s37, 3
    %p609 = por %p607, %p608
    %p611 = scmp.ne.s32.totalorder %s596, %s610
    %p612 = scmp.eq.s32.totalorder %s37, 0
    %p613 = por %p611, %p612
    %s615 = sadd.s32 %s614, 1
    %p618 = scmp.eq.s32.totalorder %s31, 3
    %p619 = scmp.ne.s32.totalorder %s614, %s616
    %p620 = scmp.eq.s32.totalorder %s31, 0
    %p621 = por %p619, %p620
    %p622 = scmp.ne.s32.totalorder %s614, %s616
    %p623 = scmp.eq.s32.totalorder %s36, 3
    %p624 = por %p622, %p623
    %p625 = scmp.ne.s32.totalorder %s616, %s617
    %p626 = scmp.eq.s32.totalorder %s36, 0
    %p627 = por %p625, %p626
    %p628 = scmp.ne.s32.totalorder %s616, %s617
    %p629 = scmp.eq.s32.totalorder %s37, 3
    %p630 = por %p628, %p629
    %p632 = scmp.ne.s32.totalorder %s617, %s631
    %p633 = scmp.eq.s32.totalorder %s37, 0
    %p634 = por %p632, %p633
    %s636 = sadd.s32 %s635, 1
    %p639 = scmp.eq.s32.totalorder %s31, 3
    %p640 = scmp.ne.s32.totalorder %s635, %s637
    %p641 = scmp.eq.s32.totalorder %s31, 0
    %p642 = por %p640, %p641
    %p643 = scmp.ne.s32.totalorder %s635, %s637
    %p644 = scmp.eq.s32.totalorder %s36, 3
    %p645 = por %p643, %p644
    %p646 = scmp.ne.s32.totalorder %s637, %s638
    %p647 = scmp.eq.s32.totalorder %s36, 0
    %p648 = por %p646, %p647
    %p649 = scmp.ne.s32.totalorder %s637, %s638
    %p650 = scmp.eq.s32.totalorder %s37, 3
    %p651 = por %p649, %p650
    %p653 = scmp.ne.s32.totalorder %s638, %s652
    %p654 = scmp.eq.s32.totalorder %s37, 0
    %p655 = por %p653, %p654
    %s657 = sadd.s32 %s656, 1
    %p660 = scmp.eq.s32.totalorder %s31, 3
    %p661 = scmp.ne.s32.totalorder %s656, %s658
    %p662 = scmp.eq.s32.totalorder %s31, 0
    %p663 = por %p661, %p662
    %p664 = scmp.ne.s32.totalorder %s656, %s658
    %p665 = scmp.eq.s32.totalorder %s36, 3
    %p666 = por %p664, %p665
    %p667 = scmp.ne.s32.totalorder %s658, %s659
    %p668 = scmp.eq.s32.totalorder %s36, 0
    %p669 = por %p667, %p668
    %p670 = scmp.ne.s32.totalorder %s658, %s659
    %p671 = scmp.eq.s32.totalorder %s37, 3
    %p672 = por %p670, %p671
    %p674 = scmp.ne.s32.totalorder %s659, %s673
    %p675 = scmp.eq.s32.totalorder %s37, 0
    %p676 = por %p674, %p675
    %s677 = ssub.s32 %s38, %s50
    %s678 = ssub.s32 %s39, %s46
    %s679 = sor.u32 %s677, %s678
    %p680 = scmp.eq.s32.totalorder %s679, 0
    %s682 = sadd.s32 %s681, 1
    %s683 = scalar_select %p680, %s681, %s682
    %p686 = pneg %p680
    %p687 = scmp.eq.s32.totalorder %s31, 3
    %p688 = por %p686, %p687
    %p689 = scmp.ne.s32.totalorder %s681, %s684
    %p690 = scmp.eq.s32.totalorder %s31, 0
    %p691 = por %p689, %p690
    %p692 = scmp.ne.s32.totalorder %s681, %s684
    %p693 = scmp.eq.s32.totalorder %s36, 3
    %p694 = por %p692, %p693
    %p695 = scmp.ne.s32.totalorder %s684, %s685
    %p696 = scmp.eq.s32.totalorder %s36, 0
    %p697 = por %p695, %p696
    %p698 = scmp.ne.s32.totalorder %s684, %s685
    %p699 = scmp.eq.s32.totalorder %s37, 3
    %p700 = por %p698, %p699
    %p702 = scmp.ne.s32.totalorder %s685, %s701
    %p703 = scmp.eq.s32.totalorder %s37, 0
    %p704 = por %p702, %p703
    %p705 = scmp.le.s32.totalorder 1, %s31
    %p706 = scmp.lt.s32.totalorder %s31, 5
    %p707 = pnand %p705, %p706
    %p708 = pneg %p707
    // Predicated region
    $region9: #{dense_block_forward.1} parent=5 // pred_check
      _
    $region10: #{dense_block_forward.1} parent=5 // pred_check_branch
      %710 = sbr.rel (%p707) target = $region12
    $region11: #{dense_block_forward.1} parent=5 // pred_region
      %s711 = ssub.s32 %s31, 1
      // Predicated region
      $region13: #{dense_block_forward.1} parent=11 // pred_check
        %p712 = pneg %p312
      $region14: #{dense_block_forward.1} parent=11 // pred_check_branch
        %714 = sbr.rel (%p712) target = $region16
      $region15: #{dense_block_forward.1} parent=11 // pred_region
        _
      $region16: #{dense_block_forward.1} parent=11 // pred_fallthru
        _
      // Predicated region
      $region17: #{dense_block_forward.1} parent=11 // pred_check
        %p715 = pneg %p333
      $region18: #{dense_block_forward.1} parent=11 // pred_check_branch
        %717 = sbr.rel (%p715) target = $region20
      $region19: #{dense_block_forward.1} parent=11 // pred_region
        _
      $region20: #{dense_block_forward.1} parent=11 // pred_fallthru
        _
      // Predicated region
      $region21: #{dense_block_forward.1} parent=11 // pred_check
        %p718 = pneg %p354
      $region22: #{dense_block_forward.1} parent=11 // pred_check_branch
        %720 = sbr.rel (%p718) target = $region24
      $region23: #{dense_block_forward.1} parent=11 // pred_region
        _
      $region24: #{dense_block_forward.1} parent=11 // pred_fallthru
        _
      // Predicated region
      $region25: #{dense_block_forward.1} parent=11 // pred_check
        %p721 = pneg %p375
      $region26: #{dense_block_forward.1} parent=11 // pred_check_branch
        %723 = sbr.rel (%p721) target = $region28
      $region27: #{dense_block_forward.1} parent=11 // pred_region
        _
      $region28: #{dense_block_forward.1} parent=11 // pred_fallthru
        _
      // Predicated region
      $region29: #{dense_block_forward.1} parent=11 // pred_check
        %p724 = pneg %p396
      $region30: #{dense_block_forward.1} parent=11 // pred_check_branch
        %726 = sbr.rel (%p724) target = $region32
      $region31: #{dense_block_forward.1} parent=11 // pred_region
        _
      $region32: #{dense_block_forward.1} parent=11 // pred_fallthru
        _
      // Predicated region
      $region33: #{dense_block_forward.1} parent=11 // pred_check
        %p727 = pneg %p417
      $region34: #{dense_block_forward.1} parent=11 // pred_check_branch
        %729 = sbr.rel (%p727) target = $region36
      $region35: #{dense_block_forward.1} parent=11 // pred_region
        _
      $region36: #{dense_block_forward.1} parent=11 // pred_fallthru
        _
      // Predicated region
      $region37: #{dense_block_forward.1} parent=11 // pred_check
        %p730 = pneg %p438
      $region38: #{dense_block_forward.1} parent=11 // pred_check_branch
        %732 = sbr.rel (%p730) target = $region40
      $region39: #{dense_block_forward.1} parent=11 // pred_region
        _
      $region40: #{dense_block_forward.1} parent=11 // pred_fallthru
        _
      // Predicated region
      $region41: #{dense_block_forward.1} parent=11 // pred_check
        %p733 = pneg %p459
      $region42: #{dense_block_forward.1} parent=11 // pred_check_branch
        %735 = sbr.rel (%p733) target = $region44
      $region43: #{dense_block_forward.1} parent=11 // pred_region
        _
      $region44: #{dense_block_forward.1} parent=11 // pred_fallthru
        _
      // Predicated region
      $region45: #{dense_block_forward.1} parent=11 // pred_check
        %p736 = pneg %p480
      $region46: #{dense_block_forward.1} parent=11 // pred_check_branch
        %738 = sbr.rel (%p736) target = $region48
      $region47: #{dense_block_forward.1} parent=11 // pred_region
        _
      $region48: #{dense_block_forward.1} parent=11 // pred_fallthru
        _
      // Predicated region
      $region49: #{dense_block_forward.1} parent=11 // pred_check
        %p739 = pneg %p501
      $region50: #{dense_block_forward.1} parent=11 // pred_check_branch
        %741 = sbr.rel (%p739) target = $region52
      $region51: #{dense_block_forward.1} parent=11 // pred_region
        _
      $region52: #{dense_block_forward.1} parent=11 // pred_fallthru
        _
      // Predicated region
      $region53: #{dense_block_forward.1} parent=11 // pred_check
        %p742 = pneg %p522
      $region54: #{dense_block_forward.1} parent=11 // pred_check_branch
        %744 = sbr.rel (%p742) target = $region56
      $region55: #{dense_block_forward.1} parent=11 // pred_region
        _
      $region56: #{dense_block_forward.1} parent=11 // pred_fallthru
        _
      // Predicated region
      $region57: #{dense_block_forward.1} parent=11 // pred_check
        %p745 = pneg %p543
      $region58: #{dense_block_forward.1} parent=11 // pred_check_branch
        %747 = sbr.rel (%p745) target = $region60
      $region59: #{dense_block_forward.1} parent=11 // pred_region
        _
      $region60: #{dense_block_forward.1} parent=11 // pred_fallthru
        _
      // Predicated region
      $region61: #{dense_block_forward.1} parent=11 // pred_check
        %p748 = pneg %p564
      $region62: #{dense_block_forward.1} parent=11 // pred_check_branch
        %750 = sbr.rel (%p748) target = $region64
      $region63: #{dense_block_forward.1} parent=11 // pred_region
        _
      $region64: #{dense_block_forward.1} parent=11 // pred_fallthru
        _
      // Predicated region
      $region65: #{dense_block_forward.1} parent=11 // pred_check
        %p751 = pneg %p585
      $region66: #{dense_block_forward.1} parent=11 // pred_check_branch
        %753 = sbr.rel (%p751) target = $region68
      $region67: #{dense_block_forward.1} parent=11 // pred_region
        _
      $region68: #{dense_block_forward.1} parent=11 // pred_fallthru
        _
      // Predicated region
      $region69: #{dense_block_forward.1} parent=11 // pred_check
        %p754 = pneg %p606
      $region70: #{dense_block_forward.1} parent=11 // pred_check_branch
        %756 = sbr.rel (%p754) target = $region72
      $region71: #{dense_block_forward.1} parent=11 // pred_region
        _
      $region72: #{dense_block_forward.1} parent=11 // pred_fallthru
        _
      // Predicated region
      $region73: #{dense_block_forward.1} parent=11 // pred_check
        %p757 = pneg %p627
      $region74: #{dense_block_forward.1} parent=11 // pred_check_branch
        %759 = sbr.rel (%p757) target = $region76
      $region75: #{dense_block_forward.1} parent=11 // pred_region
        _
      $region76: #{dense_block_forward.1} parent=11 // pred_fallthru
        _
      // Predicated region
      $region77: #{dense_block_forward.1} parent=11 // pred_check
        %p760 = pneg %p648
      $region78: #{dense_block_forward.1} parent=11 // pred_check_branch
        %762 = sbr.rel (%p760) target = $region80
      $region79: #{dense_block_forward.1} parent=11 // pred_region
        _
      $region80: #{dense_block_forward.1} parent=11 // pred_fallthru
        _
      // Predicated region
      $region81: #{dense_block_forward.1} parent=11 // pred_check
        %p763 = pneg %p669
      $region82: #{dense_block_forward.1} parent=11 // pred_check_branch
        %765 = sbr.rel (%p763) target = $region84
      $region83: #{dense_block_forward.1} parent=11 // pred_region
        _
      $region84: #{dense_block_forward.1} parent=11 // pred_fallthru
        _
    $region12: #{dense_block_forward.1} parent=5 // pred_fallthru
      _
    %p766 = scmp.lt.s32.totalorder %s31, 4
    // Predicated region
    $region85: #{dense_block_forward.1} parent=5 // pred_check
      %p767 = pneg %p766
    $region86: #{dense_block_forward.1} parent=5 // pred_check_branch
      %769 = sbr.rel (%p767) target = $region88
    $region87: #{dense_block_forward.1} parent=5 // pred_region
      // Predicated region
      $region89: #{dense_block_forward.1} parent=87 // pred_check
        %p770 = pneg %p65
      $region90: #{dense_block_forward.1} parent=87 // pred_check_branch
        %772 = sbr.rel (%p770) target = $region92
      $region91: #{dense_block_forward.1} parent=87 // pred_region
        %s773 = smul.u32 8, %s39
        %p774 = scmp.lt.s32.totalorder %s38, 1
        %s775 = scalar_select %p774, %s38, 1
        %p776 = scmp.lt.s32.totalorder %s773, 15
        %s777 = scalar_select %p776, %s773, 15
        %s778 = smul.addr %s777, 2
        %s779 = smul.addr %s775, 32
        %s780 = sadd.s32 %s778, %s779
        %s781 = smul.addr %s780, 8
        %s782 = scalar_lea.vmem %s0, %s781
        %s783 = smul.u32 8, %s39
      $region92: #{dense_block_forward.1} parent=87 // pred_fallthru
        _
      // Predicated region
      $region93: #{dense_block_forward.1} parent=87 // pred_check
        %p784 = pneg %p101
      $region94: #{dense_block_forward.1} parent=87 // pred_check_branch
        %786 = sbr.rel (%p784) target = $region96
      $region95: #{dense_block_forward.1} parent=87 // pred_region
        %s787 = smul.u32 %s39, 8
        %s788 = ssub.s32 %s787, 1
        %p789 = scmp.gt.s32.totalorder %s788, 0
        %s790 = scalar_select %p789, %s788, 0
        %p791 = scmp.lt.s32.totalorder %s38, 1
        %s792 = scalar_select %p791, %s38, 1
        %p793 = scmp.lt.s32.totalorder %s790, 15
        %s794 = scalar_select %p793, %s790, 15
        %s795 = smul.addr %s794, 2
        %s796 = smul.addr %s792, 32
        %s797 = sadd.s32 %s795, %s796
        %s798 = smul.addr %s797, 8
        %s799 = scalar_lea.vmem %s1, %s798
        %s800 = smul.u32 %s39, 8
        %s801 = ssub.s32 %s800, 1
        %p802 = scmp.gt.s32.totalorder %s801, 0
        %s803 = scalar_select %p802, %s801, 0
      $region96: #{dense_block_forward.1} parent=87 // pred_fallthru
        _
      // Predicated region
      $region97: #{dense_block_forward.1} parent=87 // pred_check
        %p804 = pneg %p137
      $region98: #{dense_block_forward.1} parent=87 // pred_check_branch
        %806 = sbr.rel (%p804) target = $region100
      $region99: #{dense_block_forward.1} parent=87 // pred_region
        %s807 = smul.u32 %s39, 8
        %s808 = ssub.s32 %s807, 2
        %p809 = scmp.gt.s32.totalorder %s808, 0
        %s810 = scalar_select %p809, %s808, 0
        %p811 = scmp.lt.s32.totalorder %s38, 1
        %s812 = scalar_select %p811, %s38, 1
        %p813 = scmp.lt.s32.totalorder %s810, 15
        %s814 = scalar_select %p813, %s810, 15
        %s815 = smul.addr %s814, 2
        %s816 = smul.addr %s812, 32
        %s817 = sadd.s32 %s815, %s816
        %s818 = smul.addr %s817, 8
        %s819 = scalar_lea.vmem %s2, %s818
        %s820 = smul.u32 %s39, 8
        %s821 = ssub.s32 %s820, 2
        %p822 = scmp.gt.s32.totalorder %s821, 0
        %s823 = scalar_select %p822, %s821, 0
      $region100: #{dense_block_forward.1} parent=87 // pred_fallthru
        _
      // Predicated region
      $region101: #{dense_block_forward.1} parent=87 // pred_check
        %p824 = pneg %p173
      $region102: #{dense_block_forward.1} parent=87 // pred_check_branch
        %826 = sbr.rel (%p824) target = $region104
      $region103: #{dense_block_forward.1} parent=87 // pred_region
        %s827 = smul.u32 %s39, 8
        %s828 = ssub.s32 %s827, 3
        %p829 = scmp.gt.s32.totalorder %s828, 0
        %s830 = scalar_select %p829, %s828, 0
        %p831 = scmp.lt.s32.totalorder %s38, 1
        %s832 = scalar_select %p831, %s38, 1
        %p833 = scmp.lt.s32.totalorder %s830, 15
        %s834 = scalar_select %p833, %s830, 15
        %s835 = smul.addr %s834, 2
        %s836 = smul.addr %s832, 32
        %s837 = sadd.s32 %s835, %s836
        %s838 = smul.addr %s837, 8
        %s839 = scalar_lea.vmem %s3, %s838
        %s840 = smul.u32 %s39, 8
        %s841 = ssub.s32 %s840, 3
        %p842 = scmp.gt.s32.totalorder %s841, 0
        %s843 = scalar_select %p842, %s841, 0
      $region104: #{dense_block_forward.1} parent=87 // pred_fallthru
        _
      // Predicated region
      $region105: #{dense_block_forward.1} parent=87 // pred_check
        %p844 = pneg %p209
      $region106: #{dense_block_forward.1} parent=87 // pred_check_branch
        %846 = sbr.rel (%p844) target = $region108
      $region107: #{dense_block_forward.1} parent=87 // pred_region
        %s847 = sadd.s32 %s39, 1
        %s848 = smul.u32 %s847, 8
        %p849 = scmp.lt.s32.totalorder %s848, 15
        %s850 = scalar_select %p849, %s848, 15
        %p851 = scmp.lt.s32.totalorder %s38, 1
        %s852 = scalar_select %p851, %s38, 1
        %p853 = scmp.lt.s32.totalorder %s850, 15
        %s854 = scalar_select %p853, %s850, 15
        %s855 = smul.addr %s854, 2
        %s856 = smul.addr %s852, 32
        %s857 = sadd.s32 %s855, %s856
        %s858 = smul.addr %s857, 8
        %s859 = scalar_lea.vmem %s4, %s858
        %s860 = sadd.s32 %s39, 1
        %s861 = smul.u32 %s860, 8
        %p862 = scmp.lt.s32.totalorder %s861, 15
        %s863 = scalar_select %p862, %s861, 15
      $region108: #{dense_block_forward.1} parent=87 // pred_fallthru
        _
      // Predicated region
      $region109: #{dense_block_forward.1} parent=87 // pred_check
        %p864 = pneg %p247
      $region110: #{dense_block_forward.1} parent=87 // pred_check_branch
        %866 = sbr.rel (%p864) target = $region112
      $region111: #{dense_block_forward.1} parent=87 // pred_region
        %s867 = sadd.s32 %s39, 1
        %s868 = smul.u32 %s867, 8
        %s869 = sadd.s32 %s868, 1
        %p870 = scmp.lt.s32.totalorder %s869, 15
        %s871 = scalar_select %p870, %s869, 15
        %p872 = scmp.lt.s32.totalorder %s38, 1
        %s873 = scalar_select %p872, %s38, 1
        %p874 = scmp.lt.s32.totalorder %s871, 15
        %s875 = scalar_select %p874, %s871, 15
        %s876 = smul.addr %s875, 2
        %s877 = smul.addr %s873, 32
        %s878 = sadd.s32 %s876, %s877
        %s879 = smul.addr %s878, 8
        %s880 = scalar_lea.vmem %s5, %s879
        %s881 = sadd.s32 %s39, 1
        %s882 = smul.u32 %s881, 8
        %s883 = sadd.s32 %s882, 1
        %p884 = scmp.lt.s32.totalorder %s883, 15
        %s885 = scalar_select %p884, %s883, 15
      $region112: #{dense_block_forward.1} parent=87 // pred_fallthru
        _
      // Predicated region
      $region113: #{dense_block_forward.1} parent=87 // pred_check
        %p886 = pneg %p285
      $region114: #{dense_block_forward.1} parent=87 // pred_check_branch
        %888 = sbr.rel (%p886) target = $region116
      $region115: #{dense_block_forward.1} parent=87 // pred_region
        %s889 = sadd.s32 %s39, 1
        %s890 = smul.u32 %s889, 8
        %s891 = sadd.s32 %s890, 2
        %p892 = scmp.lt.s32.totalorder %s891, 15
        %s893 = scalar_select %p892, %s891, 15
        %p894 = scmp.lt.s32.totalorder %s38, 1
        %s895 = scalar_select %p894, %s38, 1
        %p896 = scmp.lt.s32.totalorder %s893, 15
        %s897 = scalar_select %p896, %s893, 15
        %s898 = smul.addr %s897, 2
        %s899 = smul.addr %s895, 32
        %s900 = sadd.s32 %s898, %s899
        %s901 = smul.addr %s900, 8
        %s902 = scalar_lea.vmem %s6, %s901
        %s903 = sadd.s32 %s39, 1
        %s904 = smul.u32 %s903, 8
        %s905 = sadd.s32 %s904, 2
        %p906 = scmp.lt.s32.totalorder %s905, 15
        %s907 = scalar_select %p906, %s905, 15
      $region116: #{dense_block_forward.1} parent=87 // pred_fallthru
        _
    $region88: #{dense_block_forward.1} parent=5 // pred_fallthru
      _
    %p908 = scmp.le.s32.totalorder 1, %s31
    %p909 = scmp.lt.s32.totalorder %s31, 5
    %p910 = pnand %p908, %p909
    %p911 = pneg %p910
    // Predicated region
    $region117: #{dense_block_forward.1} parent=5 // pred_check
      _
    $region118: #{dense_block_forward.1} parent=5 // pred_check_branch
      %913 = sbr.rel (%p910) target = $region120
    $region119: #{dense_block_forward.1} parent=5 // pred_region
      %s914 = ssub.s32 %s31, 1
      %s915 = smul.u32 8, %s41
      %p916 = scmp.lt.s32.totalorder %s40, 1
      %s917 = scalar_select %p916, %s40, 1
      %p918 = scmp.lt.s32.totalorder %s915, 15
      %s919 = scalar_select %p918, %s915, 15
      %s920 = smul.addr %s919, 2
      %s921 = smul.addr %s917, 32
      %s922 = sadd.s32 %s920, %s921
      %s923 = smul.addr %s922, 8
      %s924 = scalar_lea.vmem %s0, %s923
      %p925 = pneg %p71
      %p926 = pneg %p68
      %s927 = smul.u32 %s41, 8
      %s928 = ssub.s32 %s927, 1
      %p929 = scmp.gt.s32.totalorder %s928, 0
      %s930 = scalar_select %p929, %s928, 0
      %p931 = scmp.lt.s32.totalorder %s40, 1
      %s932 = scalar_select %p931, %s40, 1
      %p933 = scmp.lt.s32.totalorder %s930, 15
      %s934 = scalar_select %p933, %s930, 15
      %s935 = smul.addr %s934, 2
      %s936 = smul.addr %s932, 32
      %s937 = sadd.s32 %s935, %s936
      %s938 = smul.addr %s937, 8
      %s939 = scalar_lea.vmem %s1, %s938
      %p940 = pneg %p107
      %p941 = pneg %p104
      %s942 = smul.u32 %s41, 8
      %s943 = ssub.s32 %s942, 2
      %p944 = scmp.gt.s32.totalorder %s943, 0
      %s945 = scalar_select %p944, %s943, 0
      %p946 = scmp.lt.s32.totalorder %s40, 1
      %s947 = scalar_select %p946, %s40, 1
      %p948 = scmp.lt.s32.totalorder %s945, 15
      %s949 = scalar_select %p948, %s945, 15
      %s950 = smul.addr %s949, 2
      %s951 = smul.addr %s947, 32
      %s952 = sadd.s32 %s950, %s951
      %s953 = smul.addr %s952, 8
      %s954 = scalar_lea.vmem %s2, %s953
      %p955 = pneg %p143
      %p956 = pneg %p140
      %s957 = smul.u32 %s41, 8
      %s958 = ssub.s32 %s957, 3
      %p959 = scmp.gt.s32.totalorder %s958, 0
      %s960 = scalar_select %p959, %s958, 0
      %p961 = scmp.lt.s32.totalorder %s40, 1
      %s962 = scalar_select %p961, %s40, 1
      %p963 = scmp.lt.s32.totalorder %s960, 15
      %s964 = scalar_select %p963, %s960, 15
      %s965 = smul.addr %s964, 2
      %s966 = smul.addr %s962, 32
      %s967 = sadd.s32 %s965, %s966
      %s968 = smul.addr %s967, 8
      %s969 = scalar_lea.vmem %s3, %s968
      %p970 = pneg %p179
      %p971 = pneg %p176
      %s972 = sadd.s32 %s41, 1
      %s973 = smul.u32 %s972, 8
      %p974 = scmp.lt.s32.totalorder %s973, 15
      %s975 = scalar_select %p974, %s973, 15
      %p976 = scmp.lt.s32.totalorder %s40, 1
      %s977 = scalar_select %p976, %s40, 1
      %p978 = scmp.lt.s32.totalorder %s975, 15
      %s979 = scalar_select %p978, %s975, 15
      %s980 = smul.addr %s979, 2
      %s981 = smul.addr %s977, 32
      %s982 = sadd.s32 %s980, %s981
      %s983 = smul.addr %s982, 8
      %s984 = scalar_lea.vmem %s4, %s983
      %p985 = pneg %p215
      %p986 = pneg %p212
      %s987 = sadd.s32 %s41, 1
      %s988 = smul.u32 %s987, 8
      %s989 = sadd.s32 %s988, 1
      %p990 = scmp.lt.s32.totalorder %s989, 15
      %s991 = scalar_select %p990, %s989, 15
      %p992 = scmp.lt.s32.totalorder %s40, 1
      %s993 = scalar_select %p992, %s40, 1
      %p994 = scmp.lt.s32.totalorder %s991, 15
      %s995 = scalar_select %p994, %s991, 15
      %s996 = smul.addr %s995, 2
      %s997 = smul.addr %s993, 32
      %s998 = sadd.s32 %s996, %s997
      %s999 = smul.addr %s998, 8
      %s1000 = scalar_lea.vmem %s5, %s999
      %p1001 = pneg %p253
      %p1002 = pneg %p250
      %s1003 = sadd.s32 %s41, 1
      %s1004 = smul.u32 %s1003, 8
      %s1005 = sadd.s32 %s1004, 2
      %p1006 = scmp.lt.s32.totalorder %s1005, 15
      %s1007 = scalar_select %p1006, %s1005, 15
      %p1008 = scmp.lt.s32.totalorder %s40, 1
      %s1009 = scalar_select %p1008, %s40, 1
      %p1010 = scmp.lt.s32.totalorder %s1007, 15
      %s1011 = scalar_select %p1010, %s1007, 15
      %s1012 = smul.addr %s1011, 2
      %s1013 = smul.addr %s1009, 32
      %s1014 = sadd.s32 %s1012, %s1013
      %s1015 = smul.addr %s1014, 8
      %s1016 = scalar_lea.vmem %s6, %s1015
      %p1017 = pneg %p291
      %p1018 = pneg %p288
      %p1019 = pneg %p312
      %p1020 = pneg %p309
      %p1021 = pneg %p333
      %p1022 = pneg %p330
      %p1023 = pneg %p354
      %p1024 = pneg %p351
      %p1025 = pneg %p375
      %p1026 = pneg %p372
      %p1027 = pneg %p396
      %p1028 = pneg %p393
      %p1029 = pneg %p417
      %p1030 = pneg %p414
      %p1031 = pneg %p438
      %p1032 = pneg %p435
      %p1033 = pneg %p459
      %p1034 = pneg %p456
      %p1035 = pneg %p480
      %p1036 = pneg %p477
      %p1037 = pneg %p501
      %p1038 = pneg %p498
      %p1039 = pneg %p522
      %p1040 = pneg %p519
      %p1041 = pneg %p543
      %p1042 = pneg %p540
      %p1043 = pneg %p564
      %p1044 = pneg %p561
      %p1045 = pneg %p585
      %p1046 = pneg %p582
      %p1047 = pneg %p606
      %p1048 = pneg %p603
      %p1049 = pneg %p627
      %p1050 = pneg %p624
      %p1051 = pneg %p648
      %p1052 = pneg %p645
      %p1053 = pneg %p669
      %p1054 = pneg %p666
      %p1055 = pneg %p697
      %p1056 = pneg %p694
      %s1057 = smul.u32 8, %s41
      %p1058 = scmp.lt.s32.totalorder %s40, 1
      %s1059 = scalar_select %p1058, %s40, 1
      %p1060 = scmp.lt.s32.totalorder %s1057, 15
      %s1061 = scalar_select %p1060, %s1057, 15
      %s1062 = smul.addr %s1061, 2
      %s1063 = smul.addr %s1059, 32
      %s1064 = sadd.s32 %s1062, %s1063
      %s1065 = smul.addr %s1064, 8
      %s1066 = scalar_lea.vmem %s25, %s1065
      %s1067 = smul.u32 8, %s41
      %p1068 = scmp.lt.s32.totalorder %s40, 1
      %s1069 = scalar_select %p1068, %s40, 1
      %p1070 = scmp.lt.s32.totalorder %s1067, 15
      %s1071 = scalar_select %p1070, %s1067, 15
      %s1072 = smul.addr %s1071, 2
      %s1073 = smul.addr %s1069, 32
      %s1074 = sadd.s32 %s1072, %s1073
      %s1075 = smul.addr %s1074, 8
      %s1076 = scalar_lea.vmem %s0, %s1075
      %s1077 = smul.u32 8, %s41
      %s1078 = smul.u32 %s41, 8
      %s1079 = ssub.s32 %s1078, 1
      %p1080 = scmp.gt.s32.totalorder %s1079, 0
      %s1081 = scalar_select %p1080, %s1079, 0
      %p1082 = scmp.lt.s32.totalorder %s40, 1
      %s1083 = scalar_select %p1082, %s40, 1
      %p1084 = scmp.lt.s32.totalorder %s1081, 15
      %s1085 = scalar_select %p1084, %s1081, 15
      %s1086 = smul.addr %s1085, 2
      %s1087 = smul.addr %s1083, 32
      %s1088 = sadd.s32 %s1086, %s1087
      %s1089 = smul.addr %s1088, 8
      %s1090 = scalar_lea.vmem %s1, %s1089
      %s1091 = smul.u32 %s41, 8
      %s1092 = ssub.s32 %s1091, 1
      %p1093 = scmp.gt.s32.totalorder %s1092, 0
      %s1094 = scalar_select %p1093, %s1092, 0
      %s1095 = smul.u32 %s41, 8
      %s1096 = ssub.s32 %s1095, 2
      %p1097 = scmp.gt.s32.totalorder %s1096, 0
      %s1098 = scalar_select %p1097, %s1096, 0
      %p1099 = scmp.lt.s32.totalorder %s40, 1
      %s1100 = scalar_select %p1099, %s40, 1
      %p1101 = scmp.lt.s32.totalorder %s1098, 15
      %s1102 = scalar_select %p1101, %s1098, 15
      %s1103 = smul.addr %s1102, 2
      %s1104 = smul.addr %s1100, 32
      %s1105 = sadd.s32 %s1103, %s1104
      %s1106 = smul.addr %s1105, 8
      %s1107 = scalar_lea.vmem %s2, %s1106
      %s1108 = smul.u32 %s41, 8
      %s1109 = ssub.s32 %s1108, 2
      %p1110 = scmp.gt.s32.totalorder %s1109, 0
      %s1111 = scalar_select %p1110, %s1109, 0
      %s1112 = smul.u32 %s41, 8
      %s1113 = ssub.s32 %s1112, 3
      %p1114 = scmp.gt.s32.totalorder %s1113, 0
      %s1115 = scalar_select %p1114, %s1113, 0
      %p1116 = scmp.lt.s32.totalorder %s40, 1
      %s1117 = scalar_select %p1116, %s40, 1
      %p1118 = scmp.lt.s32.totalorder %s1115, 15
      %s1119 = scalar_select %p1118, %s1115, 15
      %s1120 = smul.addr %s1119, 2
      %s1121 = smul.addr %s1117, 32
      %s1122 = sadd.s32 %s1120, %s1121
      %s1123 = smul.addr %s1122, 8
      %s1124 = scalar_lea.vmem %s3, %s1123
      %s1125 = smul.u32 %s41, 8
      %s1126 = ssub.s32 %s1125, 3
      %p1127 = scmp.gt.s32.totalorder %s1126, 0
      %s1128 = scalar_select %p1127, %s1126, 0
      %s1129 = sadd.s32 %s41, 1
      %s1130 = smul.u32 %s1129, 8
      %p1131 = scmp.lt.s32.totalorder %s1130, 15
      %s1132 = scalar_select %p1131, %s1130, 15
      %p1133 = scmp.lt.s32.totalorder %s40, 1
      %s1134 = scalar_select %p1133, %s40, 1
      %p1135 = scmp.lt.s32.totalorder %s1132, 15
      %s1136 = scalar_select %p1135, %s1132, 15
      %s1137 = smul.addr %s1136, 2
      %s1138 = smul.addr %s1134, 32
      %s1139 = sadd.s32 %s1137, %s1138
      %s1140 = smul.addr %s1139, 8
      %s1141 = scalar_lea.vmem %s4, %s1140
      %s1142 = sadd.s32 %s41, 1
      %s1143 = smul.u32 %s1142, 8
      %p1144 = scmp.lt.s32.totalorder %s1143, 15
      %s1145 = scalar_select %p1144, %s1143, 15
      %s1146 = sadd.s32 %s41, 1
      %s1147 = smul.u32 %s1146, 8
      %s1148 = sadd.s32 %s1147, 1
      %p1149 = scmp.lt.s32.totalorder %s1148, 15
      %s1150 = scalar_select %p1149, %s1148, 15
      %p1151 = scmp.lt.s32.totalorder %s40, 1
      %s1152 = scalar_select %p1151, %s40, 1
      %p1153 = scmp.lt.s32.totalorder %s1150, 15
      %s1154 = scalar_select %p1153, %s1150, 15
      %s1155 = smul.addr %s1154, 2
      %s1156 = smul.addr %s1152, 32
      %s1157 = sadd.s32 %s1155, %s1156
      %s1158 = smul.addr %s1157, 8
      %s1159 = scalar_lea.vmem %s5, %s1158
      %s1160 = sadd.s32 %s41, 1
      %s1161 = smul.u32 %s1160, 8
      %s1162 = sadd.s32 %s1161, 1
      %p1163 = scmp.lt.s32.totalorder %s1162, 15
      %s1164 = scalar_select %p1163, %s1162, 15
      %s1165 = sadd.s32 %s41, 1
      %s1166 = smul.u32 %s1165, 8
      %s1167 = sadd.s32 %s1166, 2
      %p1168 = scmp.lt.s32.totalorder %s1167, 15
      %s1169 = scalar_select %p1168, %s1167, 15
      %p1170 = scmp.lt.s32.totalorder %s40, 1
      %s1171 = scalar_select %p1170, %s40, 1
      %p1172 = scmp.lt.s32.totalorder %s1169, 15
      %s1173 = scalar_select %p1172, %s1169, 15
      %s1174 = smul.addr %s1173, 2
      %s1175 = smul.addr %s1171, 32
      %s1176 = sadd.s32 %s1174, %s1175
      %s1177 = smul.addr %s1176, 8
      %s1178 = scalar_lea.vmem %s6, %s1177
      %s1179 = sadd.s32 %s41, 1
      %s1180 = smul.u32 %s1179, 8
      %s1181 = sadd.s32 %s1180, 2
      %p1182 = scmp.lt.s32.totalorder %s1181, 15
      %s1183 = scalar_select %p1182, %s1181, 15
      %s1184 = smul.u32 8, %s41
      %p1185 = scmp.lt.s32.totalorder %s40, 1
      %s1186 = scalar_select %p1185, %s40, 1
      %p1187 = scmp.lt.s32.totalorder %s1184, 15
      %s1188 = scalar_select %p1187, %s1184, 15
      %s1189 = smul.addr %s1188, 2
      %s1190 = smul.addr %s1186, 32
      %s1191 = sadd.s32 %s1189, %s1190
      %s1192 = smul.addr %s1191, 8
      %s1193 = scalar_lea.vmem %s25, %s1192
      %s1194 = smul.u32 8, %s41
      %p1196 = scmp.gt.s32.totalorder %s41, 0
      %s1197 = scalar_select %p1196, 1, 0
      %s1198 = scvt.s32.f32 %s1197
      %p1199 = scmp.lt.s32.totalorder %s41, 1
      %s1200 = scalar_select %p1199, 1, 0
      %s1201 = scvt.s32.f32 %s1200
      %v1202 = vld [vmem:[%s1124] sm:$0xff]
      %v1203 = vld [vmem:[%s1124 + $0x8] sm:$0xff]
      %v1204 = vld [vmem:[%s1107] sm:$0xff]
      %v1205 = vld [vmem:[%s1107 + $0x8] sm:$0xff]
      %v1206 = vld [vmem:[%s1090] sm:$0xff]
      %v1207 = vld [vmem:[%s1090 + $0x8] sm:$0xff]
      %v1208 = vld [vmem:[%s1076] sm:$0xff]
      %v1209 = vld [vmem:[%s1076 + $0x8] sm:$0xff]
      %v1210 = vld [vmem:[%s1076 + $0x10] sm:$0xff]
      %v1211 = vld [vmem:[%s1076 + $0x18] sm:$0xff]
      %v1212 = vld [vmem:[%s1076 + $0x20] sm:$0xff]
      %v1213 = vld [vmem:[%s1076 + $0x28] sm:$0xff]
      %v1214 = vld [vmem:[%s1076 + $0x30] sm:$0xff]
      %v1215 = vld [vmem:[%s1076 + $0x38] sm:$0xff]
      %v1216 = vld [vmem:[%s1076 + $0x40] sm:$0xff]
      %v1217 = vld [vmem:[%s1076 + $0x48] sm:$0xff]
      %v1218 = vld [vmem:[%s1076 + $0x50] sm:$0xff]
      %v1219 = vld [vmem:[%s1076 + $0x58] sm:$0xff]
      %v1220 = vld [vmem:[%s1076 + $0x60] sm:$0xff]
      %v1221 = vld [vmem:[%s1076 + $0x68] sm:$0xff]
      %v1222 = vld [vmem:[%s1076 + $0x70] sm:$0xff]
      %v1223 = vld [vmem:[%s1076 + $0x78] sm:$0xff]
      %v1224 = vld [vmem:[%s1141] sm:$0xff]
      %v1225 = vld [vmem:[%s1141 + $0x8] sm:$0xff]
      %v1226 = vld [vmem:[%s1159] sm:$0xff]
      %v1227 = vld [vmem:[%s1159 + $0x8] sm:$0xff]
      %v1228 = vld [vmem:[%s1178] sm:$0xff]
      %v1229 = vld [vmem:[%s1178 + $0x8] sm:$0xff]
      %v1230 = vld [vmem:[%s7] sm:$0x1]
      %v1232 = vlaneseq
      %v1233 = vshrl.u32 %v1232, 7
      %v1234 = vsub.s32 0, %v1233
      %v1235 = vrot.slane %v1230, %v1234
      %v1237 = vmul.f32 %v1202, %v1235
      %v1238 = vmul.f32 %v1203, %v1235
      %v1239 = vmul.f32 %v1204, %v1235
      %v1240 = vmul.f32 %v1205, %v1235
      %v1241 = vmul.f32 %v1206, %v1235
      %v1242 = vmul.f32 %v1207, %v1235
      %v1243 = vmul.f32 %v1208, %v1235
      %v1244 = vmul.f32 %v1209, %v1235
      %v1245 = vmul.f32 %v1210, %v1235
      %v1246 = vmul.f32 %v1211, %v1235
      %v1247 = vmul.f32 %v1212, %v1235
      %v1248 = vmul.f32 %v1213, %v1235
      %v1249 = vmul.f32 %v1214, %v1235
      %v1250 = vmul.f32 %v1215, %v1235
      %v1251 = vmul.f32 %v1216, %v1235
      %v1252 = vmul.f32 %v1217, %v1235
      %v1253 = vmul.f32 %v1218, %v1235
      %v1254 = vmul.f32 %v1219, %v1235
      %v1255 = vmul.f32 %v1220, %v1235
      %v1256 = vmul.f32 %v1221, %v1235
      %v1257 = vmul.f32 %v1222, %v1235
      %v1258 = vmul.f32 %v1223, %v1235
      %v1259 = vmul.f32 %v1224, %v1235
      %v1260 = vmul.f32 %v1225, %v1235
      %v1261 = vmul.f32 %v1226, %v1235
      %v1262 = vmul.f32 %v1227, %v1235
      %v1263 = vmul.f32 %v1228, %v1235
      %v1264 = vmul.f32 %v1229, %v1235
      %v1265 = vld [vmem:[%s8] sm:$0x1]
      %v1267 = vlaneseq
      %v1268 = vshrl.u32 %v1267, 7
      %v1269 = vsub.s32 0, %v1268
      %v1270 = vrot.slane %v1265, %v1269
      %v1272 = vadd.f32 %v1237, %v1270
      %v1273 = vadd.f32 %v1238, %v1270
      %v1274 = vadd.f32 %v1239, %v1270
      %v1275 = vadd.f32 %v1240, %v1270
      %v1276 = vadd.f32 %v1241, %v1270
      %v1277 = vadd.f32 %v1242, %v1270
      %v1278 = vadd.f32 %v1243, %v1270
      %v1279 = vadd.f32 %v1244, %v1270
      %v1280 = vadd.f32 %v1245, %v1270
      %v1281 = vadd.f32 %v1246, %v1270
      %v1282 = vadd.f32 %v1247, %v1270
      %v1283 = vadd.f32 %v1248, %v1270
      %v1284 = vadd.f32 %v1249, %v1270
      %v1285 = vadd.f32 %v1250, %v1270
      %v1286 = vadd.f32 %v1251, %v1270
      %v1287 = vadd.f32 %v1252, %v1270
      %v1288 = vadd.f32 %v1253, %v1270
      %v1289 = vadd.f32 %v1254, %v1270
      %v1290 = vadd.f32 %v1255, %v1270
      %v1291 = vadd.f32 %v1256, %v1270
      %v1292 = vadd.f32 %v1257, %v1270
      %v1293 = vadd.f32 %v1258, %v1270
      %v1294 = vadd.f32 %v1259, %v1270
      %v1295 = vadd.f32 %v1260, %v1270
      %v1296 = vadd.f32 %v1261, %v1270
      %v1297 = vadd.f32 %v1262, %v1270
      %v1298 = vadd.f32 %v1263, %v1270
      %v1299 = vadd.f32 %v1264, %v1270
      %v1300 = vmax.f32 %v1272, 0.0
      %v1301 = vmax.f32 %v1273, 0.0
      %v1302 = vmax.f32 %v1274, 0.0
      %v1303 = vmax.f32 %v1275, 0.0
      %v1304 = vmax.f32 %v1276, 0.0
      %v1305 = vmax.f32 %v1277, 0.0
      %v1306 = vmax.f32 %v1278, 0.0
      %v1307 = vmax.f32 %v1279, 0.0
      %v1308 = vmax.f32 %v1280, 0.0
      %v1309 = vmax.f32 %v1281, 0.0
      %v1310 = vmax.f32 %v1282, 0.0
      %v1311 = vmax.f32 %v1283, 0.0
      %v1312 = vmax.f32 %v1284, 0.0
      %v1313 = vmax.f32 %v1285, 0.0
      %v1314 = vmax.f32 %v1286, 0.0
      %v1315 = vmax.f32 %v1287, 0.0
      %v1316 = vmax.f32 %v1288, 0.0
      %v1317 = vmax.f32 %v1289, 0.0
      %v1318 = vmax.f32 %v1290, 0.0
      %v1319 = vmax.f32 %v1291, 0.0
      %v1320 = vmax.f32 %v1292, 0.0
      %v1321 = vmax.f32 %v1293, 0.0
      %v1322 = vmax.f32 %v1294, 0.0
      %v1323 = vmax.f32 %v1295, 0.0
      %v1324 = vmax.f32 %v1296, 0.0
      %v1325 = vmax.f32 %v1297, 0.0
      %v1326 = vmax.f32 %v1298, 0.0
      %v1327 = vmax.f32 %v1299, 0.0
      %v1328 = vpack.c.bf16 %v1301, %v1300
      %v1329 = vpack.c.bf16 %v1303, %v1302
      %v1330 = vpack.c.bf16 %v1305, %v1304
      %v1331 = vpack.c.bf16 %v1307, %v1306
      %v1332 = vpack.c.bf16 %v1309, %v1308
      %v1333 = vpack.c.bf16 %v1311, %v1310
      %v1334 = vpack.c.bf16 %v1313, %v1312
      %v1335 = vpack.c.bf16 %v1315, %v1314
      %v1336 = vpack.c.bf16 %v1317, %v1316
      %v1337 = vpack.c.bf16 %v1319, %v1318
      %v1338 = vpack.c.bf16 %v1321, %v1320
      %v1339 = vpack.c.bf16 %v1323, %v1322
      %v1340 = vpack.c.bf16 %v1325, %v1324
      %v1341 = vpack.c.bf16 %v1327, %v1326
      %v1342 = vld [vmem:[%s9] sm:$0x3]
      %v1343 = vld [vmem:[%s10] sm:$0x1]
      %v1345 = vlaneseq
      %v1346 = vshrl.u32 %v1345, 7
      %v1347 = vsub.s32 0, %v1346
      %v1348 = vrot.slane %v1343, %v1347
      %vm1350 = vcmask 31744
      %v1352 = vsel %vm1350, %v1328, 0
      %v1355 = vsel %vm1350, %v1329, 0
      %v1358 = vsel %vm1350, %v1330, 0
      %v1361 = vsel %vm1350, %v1331, 0
      %v1364 = vsel %vm1350, %v1332, 0
      %v1367 = vsel %vm1350, %v1333, 0
      %v1370 = vsel %vm1350, %v1334, 0
      %v1373 = vsel %vm1350, %v1335, 0
      %v1376 = vsel %vm1350, %v1336, 0
      %v1379 = vsel %vm1350, %v1337, 0
      %v1382 = vsel %vm1350, %v1338, 0
      %v1385 = vsel %vm1350, %v1339, 0
      %v1388 = vsel %vm1350, %v1340, 0
      %v1391 = vsel %vm1350, %v1341, 0
      %vm1393 = vcmask 1041408
      %v1395 = vsel %vm1393, %v1342, 0
      %1397 = vmatprep.subr.bf16.mxu0 0
      %1398 = vmatpush1.bf16.msra.mxu0 0
      %1399 = vmatprep.subr.bf16.mxu0 0
      %1400 = vmatpush1.bf16.msra.mxu0 0
      %1401 = vmatprep.subr.bf16.mxu0 0
      %1402 = vmatpush1.bf16.msra.mxu0 0
      %1403 = vmatprep.subr.bf16.mxu0 0
      %1404 = vmatpush1.bf16.msra.mxu0 0
      %1405 = vmatprep.subr.bf16.mxu0 0
      %1406 = vmatpush1.bf16.msra.mxu0 0
      %1407 = vmatprep.subr.bf16.mxu0 0
      %1408 = vmatpush1.bf16.msra.mxu0 0
      %1409 = vmatprep.subr.bf16.mxu0 0
      %1410 = vmatpush1.bf16.msra.mxu0 0
      %1411 = vmatprep.subr.bf16.mxu0 0
      %1412 = vmatpush1.bf16.msra.mxu0 %v1395
      %1413 = vmatprep.subr.bf16.mxu0 0
      %1414 = vmatpush2.bf16.msra.mxu0 0
      %1415 = vmatprep.subr.bf16.mxu0 0
      %1416 = vmatpush2.bf16.msra.mxu0 0
      %1417 = vmatprep.subr.bf16.mxu0 0
      %1418 = vmatpush2.bf16.msra.mxu0 0
      %1419 = vmatprep.subr.bf16.mxu0 0
      %1420 = vmatpush2.bf16.msra.mxu0 0
      %1421 = vmatprep.subr.bf16.mxu0 0
      %1422 = vmatpush2.bf16.msra.mxu0 0
      %1423 = vmatprep.subr.bf16.mxu0 0
      %1424 = vmatpush2.bf16.msra.mxu0 0
      %1425 = vmatprep.subr.bf16.mxu0 0
      %1426 = vmatpush2.bf16.msra.mxu0 0
      %1427 = vmatprep.subr.bf16.mxu0 0
      %1428 = vmatpush2.bf16.msra.mxu0 0
      %1429 = vmatprep.mubr.bf16.mxu0 0
      %1430 = vmatmul.mubr.bf16.gmra.mxu0 %v1352
      %v1431 = vpop.f32.mrf.mxu0
      %v1432 = vadd.f32 %v1348, %v1431
      %v1433 = vpop.f32.mrf.mxu0
      %v1434 = vpop.f32.mrf.mxu0
      %v1435 = vadd.f32 %v1348, %v1434
      %v1436 = vpop.f32.mrf.mxu0
      %1437 = vmatprep.mubr.bf16.mxu0 0
      %1438 = vmatmul.mubr.bf16.gmra.mxu0 %v1355
      %v1439 = vpop.f32.mrf.mxu0
      %v1440 = vadd.f32 %v1348, %v1439
      %v1441 = vpop.f32.mrf.mxu0
      %v1442 = vpop.f32.mrf.mxu0
      %v1443 = vadd.f32 %v1348, %v1442
      %v1444 = vpop.f32.mrf.mxu0
      %1445 = vmatprep.mubr.bf16.mxu0 0
      %1446 = vmatmul.mubr.bf16.gmra.mxu0 %v1358
      %v1447 = vpop.f32.mrf.mxu0
      %v1448 = vadd.f32 %v1348, %v1447
      %v1449 = vpop.f32.mrf.mxu0
      %v1450 = vpop.f32.mrf.mxu0
      %v1451 = vadd.f32 %v1348, %v1450
      %v1452 = vpop.f32.mrf.mxu0
      %1453 = vmatprep.mubr.bf16.mxu0 0
      %1454 = vmatmul.mubr.bf16.gmra.mxu0 %v1361
      %v1455 = vpop.f32.mrf.mxu0
      %v1456 = vadd.f32 %v1348, %v1455
      %v1457 = vpop.f32.mrf.mxu0
      %v1458 = vpop.f32.mrf.mxu0
      %v1459 = vadd.f32 %v1348, %v1458
      %v1460 = vpop.f32.mrf.mxu0
      %1461 = vmatprep.mubr.bf16.mxu0 0
      %1462 = vmatmul.mubr.bf16.gmra.mxu0 %v1364
      %v1463 = vpop.f32.mrf.mxu0
      %v1464 = vadd.f32 %v1348, %v1463
      %v1465 = vpop.f32.mrf.mxu0
      %v1466 = vpop.f32.mrf.mxu0
      %v1467 = vadd.f32 %v1348, %v1466
      %v1468 = vpop.f32.mrf.mxu0
      %1469 = vmatprep.mubr.bf16.mxu0 0
      %1470 = vmatmul.mubr.bf16.gmra.mxu0 %v1367
      %v1471 = vpop.f32.mrf.mxu0
      %v1472 = vadd.f32 %v1348, %v1471
      %v1473 = vpop.f32.mrf.mxu0
      %v1474 = vpop.f32.mrf.mxu0
      %v1475 = vadd.f32 %v1348, %v1474
      %v1476 = vpop.f32.mrf.mxu0
      %1477 = vmatprep.mubr.bf16.mxu0 0
      %1478 = vmatmul.mubr.bf16.gmra.mxu0 %v1370
      %v1479 = vpop.f32.mrf.mxu0
      %v1480 = vadd.f32 %v1348, %v1479
      %v1481 = vpop.f32.mrf.mxu0
      %v1482 = vpop.f32.mrf.mxu0
      %v1483 = vadd.f32 %v1348, %v1482
      %v1484 = vpop.f32.mrf.mxu0
      %1485 = vmatprep.mubr.bf16.mxu0 0
      %1486 = vmatmul.mubr.bf16.gmra.mxu0 %v1373
      %v1487 = vpop.f32.mrf.mxu0
      %v1488 = vadd.f32 %v1348, %v1487
      %v1489 = vpop.f32.mrf.mxu0
      %v1490 = vpop.f32.mrf.mxu0
      %v1491 = vadd.f32 %v1348, %v1490
      %v1492 = vpop.f32.mrf.mxu0
      %1493 = vmatprep.mubr.bf16.mxu0 0
      %1494 = vmatmul.mubr.bf16.gmra.mxu0 %v1376
      %v1495 = vpop.f32.mrf.mxu0
      %v1496 = vadd.f32 %v1348, %v1495
      %v1497 = vpop.f32.mrf.mxu0
      %v1498 = vpop.f32.mrf.mxu0
      %v1499 = vadd.f32 %v1348, %v1498
      %v1500 = vpop.f32.mrf.mxu0
      %1501 = vmatprep.mubr.bf16.mxu0 0
      %1502 = vmatmul.mubr.bf16.gmra.mxu0 %v1379
      %v1503 = vpop.f32.mrf.mxu0
      %v1504 = vadd.f32 %v1348, %v1503
      %v1505 = vpop.f32.mrf.mxu0
      %v1506 = vpop.f32.mrf.mxu0
      %v1507 = vadd.f32 %v1348, %v1506
      %v1508 = vpop.f32.mrf.mxu0
      %1509 = vmatprep.mubr.bf16.mxu0 0
      %1510 = vmatmul.mubr.bf16.gmra.mxu0 %v1382
      %v1511 = vpop.f32.mrf.mxu0
      %v1512 = vadd.f32 %v1348, %v1511
      %v1513 = vpop.f32.mrf.mxu0
      %v1514 = vpop.f32.mrf.mxu0
      %v1515 = vadd.f32 %v1348, %v1514
      %v1516 = vpop.f32.mrf.mxu0
      %1517 = vmatprep.mubr.bf16.mxu0 0
      %1518 = vmatmul.mubr.bf16.gmra.mxu0 %v1385
      %v1519 = vpop.f32.mrf.mxu0
      %v1520 = vadd.f32 %v1348, %v1519
      %v1521 = vpop.f32.mrf.mxu0
      %v1522 = vpop.f32.mrf.mxu0
      %v1523 = vadd.f32 %v1348, %v1522
      %v1524 = vpop.f32.mrf.mxu0
      %1525 = vmatprep.mubr.bf16.mxu0 0
      %1526 = vmatmul.mubr.bf16.gmra.mxu0 %v1388
      %v1527 = vpop.f32.mrf.mxu0
      %v1528 = vadd.f32 %v1348, %v1527
      %v1529 = vpop.f32.mrf.mxu0
      %v1530 = vpop.f32.mrf.mxu0
      %v1531 = vadd.f32 %v1348, %v1530
      %v1532 = vpop.f32.mrf.mxu0
      %1533 = vmatprep.mubr.bf16.mxu0 0
      %1534 = vmatmul.mubr.bf16.gmra.mxu0 %v1391
      %v1535 = vpop.f32.mrf.mxu0
      %v1536 = vadd.f32 %v1348, %v1535
      %v1537 = vpop.f32.mrf.mxu0
      %v1538 = vpop.f32.mrf.mxu0
      %v1539 = vadd.f32 %v1348, %v1538
      %v1540 = vpop.f32.mrf.mxu0
      %1541 = vdwg.mxu0
      %v1542 = vmax.f32 %v1432, 0.0
      %v1543 = vmax.f32 %v1435, 0.0
      %v1544 = vmax.f32 %v1440, 0.0
      %v1545 = vmax.f32 %v1443, 0.0
      %v1546 = vmax.f32 %v1448, 0.0
      %v1547 = vmax.f32 %v1451, 0.0
      %v1548 = vmax.f32 %v1456, 0.0
      %v1549 = vmax.f32 %v1459, 0.0
      %v1550 = vmax.f32 %v1464, 0.0
      %v1551 = vmax.f32 %v1467, 0.0
      %v1552 = vmax.f32 %v1472, 0.0
      %v1553 = vmax.f32 %v1475, 0.0
      %v1554 = vmax.f32 %v1480, 0.0
      %v1555 = vmax.f32 %v1483, 0.0
      %v1556 = vmax.f32 %v1488, 0.0
      %v1557 = vmax.f32 %v1491, 0.0
      %v1558 = vmax.f32 %v1496, 0.0
      %v1559 = vmax.f32 %v1499, 0.0
      %v1560 = vmax.f32 %v1504, 0.0
      %v1561 = vmax.f32 %v1507, 0.0
      %v1562 = vmax.f32 %v1512, 0.0
      %v1563 = vmax.f32 %v1515, 0.0
      %v1564 = vmax.f32 %v1520, 0.0
      %v1565 = vmax.f32 %v1523, 0.0
      %v1566 = vmax.f32 %v1528, 0.0
      %v1567 = vmax.f32 %v1531, 0.0
      %v1568 = vmax.f32 %v1536, 0.0
      %v1569 = vmax.f32 %v1539, 0.0
      %v1570 = vstv %s1198
      %v1571 = vmul.f32 %v1542, %v1570
      %v1572 = vmul.f32 %v1543, %v1570
      %v1573 = vmul.f32 %v1544, %v1570
      %v1574 = vmul.f32 %v1545, %v1570
      %v1575 = vmul.f32 %v1546, %v1570
      %v1576 = vmul.f32 %v1547, %v1570
      %v1577 = vstv %s1201
      %v1578 = vmul.f32 %v1564, %v1577
      %v1579 = vmul.f32 %v1565, %v1577
      %v1580 = vmul.f32 %v1566, %v1577
      %v1581 = vmul.f32 %v1567, %v1577
      %v1582 = vmul.f32 %v1568, %v1577
      %v1583 = vmul.f32 %v1569, %v1577
      %vm1584 = vcmask 24576
      %1585 = vst.msk [vmem:[#allocation2] sm:$0x1] %vm1584, 0.0
      %1586 = vst.msk [vmem:[#allocation2 + $0x18] sm:$0x1] %vm1584, 0.0
      %1587 = vst.msk [vmem:[#allocation2 + $0x30] sm:$0x1] %vm1584, 0.0
      %1588 = vst.msk [vmem:[#allocation2 + $0x48] sm:$0x1] %vm1584, 0.0
      %1589 = vst.msk [vmem:[#allocation2 + $0x60] sm:$0x1] %vm1584, 0.0
      %1590 = vst.msk [vmem:[#allocation2 + $0x78] sm:$0x1] %vm1584, 0.0
      %1591 = vst.msk [vmem:[#allocation2 + $0x90] sm:$0x1] %vm1584, 0.0
      %1592 = vst.msk [vmem:[#allocation2 + $0xa8] sm:$0x1] %vm1584, 0.0
      %1593 = vst.msk [vmem:[#allocation2 + $0xc0] sm:$0x1] %vm1584, 0.0
      %1594 = vst.msk [vmem:[#allocation2 + $0xd8] sm:$0x1] %vm1584, 0.0
      %1595 = vst.msk [vmem:[#allocation2 + $0xf0] sm:$0x1] %vm1584, 0.0
      %1596 = vst.msk [vmem:[#allocation2 + $0x108] sm:$0x1] %vm1584, 0.0
      %1597 = vst.msk [vmem:[#allocation2 + $0x120] sm:$0x1] %vm1584, 0.0
      %1598 = vst.msk [vmem:[#allocation2 + $0x138] sm:$0x1] %vm1584, 0.0
      %1599 = vst.msk [vmem:[#allocation2 + $0x11] sm:$0x1] %vm1584, 0.0
      %1600 = vst.msk [vmem:[#allocation2 + $0x29] sm:$0x1] %vm1584, 0.0
      %1601 = vst.msk [vmem:[#allocation2 + $0x41] sm:$0x1] %vm1584, 0.0
      %1602 = vst.msk [vmem:[#allocation2 + $0x59] sm:$0x1] %vm1584, 0.0
      %1603 = vst.msk [vmem:[#allocation2 + $0x71] sm:$0x1] %vm1584, 0.0
      %1604 = vst.msk [vmem:[#allocation2 + $0x89] sm:$0x1] %vm1584, 0.0
      %1605 = vst.msk [vmem:[#allocation2 + $0xa1] sm:$0x1] %vm1584, 0.0
      %1606 = vst.msk [vmem:[#allocation2 + $0xb9] sm:$0x1] %vm1584, 0.0
      %1607 = vst.msk [vmem:[#allocation2 + $0xd1] sm:$0x1] %vm1584, 0.0
      %1608 = vst.msk [vmem:[#allocation2 + $0xe9] sm:$0x1] %vm1584, 0.0
      %1609 = vst.msk [vmem:[#allocation2 + $0x101] sm:$0x1] %vm1584, 0.0
      %1610 = vst.msk [vmem:[#allocation2 + $0x119] sm:$0x1] %vm1584, 0.0
      %1611 = vst.msk [vmem:[#allocation2 + $0x131] sm:$0x1] %vm1584, 0.0
      %1612 = vst.msk [vmem:[#allocation2 + $0x149] sm:$0x1] %vm1584, 0.0
      %1613 = vst.msk [vmem:[#allocation2 + $0x1] sm:$0xff] %vm1350, %v1571
      %1614 = vst.msk [vmem:[#allocation2 + $0x9] sm:$0xff] %vm1350, %v1572
      %1615 = vst.msk [vmem:[#allocation2 + $0x19] sm:$0xff] %vm1350, %v1573
      %1616 = vst.msk [vmem:[#allocation2 + $0x21] sm:$0xff] %vm1350, %v1574
      %1617 = vst.msk [vmem:[#allocation2 + $0x31] sm:$0xff] %vm1350, %v1575
      %1618 = vst.msk [vmem:[#allocation2 + $0x39] sm:$0xff] %vm1350, %v1576
      %1619 = vst.msk [vmem:[#allocation2 + $0x49] sm:$0xff] %vm1350, %v1548
      %1620 = vst.msk [vmem:[#allocation2 + $0x51] sm:$0xff] %vm1350, %v1549
      %1621 = vst.msk [vmem:[#allocation2 + $0x61] sm:$0xff] %vm1350, %v1550
      %1622 = vst.msk [vmem:[#allocation2 + $0x69] sm:$0xff] %vm1350, %v1551
      %1623 = vst.msk [vmem:[#allocation2 + $0x79] sm:$0xff] %vm1350, %v1552
      %1624 = vst.msk [vmem:[#allocation2 + $0x81] sm:$0xff] %vm1350, %v1553
      %1625 = vst.msk [vmem:[#allocation2 + $0x91] sm:$0xff] %vm1350, %v1554
      %1626 = vst.msk [vmem:[#allocation2 + $0x99] sm:$0xff] %vm1350, %v1555
      %1627 = vst.msk [vmem:[#allocation2 + $0xa9] sm:$0xff] %vm1350, %v1556
      %1628 = vst.msk [vmem:[#allocation2 + $0xb1] sm:$0xff] %vm1350, %v1557
      %1629 = vst.msk [vmem:[#allocation2 + $0xc1] sm:$0xff] %vm1350, %v1558
      %1630 = vst.msk [vmem:[#allocation2 + $0xc9] sm:$0xff] %vm1350, %v1559
      %1631 = vst.msk [vmem:[#allocation2 + $0xd9] sm:$0xff] %vm1350, %v1560
      %1632 = vst.msk [vmem:[#allocation2 + $0xe1] sm:$0xff] %vm1350, %v1561
      %1633 = vst.msk [vmem:[#allocation2 + $0xf1] sm:$0xff] %vm1350, %v1562
      %1634 = vst.msk [vmem:[#allocation2 + $0xf9] sm:$0xff] %vm1350, %v1563
      %1635 = vst.msk [vmem:[#allocation2 + $0x109] sm:$0xff] %vm1350, %v1578
      %1636 = vst.msk [vmem:[#allocation2 + $0x111] sm:$0xff] %vm1350, %v1579
      %1637 = vst.msk [vmem:[#allocation2 + $0x121] sm:$0xff] %vm1350, %v1580
      %1638 = vst.msk [vmem:[#allocation2 + $0x129] sm:$0xff] %vm1350, %v1581
      %1639 = vst.msk [vmem:[#allocation2 + $0x139] sm:$0xff] %vm1350, %v1582
      %1640 = vst.msk [vmem:[#allocation2 + $0x141] sm:$0xff] %vm1350, %v1583
      %v1641 = vld [vmem:[#allocation2] sm:$0xff]
      %v1642 = vld [vmem:[#allocation2 + $0x8] sm:$0xff]
      %v1643 = vld [vmem:[#allocation2 + $0x18] sm:$0xff]
      %v1644 = vld [vmem:[#allocation2 + $0x20] sm:$0xff]
      %v1645 = vld [vmem:[#allocation2 + $0x30] sm:$0xff]
      %v1646 = vld [vmem:[#allocation2 + $0x38] sm:$0xff]
      %v1647 = vld [vmem:[#allocation2 + $0x48] sm:$0xff]
      %v1648 = vld [vmem:[#allocation2 + $0x50] sm:$0xff]
      %v1649 = vld [vmem:[#allocation2 + $0x60] sm:$0xff]
      %v1650 = vld [vmem:[#allocation2 + $0x68] sm:$0xff]
      %v1651 = vld [vmem:[#allocation2 + $0x78] sm:$0xff]
      %v1652 = vld [vmem:[#allocation2 + $0x80] sm:$0xff]
      %v1653 = vld [vmem:[#allocation2 + $0x90] sm:$0xff]
      %v1654 = vld [vmem:[#allocation2 + $0x98] sm:$0xff]
      %v1655 = vld [vmem:[#allocation2 + $0xa8] sm:$0xff]
      %v1656 = vld [vmem:[#allocation2 + $0xb0] sm:$0xff]
      %v1657 = vld [vmem:[#allocation2 + $0xc0] sm:$0xff]
      %v1658 = vld [vmem:[#allocation2 + $0xc8] sm:$0xff]
      %v1659 = vld [vmem:[#allocation2 + $0xd8] sm:$0xff]
      %v1660 = vld [vmem:[#allocation2 + $0xe0] sm:$0xff]
      %v1661 = vld [vmem:[#allocation2 + $0xf0] sm:$0xff]
      %v1662 = vld [vmem:[#allocation2 + $0xf8] sm:$0xff]
      %v1663 = vld [vmem:[#allocation2 + $0x108] sm:$0xff]
      %v1664 = vld [vmem:[#allocation2 + $0x110] sm:$0xff]
      %v1665 = vld [vmem:[#allocation2 + $0x1] sm:$0xff]
      %v1666 = vld [vmem:[#allocation2 + $0x9] sm:$0xff]
      %v1667 = vld [vmem:[#allocation2 + $0x19] sm:$0xff]
      %v1668 = vld [vmem:[#allocation2 + $0x21] sm:$0xff]
      %v1669 = vld [vmem:[#allocation2 + $0x31] sm:$0xff]
      %v1670 = vld [vmem:[#allocation2 + $0x39] sm:$0xff]
      %v1671 = vld [vmem:[#allocation2 + $0x49] sm:$0xff]
      %v1672 = vld [vmem:[#allocation2 + $0x51] sm:$0xff]
      %v1673 = vld [vmem:[#allocation2 + $0x61] sm:$0xff]
      %v1674 = vld [vmem:[#allocation2 + $0x69] sm:$0xff]
      %v1675 = vld [vmem:[#allocation2 + $0x79] sm:$0xff]
      %v1676 = vld [vmem:[#allocation2 + $0x81] sm:$0xff]
      %v1677 = vld [vmem:[#allocation2 + $0x91] sm:$0xff]
      %v1678 = vld [vmem:[#allocation2 + $0x99] sm:$0xff]
      %v1679 = vld [vmem:[#allocation2 + $0xa9] sm:$0xff]
      %v1680 = vld [vmem:[#allocation2 + $0xb1] sm:$0xff]
      %v1681 = vld [vmem:[#allocation2 + $0xc1] sm:$0xff]
      %v1682 = vld [vmem:[#allocation2 + $0xc9] sm:$0xff]
      %v1683 = vld [vmem:[#allocation2 + $0xd9] sm:$0xff]
      %v1684 = vld [vmem:[#allocation2 + $0xe1] sm:$0xff]
      %v1685 = vld [vmem:[#allocation2 + $0xf1] sm:$0xff]
      %v1686 = vld [vmem:[#allocation2 + $0xf9] sm:$0xff]
      %v1687 = vld [vmem:[#allocation2 + $0x109] sm:$0xff]
      %v1688 = vld [vmem:[#allocation2 + $0x111] sm:$0xff]
      %v1689 = vld [vmem:[#allocation2 + $0x2] sm:$0xff]
      %v1690 = vld [vmem:[#allocation2 + $0xa] sm:$0xff]
      %v1691 = vld [vmem:[#allocation2 + $0x1a] sm:$0xff]
      %v1692 = vld [vmem:[#allocation2 + $0x22] sm:$0xff]
      %v1693 = vld [vmem:[#allocation2 + $0x32] sm:$0xff]
      %v1694 = vld [vmem:[#allocation2 + $0x3a] sm:$0xff]
      %v1695 = vld [vmem:[#allocation2 + $0x4a] sm:$0xff]
      %v1696 = vld [vmem:[#allocation2 + $0x52] sm:$0xff]
      %v1697 = vld [vmem:[#allocation2 + $0x62] sm:$0xff]
      %v1698 = vld [vmem:[#allocation2 + $0x6a] sm:$0xff]
      %v1699 = vld [vmem:[#allocation2 + $0x7a] sm:$0xff]
      %v1700 = vld [vmem:[#allocation2 + $0x82] sm:$0xff]
      %v1701 = vld [vmem:[#allocation2 + $0x92] sm:$0xff]
      %v1702 = vld [vmem:[#allocation2 + $0x9a] sm:$0xff]
      %v1703 = vld [vmem:[#allocation2 + $0xaa] sm:$0xff]
      %v1704 = vld [vmem:[#allocation2 + $0xb2] sm:$0xff]
      %v1705 = vld [vmem:[#allocation2 + $0xc2] sm:$0xff]
      %v1706 = vld [vmem:[#allocation2 + $0xca] sm:$0xff]
      %v1707 = vld [vmem:[#allocation2 + $0xda] sm:$0xff]
      %v1708 = vld [vmem:[#allocation2 + $0xe2] sm:$0xff]
      %v1709 = vld [vmem:[#allocation2 + $0xf2] sm:$0xff]
      %v1710 = vld [vmem:[#allocation2 + $0xfa] sm:$0xff]
      %v1711 = vld [vmem:[#allocation2 + $0x10a] sm:$0xff]
      %v1712 = vld [vmem:[#allocation2 + $0x112] sm:$0xff]
      %s1713 = scalar_lea.vmem [#allocation2], 24
      %v1714 = vld [vmem:[%s1713] sm:$0xff]
      %v1715 = vld [vmem:[%s1713 + $0x8] sm:$0xff]
      %v1716 = vld [vmem:[%s1713 + $0x18] sm:$0xff]
      %v1717 = vld [vmem:[%s1713 + $0x20] sm:$0xff]
      %v1718 = vld [vmem:[%s1713 + $0x30] sm:$0xff]
      %v1719 = vld [vmem:[%s1713 + $0x38] sm:$0xff]
      %v1720 = vld [vmem:[%s1713 + $0x48] sm:$0xff]
      %v1721 = vld [vmem:[%s1713 + $0x50] sm:$0xff]
      %v1722 = vld [vmem:[%s1713 + $0x60] sm:$0xff]
      %v1723 = vld [vmem:[%s1713 + $0x68] sm:$0xff]
      %v1724 = vld [vmem:[%s1713 + $0x78] sm:$0xff]
      %v1725 = vld [vmem:[%s1713 + $0x80] sm:$0xff]
      %v1726 = vld [vmem:[%s1713 + $0x90] sm:$0xff]
      %v1727 = vld [vmem:[%s1713 + $0x98] sm:$0xff]
      %v1728 = vld [vmem:[%s1713 + $0xa8] sm:$0xff]
      %v1729 = vld [vmem:[%s1713 + $0xb0] sm:$0xff]
      %v1730 = vld [vmem:[%s1713 + $0xc0] sm:$0xff]
      %v1731 = vld [vmem:[%s1713 + $0xc8] sm:$0xff]
      %v1732 = vld [vmem:[%s1713 + $0xd8] sm:$0xff]
      %v1733 = vld [vmem:[%s1713 + $0xe0] sm:$0xff]
      %v1734 = vld [vmem:[%s1713 + $0xf0] sm:$0xff]
      %v1735 = vld [vmem:[%s1713 + $0xf8] sm:$0xff]
      %v1736 = vld [vmem:[%s1713 + $0x108] sm:$0xff]
      %v1737 = vld [vmem:[%s1713 + $0x110] sm:$0xff]
      %v1738 = vld [vmem:[%s1713 + $0x1] sm:$0xff]
      %v1739 = vld [vmem:[%s1713 + $0x9] sm:$0xff]
      %v1740 = vld [vmem:[%s1713 + $0x19] sm:$0xff]
      %v1741 = vld [vmem:[%s1713 + $0x21] sm:$0xff]
      %v1742 = vld [vmem:[%s1713 + $0x31] sm:$0xff]
      %v1743 = vld [vmem:[%s1713 + $0x39] sm:$0xff]
      %v1744 = vld [vmem:[%s1713 + $0x49] sm:$0xff]
      %v1745 = vld [vmem:[%s1713 + $0x51] sm:$0xff]
      %v1746 = vld [vmem:[%s1713 + $0x61] sm:$0xff]
      %v1747 = vld [vmem:[%s1713 + $0x69] sm:$0xff]
      %v1748 = vld [vmem:[%s1713 + $0x79] sm:$0xff]
      %v1749 = vld [vmem:[%s1713 + $0x81] sm:$0xff]
      %v1750 = vld [vmem:[%s1713 + $0x91] sm:$0xff]
      %v1751 = vld [vmem:[%s1713 + $0x99] sm:$0xff]
      %v1752 = vld [vmem:[%s1713 + $0xa9] sm:$0xff]
      %v1753 = vld [vmem:[%s1713 + $0xb1] sm:$0xff]
      %v1754 = vld [vmem:[%s1713 + $0xc1] sm:$0xff]
      %v1755 = vld [vmem:[%s1713 + $0xc9] sm:$0xff]
      %v1756 = vld [vmem:[%s1713 + $0xd9] sm:$0xff]
      %v1757 = vld [vmem:[%s1713 + $0xe1] sm:$0xff]
      %v1758 = vld [vmem:[%s1713 + $0xf1] sm:$0xff]
      %v1759 = vld [vmem:[%s1713 + $0xf9] sm:$0xff]
      %v1760 = vld [vmem:[%s1713 + $0x109] sm:$0xff]
      %v1761 = vld [vmem:[%s1713 + $0x111] sm:$0xff]
      %v1762 = vld [vmem:[%s1713 + $0x2] sm:$0xff]
      %v1763 = vld [vmem:[%s1713 + $0xa] sm:$0xff]
      %v1764 = vld [vmem:[%s1713 + $0x1a] sm:$0xff]
      %v1765 = vld [vmem:[%s1713 + $0x22] sm:$0xff]
      %v1766 = vld [vmem:[%s1713 + $0x32] sm:$0xff]
      %v1767 = vld [vmem:[%s1713 + $0x3a] sm:$0xff]
      %v1768 = vld [vmem:[%s1713 + $0x4a] sm:$0xff]
      %v1769 = vld [vmem:[%s1713 + $0x52] sm:$0xff]
      %v1770 = vld [vmem:[%s1713 + $0x62] sm:$0xff]
      %v1771 = vld [vmem:[%s1713 + $0x6a] sm:$0xff]
      %v1772 = vld [vmem:[%s1713 + $0x7a] sm:$0xff]
      %v1773 = vld [vmem:[%s1713 + $0x82] sm:$0xff]
      %v1774 = vld [vmem:[%s1713 + $0x92] sm:$0xff]
      %v1775 = vld [vmem:[%s1713 + $0x9a] sm:$0xff]
      %v1776 = vld [vmem:[%s1713 + $0xaa] sm:$0xff]
      %v1777 = vld [vmem:[%s1713 + $0xb2] sm:$0xff]
      %v1778 = vld [vmem:[%s1713 + $0xc2] sm:$0xff]
      %v1779 = vld [vmem:[%s1713 + $0xca] sm:$0xff]
      %v1780 = vld [vmem:[%s1713 + $0xda] sm:$0xff]
      %v1781 = vld [vmem:[%s1713 + $0xe2] sm:$0xff]
      %v1782 = vld [vmem:[%s1713 + $0xf2] sm:$0xff]
      %v1783 = vld [vmem:[%s1713 + $0xfa] sm:$0xff]
      %v1784 = vld [vmem:[%s1713 + $0x10a] sm:$0xff]
      %v1785 = vld [vmem:[%s1713 + $0x112] sm:$0xff]
      %s1786 = scalar_lea.vmem [#allocation2], 48
      %v1787 = vld [vmem:[%s1786] sm:$0xff]
      %v1788 = vld [vmem:[%s1786 + $0x8] sm:$0xff]
      %v1789 = vld [vmem:[%s1786 + $0x18] sm:$0xff]
      %v1790 = vld [vmem:[%s1786 + $0x20] sm:$0xff]
      %v1791 = vld [vmem:[%s1786 + $0x30] sm:$0xff]
      %v1792 = vld [vmem:[%s1786 + $0x38] sm:$0xff]
      %v1793 = vld [vmem:[%s1786 + $0x48] sm:$0xff]
      %v1794 = vld [vmem:[%s1786 + $0x50] sm:$0xff]
      %v1795 = vld [vmem:[%s1786 + $0x60] sm:$0xff]
      %v1796 = vld [vmem:[%s1786 + $0x68] sm:$0xff]
      %v1797 = vld [vmem:[%s1786 + $0x78] sm:$0xff]
      %v1798 = vld [vmem:[%s1786 + $0x80] sm:$0xff]
      %v1799 = vld [vmem:[%s1786 + $0x90] sm:$0xff]
      %v1800 = vld [vmem:[%s1786 + $0x98] sm:$0xff]
      %v1801 = vld [vmem:[%s1786 + $0xa8] sm:$0xff]
      %v1802 = vld [vmem:[%s1786 + $0xb0] sm:$0xff]
      %v1803 = vld [vmem:[%s1786 + $0xc0] sm:$0xff]
      %v1804 = vld [vmem:[%s1786 + $0xc8] sm:$0xff]
      %v1805 = vld [vmem:[%s1786 + $0xd8] sm:$0xff]
      %v1806 = vld [vmem:[%s1786 + $0xe0] sm:$0xff]
      %v1807 = vld [vmem:[%s1786 + $0xf0] sm:$0xff]
      %v1808 = vld [vmem:[%s1786 + $0xf8] sm:$0xff]
      %v1809 = vld [vmem:[%s1786 + $0x108] sm:$0xff]
      %v1810 = vld [vmem:[%s1786 + $0x110] sm:$0xff]
      %v1811 = vld [vmem:[%s1786 + $0x1] sm:$0xff]
      %v1812 = vld [vmem:[%s1786 + $0x9] sm:$0xff]
      %v1813 = vld [vmem:[%s1786 + $0x19] sm:$0xff]
      %v1814 = vld [vmem:[%s1786 + $0x21] sm:$0xff]
      %v1815 = vld [vmem:[%s1786 + $0x31] sm:$0xff]
      %v1816 = vld [vmem:[%s1786 + $0x39] sm:$0xff]
      %v1817 = vld [vmem:[%s1786 + $0x49] sm:$0xff]
      %v1818 = vld [vmem:[%s1786 + $0x51] sm:$0xff]
      %v1819 = vld [vmem:[%s1786 + $0x61] sm:$0xff]
      %v1820 = vld [vmem:[%s1786 + $0x69] sm:$0xff]
      %v1821 = vld [vmem:[%s1786 + $0x79] sm:$0xff]
      %v1822 = vld [vmem:[%s1786 + $0x81] sm:$0xff]
      %v1823 = vld [vmem:[%s1786 + $0x91] sm:$0xff]
      %v1824 = vld [vmem:[%s1786 + $0x99] sm:$0xff]
      %v1825 = vld [vmem:[%s1786 + $0xa9] sm:$0xff]
      %v1826 = vld [vmem:[%s1786 + $0xb1] sm:$0xff]
      %v1827 = vld [vmem:[%s1786 + $0xc1] sm:$0xff]
      %v1828 = vld [vmem:[%s1786 + $0xc9] sm:$0xff]
      %v1829 = vld [vmem:[%s1786 + $0xd9] sm:$0xff]
      %v1830 = vld [vmem:[%s1786 + $0xe1] sm:$0xff]
      %v1831 = vld [vmem:[%s1786 + $0xf1] sm:$0xff]
      %v1832 = vld [vmem:[%s1786 + $0xf9] sm:$0xff]
      %v1833 = vld [vmem:[%s1786 + $0x109] sm:$0xff]
      %v1834 = vld [vmem:[%s1786 + $0x111] sm:$0xff]
      %v1835 = vld [vmem:[%s1786 + $0x2] sm:$0xff]
      %v1836 = vld [vmem:[%s1786 + $0xa] sm:$0xff]
      %v1837 = vld [vmem:[%s1786 + $0x1a] sm:$0xff]
      %v1838 = vld [vmem:[%s1786 + $0x22] sm:$0xff]
      %v1839 = vld [vmem:[%s1786 + $0x32] sm:$0xff]
      %v1840 = vld [vmem:[%s1786 + $0x3a] sm:$0xff]
      %v1841 = vld [vmem:[%s1786 + $0x4a] sm:$0xff]
      %v1842 = vld [vmem:[%s1786 + $0x52] sm:$0xff]
      %v1843 = vld [vmem:[%s1786 + $0x62] sm:$0xff]
      %v1844 = vld [vmem:[%s1786 + $0x6a] sm:$0xff]
      %v1845 = vld [vmem:[%s1786 + $0x7a] sm:$0xff]
      %v1846 = vld [vmem:[%s1786 + $0x82] sm:$0xff]
      %v1847 = vld [vmem:[%s1786 + $0x92] sm:$0xff]
      %v1848 = vld [vmem:[%s1786 + $0x9a] sm:$0xff]
      %v1849 = vld [vmem:[%s1786 + $0xaa] sm:$0xff]
      %v1850 = vld [vmem:[%s1786 + $0xb2] sm:$0xff]
      %v1851 = vld [vmem:[%s1786 + $0xc2] sm:$0xff]
      %v1852 = vld [vmem:[%s1786 + $0xca] sm:$0xff]
      %v1853 = vld [vmem:[%s1786 + $0xda] sm:$0xff]
      %v1854 = vld [vmem:[%s1786 + $0xe2] sm:$0xff]
      %v1855 = vld [vmem:[%s1786 + $0xf2] sm:$0xff]
      %v1856 = vld [vmem:[%s1786 + $0xfa] sm:$0xff]
      %v1857 = vld [vmem:[%s1786 + $0x10a] sm:$0xff]
      %v1858 = vld [vmem:[%s1786 + $0x112] sm:$0xff]
      %1883 = vrot.lane.b32.xlu0 %v1665, 4
      %v1884 = vpop.permute.xlu0 %1883
      %1885 = vrot.lane.b32.xlu0 %v1666, 4
      %v1886 = vpop.permute.xlu0 %1885
      %1887 = vrot.lane.b32.xlu0 %v1667, 4
      %v1888 = vpop.permute.xlu0 %1887
      %1889 = vrot.lane.b32.xlu0 %v1668, 4
      %v1890 = vpop.permute.xlu0 %1889
      %1891 = vrot.lane.b32.xlu0 %v1669, 4
      %v1892 = vpop.permute.xlu0 %1891
      %1893 = vrot.lane.b32.xlu0 %v1670, 4
      %v1894 = vpop.permute.xlu0 %1893
      %1895 = vrot.lane.b32.xlu0 %v1671, 4
      %v1896 = vpop.permute.xlu0 %1895
      %1897 = vrot.lane.b32.xlu0 %v1672, 4
      %v1898 = vpop.permute.xlu0 %1897
      %1899 = vrot.lane.b32.xlu0 %v1673, 4
      %v1900 = vpop.permute.xlu0 %1899
      %1901 = vrot.lane.b32.xlu0 %v1674, 4
      %v1902 = vpop.permute.xlu0 %1901
      %1903 = vrot.lane.b32.xlu0 %v1675, 4
      %v1904 = vpop.permute.xlu0 %1903
      %1905 = vrot.lane.b32.xlu0 %v1676, 4
      %v1906 = vpop.permute.xlu0 %1905
      %1907 = vrot.lane.b32.xlu0 %v1677, 4
      %v1908 = vpop.permute.xlu0 %1907
      %1909 = vrot.lane.b32.xlu0 %v1678, 4
      %v1910 = vpop.permute.xlu0 %1909
      %1911 = vrot.lane.b32.xlu0 %v1679, 4
      %v1912 = vpop.permute.xlu0 %1911
      %1913 = vrot.lane.b32.xlu0 %v1680, 4
      %v1914 = vpop.permute.xlu0 %1913
      %1915 = vrot.lane.b32.xlu0 %v1681, 4
      %v1916 = vpop.permute.xlu0 %1915
      %1917 = vrot.lane.b32.xlu0 %v1682, 4
      %v1918 = vpop.permute.xlu0 %1917
      %1919 = vrot.lane.b32.xlu0 %v1683, 4
      %v1920 = vpop.permute.xlu0 %1919
      %1921 = vrot.lane.b32.xlu0 %v1684, 4
      %v1922 = vpop.permute.xlu0 %1921
      %1923 = vrot.lane.b32.xlu0 %v1685, 4
      %v1924 = vpop.permute.xlu0 %1923
      %1925 = vrot.lane.b32.xlu0 %v1686, 4
      %v1926 = vpop.permute.xlu0 %1925
      %1927 = vrot.lane.b32.xlu0 %v1687, 4
      %v1928 = vpop.permute.xlu0 %1927
      %1929 = vrot.lane.b32.xlu0 %v1688, 4
      %v1930 = vpop.permute.xlu0 %1929
      %1979 = vrot.lane.b32.xlu0 %v1689, 8
      %v1980 = vpop.permute.xlu0 %1979
      %1981 = vrot.lane.b32.xlu0 %v1690, 8
      %v1982 = vpop.permute.xlu0 %1981
      %1983 = vrot.lane.b32.xlu0 %v1691, 8
      %v1984 = vpop.permute.xlu0 %1983
      %1985 = vrot.lane.b32.xlu0 %v1692, 8
      %v1986 = vpop.permute.xlu0 %1985
      %1987 = vrot.lane.b32.xlu0 %v1693, 8
      %v1988 = vpop.permute.xlu0 %1987
      %1989 = vrot.lane.b32.xlu0 %v1694, 8
      %v1990 = vpop.permute.xlu0 %1989
      %1991 = vrot.lane.b32.xlu0 %v1695, 8
      %v1992 = vpop.permute.xlu0 %1991
      %1993 = vrot.lane.b32.xlu0 %v1696, 8
      %v1994 = vpop.permute.xlu0 %1993
      %1995 = vrot.lane.b32.xlu0 %v1697, 8
      %v1996 = vpop.permute.xlu0 %1995
      %1997 = vrot.lane.b32.xlu0 %v1698, 8
      %v1998 = vpop.permute.xlu0 %1997
      %1999 = vrot.lane.b32.xlu0 %v1699, 8
      %v2000 = vpop.permute.xlu0 %1999
      %2001 = vrot.lane.b32.xlu0 %v1700, 8
      %v2002 = vpop.permute.xlu0 %2001
      %2003 = vrot.lane.b32.xlu0 %v1701, 8
      %v2004 = vpop.permute.xlu0 %2003
      %2005 = vrot.lane.b32.xlu0 %v1702, 8
      %v2006 = vpop.permute.xlu0 %2005
      %2007 = vrot.lane.b32.xlu0 %v1703, 8
      %v2008 = vpop.permute.xlu0 %2007
      %2009 = vrot.lane.b32.xlu0 %v1704, 8
      %v2010 = vpop.permute.xlu0 %2009
      %2011 = vrot.lane.b32.xlu0 %v1705, 8
      %v2012 = vpop.permute.xlu0 %2011
      %2013 = vrot.lane.b32.xlu0 %v1706, 8
      %v2014 = vpop.permute.xlu0 %2013
      %2015 = vrot.lane.b32.xlu0 %v1707, 8
      %v2016 = vpop.permute.xlu0 %2015
      %2017 = vrot.lane.b32.xlu0 %v1708, 8
      %v2018 = vpop.permute.xlu0 %2017
      %2019 = vrot.lane.b32.xlu0 %v1709, 8
      %v2020 = vpop.permute.xlu0 %2019
      %2021 = vrot.lane.b32.xlu0 %v1710, 8
      %v2022 = vpop.permute.xlu0 %2021
      %2023 = vrot.lane.b32.xlu0 %v1711, 8
      %v2024 = vpop.permute.xlu0 %2023
      %2025 = vrot.lane.b32.xlu0 %v1712, 8
      %v2026 = vpop.permute.xlu0 %2025
      %2075 = vrot.lane.b32.xlu0 %v1714, 12
      %v2076 = vpop.permute.xlu0 %2075
      %2077 = vrot.lane.b32.xlu0 %v1715, 12
      %v2078 = vpop.permute.xlu0 %2077
      %2079 = vrot.lane.b32.xlu0 %v1716, 12
      %v2080 = vpop.permute.xlu0 %2079
      %2081 = vrot.lane.b32.xlu0 %v1717, 12
      %v2082 = vpop.permute.xlu0 %2081
      %2083 = vrot.lane.b32.xlu0 %v1718, 12
      %v2084 = vpop.permute.xlu0 %2083
      %2085 = vrot.lane.b32.xlu0 %v1719, 12
      %v2086 = vpop.permute.xlu0 %2085
      %2087 = vrot.lane.b32.xlu0 %v1720, 12
      %v2088 = vpop.permute.xlu0 %2087
      %2089 = vrot.lane.b32.xlu0 %v1721, 12
      %v2090 = vpop.permute.xlu0 %2089
      %2091 = vrot.lane.b32.xlu0 %v1722, 12
      %v2092 = vpop.permute.xlu0 %2091
      %2093 = vrot.lane.b32.xlu0 %v1723, 12
      %v2094 = vpop.permute.xlu0 %2093
      %2095 = vrot.lane.b32.xlu0 %v1724, 12
      %v2096 = vpop.permute.xlu0 %2095
      %2097 = vrot.lane.b32.xlu0 %v1725, 12
      %v2098 = vpop.permute.xlu0 %2097
      %2099 = vrot.lane.b32.xlu0 %v1726, 12
      %v2100 = vpop.permute.xlu0 %2099
      %2101 = vrot.lane.b32.xlu0 %v1727, 12
      %v2102 = vpop.permute.xlu0 %2101
      %2103 = vrot.lane.b32.xlu0 %v1728, 12
      %v2104 = vpop.permute.xlu0 %2103
      %2105 = vrot.lane.b32.xlu0 %v1729, 12
      %v2106 = vpop.permute.xlu0 %2105
      %2107 = vrot.lane.b32.xlu0 %v1730, 12
      %v2108 = vpop.permute.xlu0 %2107
      %2109 = vrot.lane.b32.xlu0 %v1731, 12
      %v2110 = vpop.permute.xlu0 %2109
      %2111 = vrot.lane.b32.xlu0 %v1732, 12
      %v2112 = vpop.permute.xlu0 %2111
      %2113 = vrot.lane.b32.xlu0 %v1733, 12
      %v2114 = vpop.permute.xlu0 %2113
      %2115 = vrot.lane.b32.xlu0 %v1734, 12
      %v2116 = vpop.permute.xlu0 %2115
      %2117 = vrot.lane.b32.xlu0 %v1735, 12
      %v2118 = vpop.permute.xlu0 %2117
      %2119 = vrot.lane.b32.xlu0 %v1736, 12
      %v2120 = vpop.permute.xlu0 %2119
      %2121 = vrot.lane.b32.xlu0 %v1737, 12
      %v2122 = vpop.permute.xlu0 %2121
      %2171 = vrot.lane.b32.xlu0 %v1738, 16
      %v2172 = vpop.permute.xlu0 %2171
      %2173 = vrot.lane.b32.xlu0 %v1739, 16
      %v2174 = vpop.permute.xlu0 %2173
      %2175 = vrot.lane.b32.xlu0 %v1740, 16
      %v2176 = vpop.permute.xlu0 %2175
      %2177 = vrot.lane.b32.xlu0 %v1741, 16
      %v2178 = vpop.permute.xlu0 %2177
      %2179 = vrot.lane.b32.xlu0 %v1742, 16
      %v2180 = vpop.permute.xlu0 %2179
      %2181 = vrot.lane.b32.xlu0 %v1743, 16
      %v2182 = vpop.permute.xlu0 %2181
      %2183 = vrot.lane.b32.xlu0 %v1744, 16
      %v2184 = vpop.permute.xlu0 %2183
      %2185 = vrot.lane.b32.xlu0 %v1745, 16
      %v2186 = vpop.permute.xlu0 %2185
      %2187 = vrot.lane.b32.xlu0 %v1746, 16
      %v2188 = vpop.permute.xlu0 %2187
      %2189 = vrot.lane.b32.xlu0 %v1747, 16
      %v2190 = vpop.permute.xlu0 %2189
      %2191 = vrot.lane.b32.xlu0 %v1748, 16
      %v2192 = vpop.permute.xlu0 %2191
      %2193 = vrot.lane.b32.xlu0 %v1749, 16
      %v2194 = vpop.permute.xlu0 %2193
      %2195 = vrot.lane.b32.xlu0 %v1750, 16
      %v2196 = vpop.permute.xlu0 %2195
      %2197 = vrot.lane.b32.xlu0 %v1751, 16
      %v2198 = vpop.permute.xlu0 %2197
      %2199 = vrot.lane.b32.xlu0 %v1752, 16
      %v2200 = vpop.permute.xlu0 %2199
      %2201 = vrot.lane.b32.xlu0 %v1753, 16
      %v2202 = vpop.permute.xlu0 %2201
      %2203 = vrot.lane.b32.xlu0 %v1754, 16
      %v2204 = vpop.permute.xlu0 %2203
      %2205 = vrot.lane.b32.xlu0 %v1755, 16
      %v2206 = vpop.permute.xlu0 %2205
      %2207 = vrot.lane.b32.xlu0 %v1756, 16
      %v2208 = vpop.permute.xlu0 %2207
      %2209 = vrot.lane.b32.xlu0 %v1757, 16
      %v2210 = vpop.permute.xlu0 %2209
      %2211 = vrot.lane.b32.xlu0 %v1758, 16
      %v2212 = vpop.permute.xlu0 %2211
      %2213 = vrot.lane.b32.xlu0 %v1759, 16
      %v2214 = vpop.permute.xlu0 %2213
      %2215 = vrot.lane.b32.xlu0 %v1760, 16
      %v2216 = vpop.permute.xlu0 %2215
      %2217 = vrot.lane.b32.xlu0 %v1761, 16
      %v2218 = vpop.permute.xlu0 %2217
      %2267 = vrot.lane.b32.xlu0 %v1762, 20
      %v2268 = vpop.permute.xlu0 %2267
      %2269 = vrot.lane.b32.xlu0 %v1763, 20
      %v2270 = vpop.permute.xlu0 %2269
      %2271 = vrot.lane.b32.xlu0 %v1764, 20
      %v2272 = vpop.permute.xlu0 %2271
      %2273 = vrot.lane.b32.xlu0 %v1765, 20
      %v2274 = vpop.permute.xlu0 %2273
      %2275 = vrot.lane.b32.xlu0 %v1766, 20
      %v2276 = vpop.permute.xlu0 %2275
      %2277 = vrot.lane.b32.xlu0 %v1767, 20
      %v2278 = vpop.permute.xlu0 %2277
      %2279 = vrot.lane.b32.xlu0 %v1768, 20
      %v2280 = vpop.permute.xlu0 %2279
      %2281 = vrot.lane.b32.xlu0 %v1769, 20
      %v2282 = vpop.permute.xlu0 %2281
      %2283 = vrot.lane.b32.xlu0 %v1770, 20
      %v2284 = vpop.permute.xlu0 %2283
      %2285 = vrot.lane.b32.xlu0 %v1771, 20
      %v2286 = vpop.permute.xlu0 %2285
      %2287 = vrot.lane.b32.xlu0 %v1772, 20
      %v2288 = vpop.permute.xlu0 %2287
      %2289 = vrot.lane.b32.xlu0 %v1773, 20
      %v2290 = vpop.permute.xlu0 %2289
      %2291 = vrot.lane.b32.xlu0 %v1774, 20
      %v2292 = vpop.permute.xlu0 %2291
      %2293 = vrot.lane.b32.xlu0 %v1775, 20
      %v2294 = vpop.permute.xlu0 %2293
      %2295 = vrot.lane.b32.xlu0 %v1776, 20
      %v2296 = vpop.permute.xlu0 %2295
      %2297 = vrot.lane.b32.xlu0 %v1777, 20
      %v2298 = vpop.permute.xlu0 %2297
      %2299 = vrot.lane.b32.xlu0 %v1778, 20
      %v2300 = vpop.permute.xlu0 %2299
      %2301 = vrot.lane.b32.xlu0 %v1779, 20
      %v2302 = vpop.permute.xlu0 %2301
      %2303 = vrot.lane.b32.xlu0 %v1780, 20
      %v2304 = vpop.permute.xlu0 %2303
      %2305 = vrot.lane.b32.xlu0 %v1781, 20
      %v2306 = vpop.permute.xlu0 %2305
      %2307 = vrot.lane.b32.xlu0 %v1782, 20
      %v2308 = vpop.permute.xlu0 %2307
      %2309 = vrot.lane.b32.xlu0 %v1783, 20
      %v2310 = vpop.permute.xlu0 %2309
      %2311 = vrot.lane.b32.xlu0 %v1784, 20
      %v2312 = vpop.permute.xlu0 %2311
      %2313 = vrot.lane.b32.xlu0 %v1785, 20
      %v2314 = vpop.permute.xlu0 %2313
      %2363 = vrot.lane.b32.xlu0 %v1787, 24
      %v2364 = vpop.permute.xlu0 %2363
      %2365 = vrot.lane.b32.xlu0 %v1788, 24
      %v2366 = vpop.permute.xlu0 %2365
      %2367 = vrot.lane.b32.xlu0 %v1789, 24
      %v2368 = vpop.permute.xlu0 %2367
      %2369 = vrot.lane.b32.xlu0 %v1790, 24
      %v2370 = vpop.permute.xlu0 %2369
      %2371 = vrot.lane.b32.xlu0 %v1791, 24
      %v2372 = vpop.permute.xlu0 %2371
      %2373 = vrot.lane.b32.xlu0 %v1792, 24
      %v2374 = vpop.permute.xlu0 %2373
      %2375 = vrot.lane.b32.xlu0 %v1793, 24
      %v2376 = vpop.permute.xlu0 %2375
      %2377 = vrot.lane.b32.xlu0 %v1794, 24
      %v2378 = vpop.permute.xlu0 %2377
      %2379 = vrot.lane.b32.xlu0 %v1795, 24
      %v2380 = vpop.permute.xlu0 %2379
      %2381 = vrot.lane.b32.xlu0 %v1796, 24
      %v2382 = vpop.permute.xlu0 %2381
      %2383 = vrot.lane.b32.xlu0 %v1797, 24
      %v2384 = vpop.permute.xlu0 %2383
      %2385 = vrot.lane.b32.xlu0 %v1798, 24
      %v2386 = vpop.permute.xlu0 %2385
      %2387 = vrot.lane.b32.xlu0 %v1799, 24
      %v2388 = vpop.permute.xlu0 %2387
      %2389 = vrot.lane.b32.xlu0 %v1800, 24
      %v2390 = vpop.permute.xlu0 %2389
      %2391 = vrot.lane.b32.xlu0 %v1801, 24
      %v2392 = vpop.permute.xlu0 %2391
      %2393 = vrot.lane.b32.xlu0 %v1802, 24
      %v2394 = vpop.permute.xlu0 %2393
      %2395 = vrot.lane.b32.xlu0 %v1803, 24
      %v2396 = vpop.permute.xlu0 %2395
      %2397 = vrot.lane.b32.xlu0 %v1804, 24
      %v2398 = vpop.permute.xlu0 %2397
      %2399 = vrot.lane.b32.xlu0 %v1805, 24
      %v2400 = vpop.permute.xlu0 %2399
      %2401 = vrot.lane.b32.xlu0 %v1806, 24
      %v2402 = vpop.permute.xlu0 %2401
      %2403 = vrot.lane.b32.xlu0 %v1807, 24
      %v2404 = vpop.permute.xlu0 %2403
      %2405 = vrot.lane.b32.xlu0 %v1808, 24
      %v2406 = vpop.permute.xlu0 %2405
      %2407 = vrot.lane.b32.xlu0 %v1809, 24
      %v2408 = vpop.permute.xlu0 %2407
      %2409 = vrot.lane.b32.xlu0 %v1810, 24
      %v2410 = vpop.permute.xlu0 %2409
      %2459 = vrot.lane.b32.xlu0 %v1811, 28
      %v2460 = vpop.permute.xlu0 %2459
      %2461 = vrot.lane.b32.xlu0 %v1812, 28
      %v2462 = vpop.permute.xlu0 %2461
      %2463 = vrot.lane.b32.xlu0 %v1813, 28
      %v2464 = vpop.permute.xlu0 %2463
      %2465 = vrot.lane.b32.xlu0 %v1814, 28
      %v2466 = vpop.permute.xlu0 %2465
      %2467 = vrot.lane.b32.xlu0 %v1815, 28
      %v2468 = vpop.permute.xlu0 %2467
      %2469 = vrot.lane.b32.xlu0 %v1816, 28
      %v2470 = vpop.permute.xlu0 %2469
      %2471 = vrot.lane.b32.xlu0 %v1817, 28
      %v2472 = vpop.permute.xlu0 %2471
      %2473 = vrot.lane.b32.xlu0 %v1818, 28
      %v2474 = vpop.permute.xlu0 %2473
      %2475 = vrot.lane.b32.xlu0 %v1819, 28
      %v2476 = vpop.permute.xlu0 %2475
      %2477 = vrot.lane.b32.xlu0 %v1820, 28
      %v2478 = vpop.permute.xlu0 %2477
      %2479 = vrot.lane.b32.xlu0 %v1821, 28
      %v2480 = vpop.permute.xlu0 %2479
      %2481 = vrot.lane.b32.xlu0 %v1822, 28
      %v2482 = vpop.permute.xlu0 %2481
      %2483 = vrot.lane.b32.xlu0 %v1823, 28
      %v2484 = vpop.permute.xlu0 %2483
      %2485 = vrot.lane.b32.xlu0 %v1824, 28
      %v2486 = vpop.permute.xlu0 %2485
      %2487 = vrot.lane.b32.xlu0 %v1825, 28
      %v2488 = vpop.permute.xlu0 %2487
      %2489 = vrot.lane.b32.xlu0 %v1826, 28
      %v2490 = vpop.permute.xlu0 %2489
      %2491 = vrot.lane.b32.xlu0 %v1827, 28
      %v2492 = vpop.permute.xlu0 %2491
      %2493 = vrot.lane.b32.xlu0 %v1828, 28
      %v2494 = vpop.permute.xlu0 %2493
      %2495 = vrot.lane.b32.xlu0 %v1829, 28
      %v2496 = vpop.permute.xlu0 %2495
      %2497 = vrot.lane.b32.xlu0 %v1830, 28
      %v2498 = vpop.permute.xlu0 %2497
      %2499 = vrot.lane.b32.xlu0 %v1831, 28
      %v2500 = vpop.permute.xlu0 %2499
      %2501 = vrot.lane.b32.xlu0 %v1832, 28
      %v2502 = vpop.permute.xlu0 %2501
      %2503 = vrot.lane.b32.xlu0 %v1833, 28
      %v2504 = vpop.permute.xlu0 %2503
      %2505 = vrot.lane.b32.xlu0 %v1834, 28
      %v2506 = vpop.permute.xlu0 %2505
      %2555 = vrot.lane.b32.xlu0 %v1835, 32
      %v2556 = vpop.permute.xlu0 %2555
      %2557 = vrot.lane.b32.xlu0 %v1836, 32
      %v2558 = vpop.permute.xlu0 %2557
      %2559 = vrot.lane.b32.xlu0 %v1837, 32
      %v2560 = vpop.permute.xlu0 %2559
      %2561 = vrot.lane.b32.xlu0 %v1838, 32
      %v2562 = vpop.permute.xlu0 %2561
      %2563 = vrot.lane.b32.xlu0 %v1839, 32
      %v2564 = vpop.permute.xlu0 %2563
      %2565 = vrot.lane.b32.xlu0 %v1840, 32
      %v2566 = vpop.permute.xlu0 %2565
      %2567 = vrot.lane.b32.xlu0 %v1841, 32
      %v2568 = vpop.permute.xlu0 %2567
      %2569 = vrot.lane.b32.xlu0 %v1842, 32
      %v2570 = vpop.permute.xlu0 %2569
      %2571 = vrot.lane.b32.xlu0 %v1843, 32
      %v2572 = vpop.permute.xlu0 %2571
      %2573 = vrot.lane.b32.xlu0 %v1844, 32
      %v2574 = vpop.permute.xlu0 %2573
      %2575 = vrot.lane.b32.xlu0 %v1845, 32
      %v2576 = vpop.permute.xlu0 %2575
      %2577 = vrot.lane.b32.xlu0 %v1846, 32
      %v2578 = vpop.permute.xlu0 %2577
      %2579 = vrot.lane.b32.xlu0 %v1847, 32
      %v2580 = vpop.permute.xlu0 %2579
      %2581 = vrot.lane.b32.xlu0 %v1848, 32
      %v2582 = vpop.permute.xlu0 %2581
      %2583 = vrot.lane.b32.xlu0 %v1849, 32
      %v2584 = vpop.permute.xlu0 %2583
      %2585 = vrot.lane.b32.xlu0 %v1850, 32
      %v2586 = vpop.permute.xlu0 %2585
      %2587 = vrot.lane.b32.xlu0 %v1851, 32
      %v2588 = vpop.permute.xlu0 %2587
      %2589 = vrot.lane.b32.xlu0 %v1852, 32
      %v2590 = vpop.permute.xlu0 %2589
      %2591 = vrot.lane.b32.xlu0 %v1853, 32
      %v2592 = vpop.permute.xlu0 %2591
      %2593 = vrot.lane.b32.xlu0 %v1854, 32
      %v2594 = vpop.permute.xlu0 %2593
      %2595 = vrot.lane.b32.xlu0 %v1855, 32
      %v2596 = vpop.permute.xlu0 %2595
      %2597 = vrot.lane.b32.xlu0 %v1856, 32
      %v2598 = vpop.permute.xlu0 %2597
      %2599 = vrot.lane.b32.xlu0 %v1857, 32
      %v2600 = vpop.permute.xlu0 %2599
      %2601 = vrot.lane.b32.xlu0 %v1858, 32
      %v2602 = vpop.permute.xlu0 %2601
      %v2627 = vsel %vm1350, %v1641, %v1884
      %v2628 = vsel %vm1350, %v1642, %v1886
      %v2629 = vsel %vm1350, %v1643, %v1888
      %v2630 = vsel %vm1350, %v1644, %v1890
      %v2631 = vsel %vm1350, %v1645, %v1892
      %v2632 = vsel %vm1350, %v1646, %v1894
      %v2633 = vsel %vm1350, %v1647, %v1896
      %v2634 = vsel %vm1350, %v1648, %v1898
      %v2635 = vsel %vm1350, %v1649, %v1900
      %v2636 = vsel %vm1350, %v1650, %v1902
      %v2637 = vsel %vm1350, %v1651, %v1904
      %v2638 = vsel %vm1350, %v1652, %v1906
      %v2639 = vsel %vm1350, %v1653, %v1908
      %v2640 = vsel %vm1350, %v1654, %v1910
      %v2641 = vsel %vm1350, %v1655, %v1912
      %v2642 = vsel %vm1350, %v1656, %v1914
      %v2643 = vsel %vm1350, %v1657, %v1916
      %v2644 = vsel %vm1350, %v1658, %v1918
      %v2645 = vsel %vm1350, %v1659, %v1920
      %v2646 = vsel %vm1350, %v1660, %v1922
      %v2647 = vsel %vm1350, %v1661, %v1924
      %v2648 = vsel %vm1350, %v1662, %v1926
      %v2649 = vsel %vm1350, %v1663, %v1928
      %v2650 = vsel %vm1350, %v1664, %v1930
      %vm2651 = vcmask 64512
      %v2652 = vsel %vm2651, %v2627, %v1980
      %v2653 = vsel %vm2651, %v2628, %v1982
      %v2654 = vsel %vm2651, %v2629, %v1984
      %v2655 = vsel %vm2651, %v2630, %v1986
      %v2656 = vsel %vm2651, %v2631, %v1988
      %v2657 = vsel %vm2651, %v2632, %v1990
      %v2658 = vsel %vm2651, %v2633, %v1992
      %v2659 = vsel %vm2651, %v2634, %v1994
      %v2660 = vsel %vm2651, %v2635, %v1996
      %v2661 = vsel %vm2651, %v2636, %v1998
      %v2662 = vsel %vm2651, %v2637, %v2000
      %v2663 = vsel %vm2651, %v2638, %v2002
      %v2664 = vsel %vm2651, %v2639, %v2004
      %v2665 = vsel %vm2651, %v2640, %v2006
      %v2666 = vsel %vm2651, %v2641, %v2008
      %v2667 = vsel %vm2651, %v2642, %v2010
      %v2668 = vsel %vm2651, %v2643, %v2012
      %v2669 = vsel %vm2651, %v2644, %v2014
      %v2670 = vsel %vm2651, %v2645, %v2016
      %v2671 = vsel %vm2651, %v2646, %v2018
      %v2672 = vsel %vm2651, %v2647, %v2020
      %v2673 = vsel %vm2651, %v2648, %v2022
      %v2674 = vsel %vm2651, %v2649, %v2024
      %v2675 = vsel %vm2651, %v2650, %v2026
      %vm2676 = vcmask 97280
      %v2677 = vsel %vm2676, %v2652, %v2076
      %v2678 = vsel %vm2676, %v2653, %v2078
      %v2679 = vsel %vm2676, %v2654, %v2080
      %v2680 = vsel %vm2676, %v2655, %v2082
      %v2681 = vsel %vm2676, %v2656, %v2084
      %v2682 = vsel %vm2676, %v2657, %v2086
      %v2683 = vsel %vm2676, %v2658, %v2088
      %v2684 = vsel %vm2676, %v2659, %v2090
      %v2685 = vsel %vm2676, %v2660, %v2092
      %v2686 = vsel %vm2676, %v2661, %v2094
      %v2687 = vsel %vm2676, %v2662, %v2096
      %v2688 = vsel %vm2676, %v2663, %v2098
      %v2689 = vsel %vm2676, %v2664, %v2100
      %v2690 = vsel %vm2676, %v2665, %v2102
      %v2691 = vsel %vm2676, %v2666, %v2104
      %v2692 = vsel %vm2676, %v2667, %v2106
      %v2693 = vsel %vm2676, %v2668, %v2108
      %v2694 = vsel %vm2676, %v2669, %v2110
      %v2695 = vsel %vm2676, %v2670, %v2112
      %v2696 = vsel %vm2676, %v2671, %v2114
      %v2697 = vsel %vm2676, %v2672, %v2116
      %v2698 = vsel %vm2676, %v2673, %v2118
      %v2699 = vsel %vm2676, %v2674, %v2120
      %v2700 = vsel %vm2676, %v2675, %v2122
      %vm2701 = vcmask 130048
      %v2702 = vsel %vm2701, %v2677, %v2172
      %v2703 = vsel %vm2701, %v2678, %v2174
      %v2704 = vsel %vm2701, %v2679, %v2176
      %v2705 = vsel %vm2701, %v2680, %v2178
      %v2706 = vsel %vm2701, %v2681, %v2180
      %v2707 = vsel %vm2701, %v2682, %v2182
      %v2708 = vsel %vm2701, %v2683, %v2184
      %v2709 = vsel %vm2701, %v2684, %v2186
      %v2710 = vsel %vm2701, %v2685, %v2188
      %v2711 = vsel %vm2701, %v2686, %v2190
      %v2712 = vsel %vm2701, %v2687, %v2192
      %v2713 = vsel %vm2701, %v2688, %v2194
      %v2714 = vsel %vm2701, %v2689, %v2196
      %v2715 = vsel %vm2701, %v2690, %v2198
      %v2716 = vsel %vm2701, %v2691, %v2200
      %v2717 = vsel %vm2701, %v2692, %v2202
      %v2718 = vsel %vm2701, %v2693, %v2204
      %v2719 = vsel %vm2701, %v2694, %v2206
      %v2720 = vsel %vm2701, %v2695, %v2208
      %v2721 = vsel %vm2701, %v2696, %v2210
      %v2722 = vsel %vm2701, %v2697, %v2212
      %v2723 = vsel %vm2701, %v2698, %v2214
      %v2724 = vsel %vm2701, %v2699, %v2216
      %v2725 = vsel %vm2701, %v2700, %v2218
      %vm2726 = vcmask 162816
      %v2727 = vsel %vm2726, %v2702, %v2268
      %v2728 = vsel %vm2726, %v2703, %v2270
      %v2729 = vsel %vm2726, %v2704, %v2272
      %v2730 = vsel %vm2726, %v2705, %v2274
      %v2731 = vsel %vm2726, %v2706, %v2276
      %v2732 = vsel %vm2726, %v2707, %v2278
      %v2733 = vsel %vm2726, %v2708, %v2280
      %v2734 = vsel %vm2726, %v2709, %v2282
      %v2735 = vsel %vm2726, %v2710, %v2284
      %v2736 = vsel %vm2726, %v2711, %v2286
      %v2737 = vsel %vm2726, %v2712, %v2288
      %v2738 = vsel %vm2726, %v2713, %v2290
      %v2739 = vsel %vm2726, %v2714, %v2292
      %v2740 = vsel %vm2726, %v2715, %v2294
      %v2741 = vsel %vm2726, %v2716, %v2296
      %v2742 = vsel %vm2726, %v2717, %v2298
      %v2743 = vsel %vm2726, %v2718, %v2300
      %v2744 = vsel %vm2726, %v2719, %v2302
      %v2745 = vsel %vm2726, %v2720, %v2304
      %v2746 = vsel %vm2726, %v2721, %v2306
      %v2747 = vsel %vm2726, %v2722, %v2308
      %v2748 = vsel %vm2726, %v2723, %v2310
      %v2749 = vsel %vm2726, %v2724, %v2312
      %v2750 = vsel %vm2726, %v2725, %v2314
      %vm2751 = vcmask 195584
      %v2752 = vsel %vm2751, %v2727, %v2364
      %v2753 = vsel %vm2751, %v2728, %v2366
      %v2754 = vsel %vm2751, %v2729, %v2368
      %v2755 = vsel %vm2751, %v2730, %v2370
      %v2756 = vsel %vm2751, %v2731, %v2372
      %v2757 = vsel %vm2751, %v2732, %v2374
      %v2758 = vsel %vm2751, %v2733, %v2376
      %v2759 = vsel %vm2751, %v2734, %v2378
      %v2760 = vsel %vm2751, %v2735, %v2380
      %v2761 = vsel %vm2751, %v2736, %v2382
      %v2762 = vsel %vm2751, %v2737, %v2384
      %v2763 = vsel %vm2751, %v2738, %v2386
      %v2764 = vsel %vm2751, %v2739, %v2388
      %v2765 = vsel %vm2751, %v2740, %v2390
      %v2766 = vsel %vm2751, %v2741, %v2392
      %v2767 = vsel %vm2751, %v2742, %v2394
      %v2768 = vsel %vm2751, %v2743, %v2396
      %v2769 = vsel %vm2751, %v2744, %v2398
      %v2770 = vsel %vm2751, %v2745, %v2400
      %v2771 = vsel %vm2751, %v2746, %v2402
      %v2772 = vsel %vm2751, %v2747, %v2404
      %v2773 = vsel %vm2751, %v2748, %v2406
      %v2774 = vsel %vm2751, %v2749, %v2408
      %v2775 = vsel %vm2751, %v2750, %v2410
      %vm2776 = vcmask 228352
      %v2777 = vsel %vm2776, %v2752, %v2460
      %v2778 = vsel %vm2776, %v2753, %v2462
      %v2779 = vsel %vm2776, %v2754, %v2464
      %v2780 = vsel %vm2776, %v2755, %v2466
      %v2781 = vsel %vm2776, %v2756, %v2468
      %v2782 = vsel %vm2776, %v2757, %v2470
      %v2783 = vsel %vm2776, %v2758, %v2472
      %v2784 = vsel %vm2776, %v2759, %v2474
      %v2785 = vsel %vm2776, %v2760, %v2476
      %v2786 = vsel %vm2776, %v2761, %v2478
      %v2787 = vsel %vm2776, %v2762, %v2480
      %v2788 = vsel %vm2776, %v2763, %v2482
      %v2789 = vsel %vm2776, %v2764, %v2484
      %v2790 = vsel %vm2776, %v2765, %v2486
      %v2791 = vsel %vm2776, %v2766, %v2488
      %v2792 = vsel %vm2776, %v2767, %v2490
      %v2793 = vsel %vm2776, %v2768, %v2492
      %v2794 = vsel %vm2776, %v2769, %v2494
      %v2795 = vsel %vm2776, %v2770, %v2496
      %v2796 = vsel %vm2776, %v2771, %v2498
      %v2797 = vsel %vm2776, %v2772, %v2500
      %v2798 = vsel %vm2776, %v2773, %v2502
      %v2799 = vsel %vm2776, %v2774, %v2504
      %v2800 = vsel %vm2776, %v2775, %v2506
      %vm2801 = vcmask 261120
      %v2802 = vsel %vm2801, %v2777, %v2556
      %v2803 = vsel %vm2801, %v2778, %v2558
      %v2804 = vsel %vm2801, %v2779, %v2560
      %v2805 = vsel %vm2801, %v2780, %v2562
      %v2806 = vsel %vm2801, %v2781, %v2564
      %v2807 = vsel %vm2801, %v2782, %v2566
      %v2808 = vsel %vm2801, %v2783, %v2568
      %v2809 = vsel %vm2801, %v2784, %v2570
      %v2810 = vsel %vm2801, %v2785, %v2572
      %v2811 = vsel %vm2801, %v2786, %v2574
      %v2812 = vsel %vm2801, %v2787, %v2576
      %v2813 = vsel %vm2801, %v2788, %v2578
      %v2814 = vsel %vm2801, %v2789, %v2580
      %v2815 = vsel %vm2801, %v2790, %v2582
      %v2816 = vsel %vm2801, %v2791, %v2584
      %v2817 = vsel %vm2801, %v2792, %v2586
      %v2818 = vsel %vm2801, %v2793, %v2588
      %v2819 = vsel %vm2801, %v2794, %v2590
      %v2820 = vsel %vm2801, %v2795, %v2592
      %v2821 = vsel %vm2801, %v2796, %v2594
      %v2822 = vsel %vm2801, %v2797, %v2596
      %v2823 = vsel %vm2801, %v2798, %v2598
      %v2824 = vsel %vm2801, %v2799, %v2600
      %v2825 = vsel %vm2801, %v2800, %v2602
      %v2826 = vpack.c.bf16 %v2803, %v2802
      %v2827 = vpack.c.bf16 %v2805, %v2804
      %v2828 = vpack.c.bf16 %v2807, %v2806
      %v2829 = vpack.c.bf16 %v2809, %v2808
      %v2830 = vpack.c.bf16 %v2811, %v2810
      %v2831 = vpack.c.bf16 %v2813, %v2812
      %v2832 = vpack.c.bf16 %v2815, %v2814
      %v2833 = vpack.c.bf16 %v2817, %v2816
      %v2834 = vpack.c.bf16 %v2819, %v2818
      %v2835 = vpack.c.bf16 %v2821, %v2820
      %v2836 = vpack.c.bf16 %v2823, %v2822
      %v2837 = vpack.c.bf16 %v2825, %v2824
      %v2838 = vld [vmem:[%s11] sm:$0xf]
      %v2839 = vld [vmem:[%s11 + $0x4] sm:$0xf]
      %v2840 = vld [vmem:[%s11 + $0x8] sm:$0xf]
      %v2841 = vld [vmem:[%s11 + $0xc] sm:$0xf]
      %v2842 = vld [vmem:[%s11 + $0x10] sm:$0x3]
      %v2843 = vld [vmem:[%s12] sm:$0x1]
      %v2845 = vlaneseq
      %v2846 = vshrl.u32 %v2845, 7
      %v2847 = vsub.s32 0, %v2846
      %v2848 = vrot.slane %v2843, %v2847
      %v2855 = vunpack.c.l.b16 %v2838
      %v2856 = vunpack.c.l.b16 %v2839
      %v2857 = vunpack.c.l.b16 %v2840
      %v2858 = vunpack.c.l.b16 %v2841
      %v2859 = vunpack.c.l.b16 %v2842
      %v2860 = vpack.c.b16 %v2856, %v2855
      %v2861 = vpack.c.b16 %v2858, %v2857
      %v2862 = vpack.c.b16 %v2859, %v2859
      %vm2865 = vcmask 293888
      %v2867 = vsel %vm2865, %v2826, 0
      %v2870 = vsel %vm2865, %v2827, 0
      %v2873 = vsel %vm2865, %v2828, 0
      %v2876 = vsel %vm2865, %v2829, 0
      %v2879 = vsel %vm2865, %v2830, 0
      %v2882 = vsel %vm2865, %v2831, 0
      %v2885 = vsel %vm2865, %v2832, 0
      %v2888 = vsel %vm2865, %v2833, 0
      %v2891 = vsel %vm2865, %v2834, 0
      %v2894 = vsel %vm2865, %v2835, 0
      %v2897 = vsel %vm2865, %v2836, 0
      %v2900 = vsel %vm2865, %v2837, 0
      %v2903 = vsel %vm1393, %v2862, 0
      %2905 = vmatprep.subr.bf16.mxu0 0
      %2906 = vmatpush1.bf16.msra.mxu0 0
      %2907 = vmatprep.subr.bf16.mxu0 0
      %2908 = vmatpush1.bf16.msra.mxu0 0
      %2909 = vmatprep.subr.bf16.mxu0 0
      %2910 = vmatpush1.bf16.msra.mxu0 0
      %2911 = vmatprep.subr.bf16.mxu0 0
      %2912 = vmatpush1.bf16.msra.mxu0 0
      %2913 = vmatprep.subr.bf16.mxu0 0
      %2914 = vmatpush1.bf16.msra.mxu0 0
      %2915 = vmatprep.subr.bf16.mxu0 0
      %2916 = vmatpush1.bf16.msra.mxu0 %v2903
      %2917 = vmatprep.subr.bf16.mxu0 0
      %2918 = vmatpush1.bf16.msra.mxu0 %v2861
      %2919 = vmatprep.subr.bf16.mxu0 0
      %2920 = vmatpush1.bf16.msra.mxu0 %v2860
      %2921 = vmatprep.subr.bf16.mxu0 0
      %2922 = vmatpush2.bf16.msra.mxu0 0
      %2923 = vmatprep.subr.bf16.mxu0 0
      %2924 = vmatpush2.bf16.msra.mxu0 0
      %2925 = vmatprep.subr.bf16.mxu0 0
      %2926 = vmatpush2.bf16.msra.mxu0 0
      %2927 = vmatprep.subr.bf16.mxu0 0
      %2928 = vmatpush2.bf16.msra.mxu0 0
      %2929 = vmatprep.subr.bf16.mxu0 0
      %2930 = vmatpush2.bf16.msra.mxu0 0
      %2931 = vmatprep.subr.bf16.mxu0 0
      %2932 = vmatpush2.bf16.msra.mxu0 0
      %2933 = vmatprep.subr.bf16.mxu0 0
      %2934 = vmatpush2.bf16.msra.mxu0 0
      %2935 = vmatprep.subr.bf16.mxu0 0
      %2936 = vmatpush2.bf16.msra.mxu0 0
      %2937 = vmatprep.mubr.bf16.mxu0 0
      %2938 = vmatmul.mubr.bf16.gmra.mxu0 %v2867
      %v2939 = vpop.f32.mrf.mxu0
      %v2940 = vadd.f32 %v2848, %v2939
      %v2941 = vpop.f32.mrf.mxu0
      %v2942 = vpop.f32.mrf.mxu0
      %v2943 = vadd.f32 %v2848, %v2942
      %v2944 = vpop.f32.mrf.mxu0
      %2945 = vmatprep.mubr.bf16.mxu0 0
      %2946 = vmatmul.mubr.bf16.gmra.mxu0 %v2870
      %v2947 = vpop.f32.mrf.mxu0
      %v2948 = vadd.f32 %v2848, %v2947
      %v2949 = vpop.f32.mrf.mxu0
      %v2950 = vpop.f32.mrf.mxu0
      %v2951 = vadd.f32 %v2848, %v2950
      %v2952 = vpop.f32.mrf.mxu0
      %2953 = vmatprep.mubr.bf16.mxu0 0
      %2954 = vmatmul.mubr.bf16.gmra.mxu0 %v2873
      %v2955 = vpop.f32.mrf.mxu0
      %v2956 = vadd.f32 %v2848, %v2955
      %v2957 = vpop.f32.mrf.mxu0
      %v2958 = vpop.f32.mrf.mxu0
      %v2959 = vadd.f32 %v2848, %v2958
      %v2960 = vpop.f32.mrf.mxu0
      %2961 = vmatprep.mubr.bf16.mxu0 0
      %2962 = vmatmul.mubr.bf16.gmra.mxu0 %v2876
      %v2963 = vpop.f32.mrf.mxu0
      %v2964 = vadd.f32 %v2848, %v2963
      %v2965 = vpop.f32.mrf.mxu0
      %v2966 = vpop.f32.mrf.mxu0
      %v2967 = vadd.f32 %v2848, %v2966
      %v2968 = vpop.f32.mrf.mxu0
      %2969 = vmatprep.mubr.bf16.mxu0 0
      %2970 = vmatmul.mubr.bf16.gmra.mxu0 %v2879
      %v2971 = vpop.f32.mrf.mxu0
      %v2972 = vadd.f32 %v2848, %v2971
      %v2973 = vpop.f32.mrf.mxu0
      %v2974 = vpop.f32.mrf.mxu0
      %v2975 = vadd.f32 %v2848, %v2974
      %v2976 = vpop.f32.mrf.mxu0
      %2977 = vmatprep.mubr.bf16.mxu0 0
      %2978 = vmatmul.mubr.bf16.gmra.mxu0 %v2882
      %v2979 = vpop.f32.mrf.mxu0
      %v2980 = vadd.f32 %v2848, %v2979
      %v2981 = vpop.f32.mrf.mxu0
      %v2982 = vpop.f32.mrf.mxu0
      %v2983 = vadd.f32 %v2848, %v2982
      %v2984 = vpop.f32.mrf.mxu0
      %2985 = vmatprep.mubr.bf16.mxu0 0
      %2986 = vmatmul.mubr.bf16.gmra.mxu0 %v2885
      %v2987 = vpop.f32.mrf.mxu0
      %v2988 = vadd.f32 %v2848, %v2987
      %v2989 = vpop.f32.mrf.mxu0
      %v2990 = vpop.f32.mrf.mxu0
      %v2991 = vadd.f32 %v2848, %v2990
      %v2992 = vpop.f32.mrf.mxu0
      %2993 = vmatprep.mubr.bf16.mxu0 0
      %2994 = vmatmul.mubr.bf16.gmra.mxu0 %v2888
      %v2995 = vpop.f32.mrf.mxu0
      %v2996 = vadd.f32 %v2848, %v2995
      %v2997 = vpop.f32.mrf.mxu0
      %v2998 = vpop.f32.mrf.mxu0
      %v2999 = vadd.f32 %v2848, %v2998
      %v3000 = vpop.f32.mrf.mxu0
      %3001 = vmatprep.mubr.bf16.mxu0 0
      %3002 = vmatmul.mubr.bf16.gmra.mxu0 %v2891
      %v3003 = vpop.f32.mrf.mxu0
      %v3004 = vadd.f32 %v2848, %v3003
      %v3005 = vpop.f32.mrf.mxu0
      %v3006 = vpop.f32.mrf.mxu0
      %v3007 = vadd.f32 %v2848, %v3006
      %v3008 = vpop.f32.mrf.mxu0
      %3009 = vmatprep.mubr.bf16.mxu0 0
      %3010 = vmatmul.mubr.bf16.gmra.mxu0 %v2894
      %v3011 = vpop.f32.mrf.mxu0
      %v3012 = vadd.f32 %v2848, %v3011
      %v3013 = vpop.f32.mrf.mxu0
      %v3014 = vpop.f32.mrf.mxu0
      %v3015 = vadd.f32 %v2848, %v3014
      %v3016 = vpop.f32.mrf.mxu0
      %3017 = vmatprep.mubr.bf16.mxu0 0
      %3018 = vmatmul.mubr.bf16.gmra.mxu0 %v2897
      %v3019 = vpop.f32.mrf.mxu0
      %v3020 = vadd.f32 %v2848, %v3019
      %v3021 = vpop.f32.mrf.mxu0
      %v3022 = vpop.f32.mrf.mxu0
      %v3023 = vadd.f32 %v2848, %v3022
      %v3024 = vpop.f32.mrf.mxu0
      %3025 = vmatprep.mubr.bf16.mxu0 0
      %3026 = vmatmul.mubr.bf16.gmra.mxu0 %v2900
      %v3027 = vpop.f32.mrf.mxu0
      %v3028 = vadd.f32 %v2848, %v3027
      %v3029 = vpop.f32.mrf.mxu0
      %v3030 = vpop.f32.mrf.mxu0
      %v3031 = vadd.f32 %v2848, %v3030
      %v3032 = vpop.f32.mrf.mxu0
      %3033 = vdwg.mxu0
      %3058 = vrot.lane.b32.xlu0 %v2940, 4
      %v3059 = vpop.permute.xlu0 %3058
      %3060 = vrot.lane.b32.xlu0 %v2943, 4
      %v3061 = vpop.permute.xlu0 %3060
      %3062 = vrot.lane.b32.xlu0 %v2948, 4
      %v3063 = vpop.permute.xlu0 %3062
      %3064 = vrot.lane.b32.xlu0 %v2951, 4
      %v3065 = vpop.permute.xlu0 %3064
      %3066 = vrot.lane.b32.xlu0 %v2956, 4
      %v3067 = vpop.permute.xlu0 %3066
      %3068 = vrot.lane.b32.xlu0 %v2959, 4
      %v3069 = vpop.permute.xlu0 %3068
      %3070 = vrot.lane.b32.xlu0 %v2964, 4
      %v3071 = vpop.permute.xlu0 %3070
      %3072 = vrot.lane.b32.xlu0 %v2967, 4
      %v3073 = vpop.permute.xlu0 %3072
      %3074 = vrot.lane.b32.xlu0 %v2972, 4
      %v3075 = vpop.permute.xlu0 %3074
      %3076 = vrot.lane.b32.xlu0 %v2975, 4
      %v3077 = vpop.permute.xlu0 %3076
      %3078 = vrot.lane.b32.xlu0 %v2980, 4
      %v3079 = vpop.permute.xlu0 %3078
      %3080 = vrot.lane.b32.xlu0 %v2983, 4
      %v3081 = vpop.permute.xlu0 %3080
      %3082 = vrot.lane.b32.xlu0 %v2988, 4
      %v3083 = vpop.permute.xlu0 %3082
      %3084 = vrot.lane.b32.xlu0 %v2991, 4
      %v3085 = vpop.permute.xlu0 %3084
      %3086 = vrot.lane.b32.xlu0 %v2996, 4
      %v3087 = vpop.permute.xlu0 %3086
      %3088 = vrot.lane.b32.xlu0 %v2999, 4
      %v3089 = vpop.permute.xlu0 %3088
      %3090 = vrot.lane.b32.xlu0 %v3004, 4
      %v3091 = vpop.permute.xlu0 %3090
      %3092 = vrot.lane.b32.xlu0 %v3007, 4
      %v3093 = vpop.permute.xlu0 %3092
      %3094 = vrot.lane.b32.xlu0 %v3012, 4
      %v3095 = vpop.permute.xlu0 %3094
      %3096 = vrot.lane.b32.xlu0 %v3015, 4
      %v3097 = vpop.permute.xlu0 %3096
      %3098 = vrot.lane.b32.xlu0 %v3020, 4
      %v3099 = vpop.permute.xlu0 %3098
      %3100 = vrot.lane.b32.xlu0 %v3023, 4
      %v3101 = vpop.permute.xlu0 %3100
      %3102 = vrot.lane.b32.xlu0 %v3028, 4
      %v3103 = vpop.permute.xlu0 %3102
      %3104 = vrot.lane.b32.xlu0 %v3031, 4
      %v3105 = vpop.permute.xlu0 %3104
      %v3130 = vsel %vm1350, %v1204, %v3059
      %v3131 = vsel %vm1350, %v1205, %v3061
      %v3132 = vsel %vm1350, %v1206, %v3063
      %v3133 = vsel %vm1350, %v1207, %v3065
      %v3134 = vsel %vm1350, %v1208, %v3067
      %v3135 = vsel %vm1350, %v1209, %v3069
      %v3136 = vsel %vm1350, %v1210, %v3071
      %v3137 = vsel %vm1350, %v1211, %v3073
      %v3138 = vsel %vm1350, %v1212, %v3075
      %v3139 = vsel %vm1350, %v1213, %v3077
      %v3140 = vsel %vm1350, %v1214, %v3079
      %v3141 = vsel %vm1350, %v1215, %v3081
      %v3142 = vsel %vm1350, %v1216, %v3083
      %v3143 = vsel %vm1350, %v1217, %v3085
      %v3144 = vsel %vm1350, %v1218, %v3087
      %v3145 = vsel %vm1350, %v1219, %v3089
      %v3146 = vsel %vm1350, %v1220, %v3091
      %v3147 = vsel %vm1350, %v1221, %v3093
      %v3148 = vsel %vm1350, %v1222, %v3095
      %v3149 = vsel %vm1350, %v1223, %v3097
      %v3150 = vsel %vm1350, %v1224, %v3099
      %v3151 = vsel %vm1350, %v1225, %v3101
      %v3152 = vsel %vm1350, %v1226, %v3103
      %v3153 = vsel %vm1350, %v1227, %v3105
      %v3154 = vld [vmem:[%s13] sm:$0x1]
      %v3156 = vlaneseq
      %v3157 = vshrl.u32 %v3156, 7
      %v3158 = vsub.s32 0, %v3157
      %v3159 = vrot.slane %v3154, %v3158
      %v3161 = vmul.f32 %v3130, %v3159
      %v3162 = vmul.f32 %v3131, %v3159
      %v3163 = vmul.f32 %v3132, %v3159
      %v3164 = vmul.f32 %v3133, %v3159
      %v3165 = vmul.f32 %v3134, %v3159
      %v3166 = vmul.f32 %v3135, %v3159
      %v3167 = vmul.f32 %v3136, %v3159
      %v3168 = vmul.f32 %v3137, %v3159
      %v3169 = vmul.f32 %v3138, %v3159
      %v3170 = vmul.f32 %v3139, %v3159
      %v3171 = vmul.f32 %v3140, %v3159
      %v3172 = vmul.f32 %v3141, %v3159
      %v3173 = vmul.f32 %v3142, %v3159
      %v3174 = vmul.f32 %v3143, %v3159
      %v3175 = vmul.f32 %v3144, %v3159
      %v3176 = vmul.f32 %v3145, %v3159
      %v3177 = vmul.f32 %v3146, %v3159
      %v3178 = vmul.f32 %v3147, %v3159
      %v3179 = vmul.f32 %v3148, %v3159
      %v3180 = vmul.f32 %v3149, %v3159
      %v3181 = vmul.f32 %v3150, %v3159
      %v3182 = vmul.f32 %v3151, %v3159
      %v3183 = vmul.f32 %v3152, %v3159
      %v3184 = vmul.f32 %v3153, %v3159
      %v3185 = vld [vmem:[%s14] sm:$0x1]
      %v3187 = vlaneseq
      %v3188 = vshrl.u32 %v3187, 7
      %v3189 = vsub.s32 0, %v3188
      %v3190 = vrot.slane %v3185, %v3189
      %v3192 = vadd.f32 %v3161, %v3190
      %v3193 = vadd.f32 %v3162, %v3190
      %v3194 = vadd.f32 %v3163, %v3190
      %v3195 = vadd.f32 %v3164, %v3190
      %v3196 = vadd.f32 %v3165, %v3190
      %v3197 = vadd.f32 %v3166, %v3190
      %v3198 = vadd.f32 %v3167, %v3190
      %v3199 = vadd.f32 %v3168, %v3190
      %v3200 = vadd.f32 %v3169, %v3190
      %v3201 = vadd.f32 %v3170, %v3190
      %v3202 = vadd.f32 %v3171, %v3190
      %v3203 = vadd.f32 %v3172, %v3190
      %v3204 = vadd.f32 %v3173, %v3190
      %v3205 = vadd.f32 %v3174, %v3190
      %v3206 = vadd.f32 %v3175, %v3190
      %v3207 = vadd.f32 %v3176, %v3190
      %v3208 = vadd.f32 %v3177, %v3190
      %v3209 = vadd.f32 %v3178, %v3190
      %v3210 = vadd.f32 %v3179, %v3190
      %v3211 = vadd.f32 %v3180, %v3190
      %v3212 = vadd.f32 %v3181, %v3190
      %v3213 = vadd.f32 %v3182, %v3190
      %v3214 = vadd.f32 %v3183, %v3190
      %v3215 = vadd.f32 %v3184, %v3190
      %v3216 = vmax.f32 %v3192, 0.0
      %v3217 = vmax.f32 %v3193, 0.0
      %v3218 = vmax.f32 %v3194, 0.0
      %v3219 = vmax.f32 %v3195, 0.0
      %v3220 = vmax.f32 %v3196, 0.0
      %v3221 = vmax.f32 %v3197, 0.0
      %v3222 = vmax.f32 %v3198, 0.0
      %v3223 = vmax.f32 %v3199, 0.0
      %v3224 = vmax.f32 %v3200, 0.0
      %v3225 = vmax.f32 %v3201, 0.0
      %v3226 = vmax.f32 %v3202, 0.0
      %v3227 = vmax.f32 %v3203, 0.0
      %v3228 = vmax.f32 %v3204, 0.0
      %v3229 = vmax.f32 %v3205, 0.0
      %v3230 = vmax.f32 %v3206, 0.0
      %v3231 = vmax.f32 %v3207, 0.0
      %v3232 = vmax.f32 %v3208, 0.0
      %v3233 = vmax.f32 %v3209, 0.0
      %v3234 = vmax.f32 %v3210, 0.0
      %v3235 = vmax.f32 %v3211, 0.0
      %v3236 = vmax.f32 %v3212, 0.0
      %v3237 = vmax.f32 %v3213, 0.0
      %v3238 = vmax.f32 %v3214, 0.0
      %v3239 = vmax.f32 %v3215, 0.0
      %v3240 = vpack.c.bf16 %v3217, %v3216
      %v3241 = vpack.c.bf16 %v3219, %v3218
      %v3242 = vpack.c.bf16 %v3221, %v3220
      %v3243 = vpack.c.bf16 %v3223, %v3222
      %v3244 = vpack.c.bf16 %v3225, %v3224
      %v3245 = vpack.c.bf16 %v3227, %v3226
      %v3246 = vpack.c.bf16 %v3229, %v3228
      %v3247 = vpack.c.bf16 %v3231, %v3230
      %v3248 = vpack.c.bf16 %v3233, %v3232
      %v3249 = vpack.c.bf16 %v3235, %v3234
      %v3250 = vpack.c.bf16 %v3237, %v3236
      %v3251 = vpack.c.bf16 %v3239, %v3238
      %v3252 = vld [vmem:[%s15] sm:$0xf]
      %v3253 = vld [vmem:[%s16] sm:$0x1]
      %v3255 = vlaneseq
      %v3256 = vshrl.u32 %v3255, 7
      %v3257 = vsub.s32 0, %v3256
      %v3258 = vrot.slane %v3253, %v3257
      %v3261 = vsel %vm2651, %v3240, 0
      %v3264 = vsel %vm2651, %v3241, 0
      %v3267 = vsel %vm2651, %v3242, 0
      %v3270 = vsel %vm2651, %v3243, 0
      %v3273 = vsel %vm2651, %v3244, 0
      %v3276 = vsel %vm2651, %v3245, 0
      %v3279 = vsel %vm2651, %v3246, 0
      %v3282 = vsel %vm2651, %v3247, 0
      %v3285 = vsel %vm2651, %v3248, 0
      %v3288 = vsel %vm2651, %v3249, 0
      %v3291 = vsel %vm2651, %v3250, 0
      %v3294 = vsel %vm2651, %v3251, 0
      %vm3296 = vcmask 1043456
      %v3298 = vsel %vm3296, %v3252, 0
      %3300 = vmatprep.subr.bf16.mxu0 0
      %3301 = vmatpush1.bf16.msra.mxu0 0
      %3302 = vmatprep.subr.bf16.mxu0 0
      %3303 = vmatpush1.bf16.msra.mxu0 0
      %3304 = vmatprep.subr.bf16.mxu0 0
      %3305 = vmatpush1.bf16.msra.mxu0 0
      %3306 = vmatprep.subr.bf16.mxu0 0
      %3307 = vmatpush1.bf16.msra.mxu0 0
      %3308 = vmatprep.subr.bf16.mxu0 0
      %3309 = vmatpush1.bf16.msra.mxu0 0
      %3310 = vmatprep.subr.bf16.mxu0 0
      %3311 = vmatpush1.bf16.msra.mxu0 0
      %3312 = vmatprep.subr.bf16.mxu0 0
      %3313 = vmatpush1.bf16.msra.mxu0 0
      %3314 = vmatprep.subr.bf16.mxu0 0
      %3315 = vmatpush1.bf16.msra.mxu0 %v3298
      %3316 = vmatprep.subr.bf16.mxu0 0
      %3317 = vmatpush2.bf16.msra.mxu0 0
      %3318 = vmatprep.subr.bf16.mxu0 0
      %3319 = vmatpush2.bf16.msra.mxu0 0
      %3320 = vmatprep.subr.bf16.mxu0 0
      %3321 = vmatpush2.bf16.msra.mxu0 0
      %3322 = vmatprep.subr.bf16.mxu0 0
      %3323 = vmatpush2.bf16.msra.mxu0 0
      %3324 = vmatprep.subr.bf16.mxu0 0
      %3325 = vmatpush2.bf16.msra.mxu0 0
      %3326 = vmatprep.subr.bf16.mxu0 0
      %3327 = vmatpush2.bf16.msra.mxu0 0
      %3328 = vmatprep.subr.bf16.mxu0 0
      %3329 = vmatpush2.bf16.msra.mxu0 0
      %3330 = vmatprep.subr.bf16.mxu0 0
      %3331 = vmatpush2.bf16.msra.mxu0 0
      %3332 = vmatprep.mubr.bf16.mxu0 0
      %3333 = vmatmul.mubr.bf16.gmra.mxu0 %v3261
      %v3334 = vpop.f32.mrf.mxu0
      %v3335 = vadd.f32 %v3258, %v3334
      %v3336 = vpop.f32.mrf.mxu0
      %v3337 = vpop.f32.mrf.mxu0
      %v3338 = vadd.f32 %v3258, %v3337
      %v3339 = vpop.f32.mrf.mxu0
      %3340 = vmatprep.mubr.bf16.mxu0 0
      %3341 = vmatmul.mubr.bf16.gmra.mxu0 %v3264
      %v3342 = vpop.f32.mrf.mxu0
      %v3343 = vadd.f32 %v3258, %v3342
      %v3344 = vpop.f32.mrf.mxu0
      %v3345 = vpop.f32.mrf.mxu0
      %v3346 = vadd.f32 %v3258, %v3345
      %v3347 = vpop.f32.mrf.mxu0
      %3348 = vmatprep.mubr.bf16.mxu0 0
      %3349 = vmatmul.mubr.bf16.gmra.mxu0 %v3267
      %v3350 = vpop.f32.mrf.mxu0
      %v3351 = vadd.f32 %v3258, %v3350
      %v3352 = vpop.f32.mrf.mxu0
      %v3353 = vpop.f32.mrf.mxu0
      %v3354 = vadd.f32 %v3258, %v3353
      %v3355 = vpop.f32.mrf.mxu0
      %3356 = vmatprep.mubr.bf16.mxu0 0
      %3357 = vmatmul.mubr.bf16.gmra.mxu0 %v3270
      %v3358 = vpop.f32.mrf.mxu0
      %v3359 = vadd.f32 %v3258, %v3358
      %v3360 = vpop.f32.mrf.mxu0
      %v3361 = vpop.f32.mrf.mxu0
      %v3362 = vadd.f32 %v3258, %v3361
      %v3363 = vpop.f32.mrf.mxu0
      %3364 = vmatprep.mubr.bf16.mxu0 0
      %3365 = vmatmul.mubr.bf16.gmra.mxu0 %v3273
      %v3366 = vpop.f32.mrf.mxu0
      %v3367 = vadd.f32 %v3258, %v3366
      %v3368 = vpop.f32.mrf.mxu0
      %v3369 = vpop.f32.mrf.mxu0
      %v3370 = vadd.f32 %v3258, %v3369
      %v3371 = vpop.f32.mrf.mxu0
      %3372 = vmatprep.mubr.bf16.mxu0 0
      %3373 = vmatmul.mubr.bf16.gmra.mxu0 %v3276
      %v3374 = vpop.f32.mrf.mxu0
      %v3375 = vadd.f32 %v3258, %v3374
      %v3376 = vpop.f32.mrf.mxu0
      %v3377 = vpop.f32.mrf.mxu0
      %v3378 = vadd.f32 %v3258, %v3377
      %v3379 = vpop.f32.mrf.mxu0
      %3380 = vmatprep.mubr.bf16.mxu0 0
      %3381 = vmatmul.mubr.bf16.gmra.mxu0 %v3279
      %v3382 = vpop.f32.mrf.mxu0
      %v3383 = vadd.f32 %v3258, %v3382
      %v3384 = vpop.f32.mrf.mxu0
      %v3385 = vpop.f32.mrf.mxu0
      %v3386 = vadd.f32 %v3258, %v3385
      %v3387 = vpop.f32.mrf.mxu0
      %3388 = vmatprep.mubr.bf16.mxu0 0
      %3389 = vmatmul.mubr.bf16.gmra.mxu0 %v3282
      %v3390 = vpop.f32.mrf.mxu0
      %v3391 = vadd.f32 %v3258, %v3390
      %v3392 = vpop.f32.mrf.mxu0
      %v3393 = vpop.f32.mrf.mxu0
      %v3394 = vadd.f32 %v3258, %v3393
      %v3395 = vpop.f32.mrf.mxu0
      %3396 = vmatprep.mubr.bf16.mxu0 0
      %3397 = vmatmul.mubr.bf16.gmra.mxu0 %v3285
      %v3398 = vpop.f32.mrf.mxu0
      %v3399 = vadd.f32 %v3258, %v3398
      %v3400 = vpop.f32.mrf.mxu0
      %v3401 = vpop.f32.mrf.mxu0
      %v3402 = vadd.f32 %v3258, %v3401
      %v3403 = vpop.f32.mrf.mxu0
      %3404 = vmatprep.mubr.bf16.mxu0 0
      %3405 = vmatmul.mubr.bf16.gmra.mxu0 %v3288
      %v3406 = vpop.f32.mrf.mxu0
      %v3407 = vadd.f32 %v3258, %v3406
      %v3408 = vpop.f32.mrf.mxu0
      %v3409 = vpop.f32.mrf.mxu0
      %v3410 = vadd.f32 %v3258, %v3409
      %v3411 = vpop.f32.mrf.mxu0
      %3412 = vmatprep.mubr.bf16.mxu0 0
      %3413 = vmatmul.mubr.bf16.gmra.mxu0 %v3291
      %v3414 = vpop.f32.mrf.mxu0
      %v3415 = vadd.f32 %v3258, %v3414
      %v3416 = vpop.f32.mrf.mxu0
      %v3417 = vpop.f32.mrf.mxu0
      %v3418 = vadd.f32 %v3258, %v3417
      %v3419 = vpop.f32.mrf.mxu0
      %3420 = vmatprep.mubr.bf16.mxu0 0
      %3421 = vmatmul.mubr.bf16.gmra.mxu0 %v3294
      %v3422 = vpop.f32.mrf.mxu0
      %v3423 = vadd.f32 %v3258, %v3422
      %v3424 = vpop.f32.mrf.mxu0
      %v3425 = vpop.f32.mrf.mxu0
      %v3426 = vadd.f32 %v3258, %v3425
      %v3427 = vpop.f32.mrf.mxu0
      %3428 = vdwg.mxu0
      %v3429 = vmax.f32 %v3335, 0.0
      %v3430 = vmax.f32 %v3338, 0.0
      %v3431 = vmax.f32 %v3343, 0.0
      %v3432 = vmax.f32 %v3346, 0.0
      %v3433 = vmax.f32 %v3351, 0.0
      %v3434 = vmax.f32 %v3354, 0.0
      %v3435 = vmax.f32 %v3359, 0.0
      %v3436 = vmax.f32 %v3362, 0.0
      %v3437 = vmax.f32 %v3367, 0.0
      %v3438 = vmax.f32 %v3370, 0.0
      %v3439 = vmax.f32 %v3375, 0.0
      %v3440 = vmax.f32 %v3378, 0.0
      %v3441 = vmax.f32 %v3383, 0.0
      %v3442 = vmax.f32 %v3386, 0.0
      %v3443 = vmax.f32 %v3391, 0.0
      %v3444 = vmax.f32 %v3394, 0.0
      %v3445 = vmax.f32 %v3399, 0.0
      %v3446 = vmax.f32 %v3402, 0.0
      %v3447 = vmax.f32 %v3407, 0.0
      %v3448 = vmax.f32 %v3410, 0.0
      %v3449 = vmax.f32 %v3415, 0.0
      %v3450 = vmax.f32 %v3418, 0.0
      %v3451 = vmax.f32 %v3423, 0.0
      %v3452 = vmax.f32 %v3426, 0.0
      %v3453 = vmul.f32 %v3429, %v1570
      %v3454 = vmul.f32 %v3430, %v1570
      %v3455 = vmul.f32 %v3431, %v1570
      %v3456 = vmul.f32 %v3432, %v1570
      %v3457 = vmul.f32 %v3449, %v1577
      %v3458 = vmul.f32 %v3450, %v1577
      %v3459 = vmul.f32 %v3451, %v1577
      %v3460 = vmul.f32 %v3452, %v1577
      %3461 = vst.msk [vmem:[#allocation2] sm:$0x1] %vm1584, 0.0
      %3462 = vst.msk [vmem:[#allocation2 + $0x18] sm:$0x1] %vm1584, 0.0
      %3463 = vst.msk [vmem:[#allocation2 + $0x30] sm:$0x1] %vm1584, 0.0
      %3464 = vst.msk [vmem:[#allocation2 + $0x48] sm:$0x1] %vm1584, 0.0
      %3465 = vst.msk [vmem:[#allocation2 + $0x60] sm:$0x1] %vm1584, 0.0
      %3466 = vst.msk [vmem:[#allocation2 + $0x78] sm:$0x1] %vm1584, 0.0
      %3467 = vst.msk [vmem:[#allocation2 + $0x90] sm:$0x1] %vm1584, 0.0
      %3468 = vst.msk [vmem:[#allocation2 + $0xa8] sm:$0x1] %vm1584, 0.0
      %3469 = vst.msk [vmem:[#allocation2 + $0xc0] sm:$0x1] %vm1584, 0.0
      %3470 = vst.msk [vmem:[#allocation2 + $0xd8] sm:$0x1] %vm1584, 0.0
      %3471 = vst.msk [vmem:[#allocation2 + $0xf0] sm:$0x1] %vm1584, 0.0
      %3472 = vst.msk [vmem:[#allocation2 + $0x108] sm:$0x1] %vm1584, 0.0
      %3473 = vst.msk [vmem:[#allocation2 + $0x11] sm:$0x1] %vm1584, 0.0
      %3474 = vst.msk [vmem:[#allocation2 + $0x29] sm:$0x1] %vm1584, 0.0
      %3475 = vst.msk [vmem:[#allocation2 + $0x41] sm:$0x1] %vm1584, 0.0
      %3476 = vst.msk [vmem:[#allocation2 + $0x59] sm:$0x1] %vm1584, 0.0
      %3477 = vst.msk [vmem:[#allocation2 + $0x71] sm:$0x1] %vm1584, 0.0
      %3478 = vst.msk [vmem:[#allocation2 + $0x89] sm:$0x1] %vm1584, 0.0
      %3479 = vst.msk [vmem:[#allocation2 + $0xa1] sm:$0x1] %vm1584, 0.0
      %3480 = vst.msk [vmem:[#allocation2 + $0xb9] sm:$0x1] %vm1584, 0.0
      %3481 = vst.msk [vmem:[#allocation2 + $0xd1] sm:$0x1] %vm1584, 0.0
      %3482 = vst.msk [vmem:[#allocation2 + $0xe9] sm:$0x1] %vm1584, 0.0
      %3483 = vst.msk [vmem:[#allocation2 + $0x101] sm:$0x1] %vm1584, 0.0
      %3484 = vst.msk [vmem:[#allocation2 + $0x119] sm:$0x1] %vm1584, 0.0
      %3485 = vst.msk [vmem:[#allocation2 + $0x1] sm:$0xff] %vm1350, %v3453
      %3486 = vst.msk [vmem:[#allocation2 + $0x9] sm:$0xff] %vm1350, %v3454
      %3487 = vst.msk [vmem:[#allocation2 + $0x19] sm:$0xff] %vm1350, %v3455
      %3488 = vst.msk [vmem:[#allocation2 + $0x21] sm:$0xff] %vm1350, %v3456
      %3489 = vst.msk [vmem:[#allocation2 + $0x31] sm:$0xff] %vm1350, %v3433
      %3490 = vst.msk [vmem:[#allocation2 + $0x39] sm:$0xff] %vm1350, %v3434
      %3491 = vst.msk [vmem:[#allocation2 + $0x49] sm:$0xff] %vm1350, %v3435
      %3492 = vst.msk [vmem:[#allocation2 + $0x51] sm:$0xff] %vm1350, %v3436
      %3493 = vst.msk [vmem:[#allocation2 + $0x61] sm:$0xff] %vm1350, %v3437
      %3494 = vst.msk [vmem:[#allocation2 + $0x69] sm:$0xff] %vm1350, %v3438
      %3495 = vst.msk [vmem:[#allocation2 + $0x79] sm:$0xff] %vm1350, %v3439
      %3496 = vst.msk [vmem:[#allocation2 + $0x81] sm:$0xff] %vm1350, %v3440
      %3497 = vst.msk [vmem:[#allocation2 + $0x91] sm:$0xff] %vm1350, %v3441
      %3498 = vst.msk [vmem:[#allocation2 + $0x99] sm:$0xff] %vm1350, %v3442
      %3499 = vst.msk [vmem:[#allocation2 + $0xa9] sm:$0xff] %vm1350, %v3443
      %3500 = vst.msk [vmem:[#allocation2 + $0xb1] sm:$0xff] %vm1350, %v3444
      %3501 = vst.msk [vmem:[#allocation2 + $0xc1] sm:$0xff] %vm1350, %v3445
      %3502 = vst.msk [vmem:[#allocation2 + $0xc9] sm:$0xff] %vm1350, %v3446
      %3503 = vst.msk [vmem:[#allocation2 + $0xd9] sm:$0xff] %vm1350, %v3447
      %3504 = vst.msk [vmem:[#allocation2 + $0xe1] sm:$0xff] %vm1350, %v3448
      %3505 = vst.msk [vmem:[#allocation2 + $0xf1] sm:$0xff] %vm1350, %v3457
      %3506 = vst.msk [vmem:[#allocation2 + $0xf9] sm:$0xff] %vm1350, %v3458
      %3507 = vst.msk [vmem:[#allocation2 + $0x109] sm:$0xff] %vm1350, %v3459
      %3508 = vst.msk [vmem:[#allocation2 + $0x111] sm:$0xff] %vm1350, %v3460
      %v3509 = vld [vmem:[#allocation2] sm:$0xff]
      %v3510 = vld [vmem:[#allocation2 + $0x8] sm:$0xff]
      %v3511 = vld [vmem:[#allocation2 + $0x18] sm:$0xff]
      %v3512 = vld [vmem:[#allocation2 + $0x20] sm:$0xff]
      %v3513 = vld [vmem:[#allocation2 + $0x30] sm:$0xff]
      %v3514 = vld [vmem:[#allocation2 + $0x38] sm:$0xff]
      %v3515 = vld [vmem:[#allocation2 + $0x48] sm:$0xff]
      %v3516 = vld [vmem:[#allocation2 + $0x50] sm:$0xff]
      %v3517 = vld [vmem:[#allocation2 + $0x60] sm:$0xff]
      %v3518 = vld [vmem:[#allocation2 + $0x68] sm:$0xff]
      %v3519 = vld [vmem:[#allocation2 + $0x78] sm:$0xff]
      %v3520 = vld [vmem:[#allocation2 + $0x80] sm:$0xff]
      %v3521 = vld [vmem:[#allocation2 + $0x90] sm:$0xff]
      %v3522 = vld [vmem:[#allocation2 + $0x98] sm:$0xff]
      %v3523 = vld [vmem:[#allocation2 + $0xa8] sm:$0xff]
      %v3524 = vld [vmem:[#allocation2 + $0xb0] sm:$0xff]
      %v3525 = vld [vmem:[#allocation2 + $0xc0] sm:$0xff]
      %v3526 = vld [vmem:[#allocation2 + $0xc8] sm:$0xff]
      %v3527 = vld [vmem:[#allocation2 + $0xd8] sm:$0xff]
      %v3528 = vld [vmem:[#allocation2 + $0xe0] sm:$0xff]
      %v3529 = vld [vmem:[#allocation2 + $0x1] sm:$0xff]
      %v3530 = vld [vmem:[#allocation2 + $0x9] sm:$0xff]
      %v3531 = vld [vmem:[#allocation2 + $0x19] sm:$0xff]
      %v3532 = vld [vmem:[#allocation2 + $0x21] sm:$0xff]
      %v3533 = vld [vmem:[#allocation2 + $0x31] sm:$0xff]
      %v3534 = vld [vmem:[#allocation2 + $0x39] sm:$0xff]
      %v3535 = vld [vmem:[#allocation2 + $0x49] sm:$0xff]
      %v3536 = vld [vmem:[#allocation2 + $0x51] sm:$0xff]
      %v3537 = vld [vmem:[#allocation2 + $0x61] sm:$0xff]
      %v3538 = vld [vmem:[#allocation2 + $0x69] sm:$0xff]
      %v3539 = vld [vmem:[#allocation2 + $0x79] sm:$0xff]
      %v3540 = vld [vmem:[#allocation2 + $0x81] sm:$0xff]
      %v3541 = vld [vmem:[#allocation2 + $0x91] sm:$0xff]
      %v3542 = vld [vmem:[#allocation2 + $0x99] sm:$0xff]
      %v3543 = vld [vmem:[#allocation2 + $0xa9] sm:$0xff]
      %v3544 = vld [vmem:[#allocation2 + $0xb1] sm:$0xff]
      %v3545 = vld [vmem:[#allocation2 + $0xc1] sm:$0xff]
      %v3546 = vld [vmem:[#allocation2 + $0xc9] sm:$0xff]
      %v3547 = vld [vmem:[#allocation2 + $0xd9] sm:$0xff]
      %v3548 = vld [vmem:[#allocation2 + $0xe1] sm:$0xff]
      %v3549 = vld [vmem:[#allocation2 + $0x2] sm:$0xff]
      %v3550 = vld [vmem:[#allocation2 + $0xa] sm:$0xff]
      %v3551 = vld [vmem:[#allocation2 + $0x1a] sm:$0xff]
      %v3552 = vld [vmem:[#allocation2 + $0x22] sm:$0xff]
      %v3553 = vld [vmem:[#allocation2 + $0x32] sm:$0xff]
      %v3554 = vld [vmem:[#allocation2 + $0x3a] sm:$0xff]
      %v3555 = vld [vmem:[#allocation2 + $0x4a] sm:$0xff]
      %v3556 = vld [vmem:[#allocation2 + $0x52] sm:$0xff]
      %v3557 = vld [vmem:[#allocation2 + $0x62] sm:$0xff]
      %v3558 = vld [vmem:[#allocation2 + $0x6a] sm:$0xff]
      %v3559 = vld [vmem:[#allocation2 + $0x7a] sm:$0xff]
      %v3560 = vld [vmem:[#allocation2 + $0x82] sm:$0xff]
      %v3561 = vld [vmem:[#allocation2 + $0x92] sm:$0xff]
      %v3562 = vld [vmem:[#allocation2 + $0x9a] sm:$0xff]
      %v3563 = vld [vmem:[#allocation2 + $0xaa] sm:$0xff]
      %v3564 = vld [vmem:[#allocation2 + $0xb2] sm:$0xff]
      %v3565 = vld [vmem:[#allocation2 + $0xc2] sm:$0xff]
      %v3566 = vld [vmem:[#allocation2 + $0xca] sm:$0xff]
      %v3567 = vld [vmem:[#allocation2 + $0xda] sm:$0xff]
      %v3568 = vld [vmem:[#allocation2 + $0xe2] sm:$0xff]
      %v3569 = vld [vmem:[%s1713] sm:$0xff]
      %v3570 = vld [vmem:[%s1713 + $0x8] sm:$0xff]
      %v3571 = vld [vmem:[%s1713 + $0x18] sm:$0xff]
      %v3572 = vld [vmem:[%s1713 + $0x20] sm:$0xff]
      %v3573 = vld [vmem:[%s1713 + $0x30] sm:$0xff]
      %v3574 = vld [vmem:[%s1713 + $0x38] sm:$0xff]
      %v3575 = vld [vmem:[%s1713 + $0x48] sm:$0xff]
      %v3576 = vld [vmem:[%s1713 + $0x50] sm:$0xff]
      %v3577 = vld [vmem:[%s1713 + $0x60] sm:$0xff]
      %v3578 = vld [vmem:[%s1713 + $0x68] sm:$0xff]
      %v3579 = vld [vmem:[%s1713 + $0x78] sm:$0xff]
      %v3580 = vld [vmem:[%s1713 + $0x80] sm:$0xff]
      %v3581 = vld [vmem:[%s1713 + $0x90] sm:$0xff]
      %v3582 = vld [vmem:[%s1713 + $0x98] sm:$0xff]
      %v3583 = vld [vmem:[%s1713 + $0xa8] sm:$0xff]
      %v3584 = vld [vmem:[%s1713 + $0xb0] sm:$0xff]
      %v3585 = vld [vmem:[%s1713 + $0xc0] sm:$0xff]
      %v3586 = vld [vmem:[%s1713 + $0xc8] sm:$0xff]
      %v3587 = vld [vmem:[%s1713 + $0xd8] sm:$0xff]
      %v3588 = vld [vmem:[%s1713 + $0xe0] sm:$0xff]
      %v3589 = vld [vmem:[%s1713 + $0x1] sm:$0xff]
      %v3590 = vld [vmem:[%s1713 + $0x9] sm:$0xff]
      %v3591 = vld [vmem:[%s1713 + $0x19] sm:$0xff]
      %v3592 = vld [vmem:[%s1713 + $0x21] sm:$0xff]
      %v3593 = vld [vmem:[%s1713 + $0x31] sm:$0xff]
      %v3594 = vld [vmem:[%s1713 + $0x39] sm:$0xff]
      %v3595 = vld [vmem:[%s1713 + $0x49] sm:$0xff]
      %v3596 = vld [vmem:[%s1713 + $0x51] sm:$0xff]
      %v3597 = vld [vmem:[%s1713 + $0x61] sm:$0xff]
      %v3598 = vld [vmem:[%s1713 + $0x69] sm:$0xff]
      %v3599 = vld [vmem:[%s1713 + $0x79] sm:$0xff]
      %v3600 = vld [vmem:[%s1713 + $0x81] sm:$0xff]
      %v3601 = vld [vmem:[%s1713 + $0x91] sm:$0xff]
      %v3602 = vld [vmem:[%s1713 + $0x99] sm:$0xff]
      %v3603 = vld [vmem:[%s1713 + $0xa9] sm:$0xff]
      %v3604 = vld [vmem:[%s1713 + $0xb1] sm:$0xff]
      %v3605 = vld [vmem:[%s1713 + $0xc1] sm:$0xff]
      %v3606 = vld [vmem:[%s1713 + $0xc9] sm:$0xff]
      %v3607 = vld [vmem:[%s1713 + $0xd9] sm:$0xff]
      %v3608 = vld [vmem:[%s1713 + $0xe1] sm:$0xff]
      %v3609 = vld [vmem:[%s1713 + $0x2] sm:$0xff]
      %v3610 = vld [vmem:[%s1713 + $0xa] sm:$0xff]
      %v3611 = vld [vmem:[%s1713 + $0x1a] sm:$0xff]
      %v3612 = vld [vmem:[%s1713 + $0x22] sm:$0xff]
      %v3613 = vld [vmem:[%s1713 + $0x32] sm:$0xff]
      %v3614 = vld [vmem:[%s1713 + $0x3a] sm:$0xff]
      %v3615 = vld [vmem:[%s1713 + $0x4a] sm:$0xff]
      %v3616 = vld [vmem:[%s1713 + $0x52] sm:$0xff]
      %v3617 = vld [vmem:[%s1713 + $0x62] sm:$0xff]
      %v3618 = vld [vmem:[%s1713 + $0x6a] sm:$0xff]
      %v3619 = vld [vmem:[%s1713 + $0x7a] sm:$0xff]
      %v3620 = vld [vmem:[%s1713 + $0x82] sm:$0xff]
      %v3621 = vld [vmem:[%s1713 + $0x92] sm:$0xff]
      %v3622 = vld [vmem:[%s1713 + $0x9a] sm:$0xff]
      %v3623 = vld [vmem:[%s1713 + $0xaa] sm:$0xff]
      %v3624 = vld [vmem:[%s1713 + $0xb2] sm:$0xff]
      %v3625 = vld [vmem:[%s1713 + $0xc2] sm:$0xff]
      %v3626 = vld [vmem:[%s1713 + $0xca] sm:$0xff]
      %v3627 = vld [vmem:[%s1713 + $0xda] sm:$0xff]
      %v3628 = vld [vmem:[%s1713 + $0xe2] sm:$0xff]
      %v3629 = vld [vmem:[%s1786] sm:$0xff]
      %v3630 = vld [vmem:[%s1786 + $0x8] sm:$0xff]
      %v3631 = vld [vmem:[%s1786 + $0x18] sm:$0xff]
      %v3632 = vld [vmem:[%s1786 + $0x20] sm:$0xff]
      %v3633 = vld [vmem:[%s1786 + $0x30] sm:$0xff]
      %v3634 = vld [vmem:[%s1786 + $0x38] sm:$0xff]
      %v3635 = vld [vmem:[%s1786 + $0x48] sm:$0xff]
      %v3636 = vld [vmem:[%s1786 + $0x50] sm:$0xff]
      %v3637 = vld [vmem:[%s1786 + $0x60] sm:$0xff]
      %v3638 = vld [vmem:[%s1786 + $0x68] sm:$0xff]
      %v3639 = vld [vmem:[%s1786 + $0x78] sm:$0xff]
      %v3640 = vld [vmem:[%s1786 + $0x80] sm:$0xff]
      %v3641 = vld [vmem:[%s1786 + $0x90] sm:$0xff]
      %v3642 = vld [vmem:[%s1786 + $0x98] sm:$0xff]
      %v3643 = vld [vmem:[%s1786 + $0xa8] sm:$0xff]
      %v3644 = vld [vmem:[%s1786 + $0xb0] sm:$0xff]
      %v3645 = vld [vmem:[%s1786 + $0xc0] sm:$0xff]
      %v3646 = vld [vmem:[%s1786 + $0xc8] sm:$0xff]
      %v3647 = vld [vmem:[%s1786 + $0xd8] sm:$0xff]
      %v3648 = vld [vmem:[%s1786 + $0xe0] sm:$0xff]
      %v3649 = vld [vmem:[%s1786 + $0x1] sm:$0xff]
      %v3650 = vld [vmem:[%s1786 + $0x9] sm:$0xff]
      %v3651 = vld [vmem:[%s1786 + $0x19] sm:$0xff]
      %v3652 = vld [vmem:[%s1786 + $0x21] sm:$0xff]
      %v3653 = vld [vmem:[%s1786 + $0x31] sm:$0xff]
      %v3654 = vld [vmem:[%s1786 + $0x39] sm:$0xff]
      %v3655 = vld [vmem:[%s1786 + $0x49] sm:$0xff]
      %v3656 = vld [vmem:[%s1786 + $0x51] sm:$0xff]
      %v3657 = vld [vmem:[%s1786 + $0x61] sm:$0xff]
      %v3658 = vld [vmem:[%s1786 + $0x69] sm:$0xff]
      %v3659 = vld [vmem:[%s1786 + $0x79] sm:$0xff]
      %v3660 = vld [vmem:[%s1786 + $0x81] sm:$0xff]
      %v3661 = vld [vmem:[%s1786 + $0x91] sm:$0xff]
      %v3662 = vld [vmem:[%s1786 + $0x99] sm:$0xff]
      %v3663 = vld [vmem:[%s1786 + $0xa9] sm:$0xff]
      %v3664 = vld [vmem:[%s1786 + $0xb1] sm:$0xff]
      %v3665 = vld [vmem:[%s1786 + $0xc1] sm:$0xff]
      %v3666 = vld [vmem:[%s1786 + $0xc9] sm:$0xff]
      %v3667 = vld [vmem:[%s1786 + $0xd9] sm:$0xff]
      %v3668 = vld [vmem:[%s1786 + $0xe1] sm:$0xff]
      %v3669 = vld [vmem:[%s1786 + $0x2] sm:$0xff]
      %v3670 = vld [vmem:[%s1786 + $0xa] sm:$0xff]
      %v3671 = vld [vmem:[%s1786 + $0x1a] sm:$0xff]
      %v3672 = vld [vmem:[%s1786 + $0x22] sm:$0xff]
      %v3673 = vld [vmem:[%s1786 + $0x32] sm:$0xff]
      %v3674 = vld [vmem:[%s1786 + $0x3a] sm:$0xff]
      %v3675 = vld [vmem:[%s1786 + $0x4a] sm:$0xff]
      %v3676 = vld [vmem:[%s1786 + $0x52] sm:$0xff]
      %v3677 = vld [vmem:[%s1786 + $0x62] sm:$0xff]
      %v3678 = vld [vmem:[%s1786 + $0x6a] sm:$0xff]
      %v3679 = vld [vmem:[%s1786 + $0x7a] sm:$0xff]
      %v3680 = vld [vmem:[%s1786 + $0x82] sm:$0xff]
      %v3681 = vld [vmem:[%s1786 + $0x92] sm:$0xff]
      %v3682 = vld [vmem:[%s1786 + $0x9a] sm:$0xff]
      %v3683 = vld [vmem:[%s1786 + $0xaa] sm:$0xff]
      %v3684 = vld [vmem:[%s1786 + $0xb2] sm:$0xff]
      %v3685 = vld [vmem:[%s1786 + $0xc2] sm:$0xff]
      %v3686 = vld [vmem:[%s1786 + $0xca] sm:$0xff]
      %v3687 = vld [vmem:[%s1786 + $0xda] sm:$0xff]
      %v3688 = vld [vmem:[%s1786 + $0xe2] sm:$0xff]
      %3709 = vrot.lane.b32.xlu0 %v3529, 4
      %v3710 = vpop.permute.xlu0 %3709
      %3711 = vrot.lane.b32.xlu0 %v3530, 4
      %v3712 = vpop.permute.xlu0 %3711
      %3713 = vrot.lane.b32.xlu0 %v3531, 4
      %v3714 = vpop.permute.xlu0 %3713
      %3715 = vrot.lane.b32.xlu0 %v3532, 4
      %v3716 = vpop.permute.xlu0 %3715
      %3717 = vrot.lane.b32.xlu0 %v3533, 4
      %v3718 = vpop.permute.xlu0 %3717
      %3719 = vrot.lane.b32.xlu0 %v3534, 4
      %v3720 = vpop.permute.xlu0 %3719
      %3721 = vrot.lane.b32.xlu0 %v3535, 4
      %v3722 = vpop.permute.xlu0 %3721
      %3723 = vrot.lane.b32.xlu0 %v3536, 4
      %v3724 = vpop.permute.xlu0 %3723
      %3725 = vrot.lane.b32.xlu0 %v3537, 4
      %v3726 = vpop.permute.xlu0 %3725
      %3727 = vrot.lane.b32.xlu0 %v3538, 4
      %v3728 = vpop.permute.xlu0 %3727
      %3729 = vrot.lane.b32.xlu0 %v3539, 4
      %v3730 = vpop.permute.xlu0 %3729
      %3731 = vrot.lane.b32.xlu0 %v3540, 4
      %v3732 = vpop.permute.xlu0 %3731
      %3733 = vrot.lane.b32.xlu0 %v3541, 4
      %v3734 = vpop.permute.xlu0 %3733
      %3735 = vrot.lane.b32.xlu0 %v3542, 4
      %v3736 = vpop.permute.xlu0 %3735
      %3737 = vrot.lane.b32.xlu0 %v3543, 4
      %v3738 = vpop.permute.xlu0 %3737
      %3739 = vrot.lane.b32.xlu0 %v3544, 4
      %v3740 = vpop.permute.xlu0 %3739
      %3741 = vrot.lane.b32.xlu0 %v3545, 4
      %v3742 = vpop.permute.xlu0 %3741
      %3743 = vrot.lane.b32.xlu0 %v3546, 4
      %v3744 = vpop.permute.xlu0 %3743
      %3745 = vrot.lane.b32.xlu0 %v3547, 4
      %v3746 = vpop.permute.xlu0 %3745
      %3747 = vrot.lane.b32.xlu0 %v3548, 4
      %v3748 = vpop.permute.xlu0 %3747
      %3789 = vrot.lane.b32.xlu0 %v3549, 8
      %v3790 = vpop.permute.xlu0 %3789
      %3791 = vrot.lane.b32.xlu0 %v3550, 8
      %v3792 = vpop.permute.xlu0 %3791
      %3793 = vrot.lane.b32.xlu0 %v3551, 8
      %v3794 = vpop.permute.xlu0 %3793
      %3795 = vrot.lane.b32.xlu0 %v3552, 8
      %v3796 = vpop.permute.xlu0 %3795
      %3797 = vrot.lane.b32.xlu0 %v3553, 8
      %v3798 = vpop.permute.xlu0 %3797
      %3799 = vrot.lane.b32.xlu0 %v3554, 8
      %v3800 = vpop.permute.xlu0 %3799
      %3801 = vrot.lane.b32.xlu0 %v3555, 8
      %v3802 = vpop.permute.xlu0 %3801
      %3803 = vrot.lane.b32.xlu0 %v3556, 8
      %v3804 = vpop.permute.xlu0 %3803
      %3805 = vrot.lane.b32.xlu0 %v3557, 8
      %v3806 = vpop.permute.xlu0 %3805
      %3807 = vrot.lane.b32.xlu0 %v3558, 8
      %v3808 = vpop.permute.xlu0 %3807
      %3809 = vrot.lane.b32.xlu0 %v3559, 8
      %v3810 = vpop.permute.xlu0 %3809
      %3811 = vrot.lane.b32.xlu0 %v3560, 8
      %v3812 = vpop.permute.xlu0 %3811
      %3813 = vrot.lane.b32.xlu0 %v3561, 8
      %v3814 = vpop.permute.xlu0 %3813
      %3815 = vrot.lane.b32.xlu0 %v3562, 8
      %v3816 = vpop.permute.xlu0 %3815
      %3817 = vrot.lane.b32.xlu0 %v3563, 8
      %v3818 = vpop.permute.xlu0 %3817
      %3819 = vrot.lane.b32.xlu0 %v3564, 8
      %v3820 = vpop.permute.xlu0 %3819
      %3821 = vrot.lane.b32.xlu0 %v3565, 8
      %v3822 = vpop.permute.xlu0 %3821
      %3823 = vrot.lane.b32.xlu0 %v3566, 8
      %v3824 = vpop.permute.xlu0 %3823
      %3825 = vrot.lane.b32.xlu0 %v3567, 8
      %v3826 = vpop.permute.xlu0 %3825
      %3827 = vrot.lane.b32.xlu0 %v3568, 8
      %v3828 = vpop.permute.xlu0 %3827
      %3869 = vrot.lane.b32.xlu0 %v3569, 12
      %v3870 = vpop.permute.xlu0 %3869
      %3871 = vrot.lane.b32.xlu0 %v3570, 12
      %v3872 = vpop.permute.xlu0 %3871
      %3873 = vrot.lane.b32.xlu0 %v3571, 12
      %v3874 = vpop.permute.xlu0 %3873
      %3875 = vrot.lane.b32.xlu0 %v3572, 12
      %v3876 = vpop.permute.xlu0 %3875
      %3877 = vrot.lane.b32.xlu0 %v3573, 12
      %v3878 = vpop.permute.xlu0 %3877
      %3879 = vrot.lane.b32.xlu0 %v3574, 12
      %v3880 = vpop.permute.xlu0 %3879
      %3881 = vrot.lane.b32.xlu0 %v3575, 12
      %v3882 = vpop.permute.xlu0 %3881
      %3883 = vrot.lane.b32.xlu0 %v3576, 12
      %v3884 = vpop.permute.xlu0 %3883
      %3885 = vrot.lane.b32.xlu0 %v3577, 12
      %v3886 = vpop.permute.xlu0 %3885
      %3887 = vrot.lane.b32.xlu0 %v3578, 12
      %v3888 = vpop.permute.xlu0 %3887
      %3889 = vrot.lane.b32.xlu0 %v3579, 12
      %v3890 = vpop.permute.xlu0 %3889
      %3891 = vrot.lane.b32.xlu0 %v3580, 12
      %v3892 = vpop.permute.xlu0 %3891
      %3893 = vrot.lane.b32.xlu0 %v3581, 12
      %v3894 = vpop.permute.xlu0 %3893
      %3895 = vrot.lane.b32.xlu0 %v3582, 12
      %v3896 = vpop.permute.xlu0 %3895
      %3897 = vrot.lane.b32.xlu0 %v3583, 12
      %v3898 = vpop.permute.xlu0 %3897
      %3899 = vrot.lane.b32.xlu0 %v3584, 12
      %v3900 = vpop.permute.xlu0 %3899
      %3901 = vrot.lane.b32.xlu0 %v3585, 12
      %v3902 = vpop.permute.xlu0 %3901
      %3903 = vrot.lane.b32.xlu0 %v3586, 12
      %v3904 = vpop.permute.xlu0 %3903
      %3905 = vrot.lane.b32.xlu0 %v3587, 12
      %v3906 = vpop.permute.xlu0 %3905
      %3907 = vrot.lane.b32.xlu0 %v3588, 12
      %v3908 = vpop.permute.xlu0 %3907
      %3949 = vrot.lane.b32.xlu0 %v3589, 16
      %v3950 = vpop.permute.xlu0 %3949
      %3951 = vrot.lane.b32.xlu0 %v3590, 16
      %v3952 = vpop.permute.xlu0 %3951
      %3953 = vrot.lane.b32.xlu0 %v3591, 16
      %v3954 = vpop.permute.xlu0 %3953
      %3955 = vrot.lane.b32.xlu0 %v3592, 16
      %v3956 = vpop.permute.xlu0 %3955
      %3957 = vrot.lane.b32.xlu0 %v3593, 16
      %v3958 = vpop.permute.xlu0 %3957
      %3959 = vrot.lane.b32.xlu0 %v3594, 16
      %v3960 = vpop.permute.xlu0 %3959
      %3961 = vrot.lane.b32.xlu0 %v3595, 16
      %v3962 = vpop.permute.xlu0 %3961
      %3963 = vrot.lane.b32.xlu0 %v3596, 16
      %v3964 = vpop.permute.xlu0 %3963
      %3965 = vrot.lane.b32.xlu0 %v3597, 16
      %v3966 = vpop.permute.xlu0 %3965
      %3967 = vrot.lane.b32.xlu0 %v3598, 16
      %v3968 = vpop.permute.xlu0 %3967
      %3969 = vrot.lane.b32.xlu0 %v3599, 16
      %v3970 = vpop.permute.xlu0 %3969
      %3971 = vrot.lane.b32.xlu0 %v3600, 16
      %v3972 = vpop.permute.xlu0 %3971
      %3973 = vrot.lane.b32.xlu0 %v3601, 16
      %v3974 = vpop.permute.xlu0 %3973
      %3975 = vrot.lane.b32.xlu0 %v3602, 16
      %v3976 = vpop.permute.xlu0 %3975
      %3977 = vrot.lane.b32.xlu0 %v3603, 16
      %v3978 = vpop.permute.xlu0 %3977
      %3979 = vrot.lane.b32.xlu0 %v3604, 16
      %v3980 = vpop.permute.xlu0 %3979
      %3981 = vrot.lane.b32.xlu0 %v3605, 16
      %v3982 = vpop.permute.xlu0 %3981
      %3983 = vrot.lane.b32.xlu0 %v3606, 16
      %v3984 = vpop.permute.xlu0 %3983
      %3985 = vrot.lane.b32.xlu0 %v3607, 16
      %v3986 = vpop.permute.xlu0 %3985
      %3987 = vrot.lane.b32.xlu0 %v3608, 16
      %v3988 = vpop.permute.xlu0 %3987
      %4029 = vrot.lane.b32.xlu0 %v3609, 20
      %v4030 = vpop.permute.xlu0 %4029
      %4031 = vrot.lane.b32.xlu0 %v3610, 20
      %v4032 = vpop.permute.xlu0 %4031
      %4033 = vrot.lane.b32.xlu0 %v3611, 20
      %v4034 = vpop.permute.xlu0 %4033
      %4035 = vrot.lane.b32.xlu0 %v3612, 20
      %v4036 = vpop.permute.xlu0 %4035
      %4037 = vrot.lane.b32.xlu0 %v3613, 20
      %v4038 = vpop.permute.xlu0 %4037
      %4039 = vrot.lane.b32.xlu0 %v3614, 20
      %v4040 = vpop.permute.xlu0 %4039
      %4041 = vrot.lane.b32.xlu0 %v3615, 20
      %v4042 = vpop.permute.xlu0 %4041
      %4043 = vrot.lane.b32.xlu0 %v3616, 20
      %v4044 = vpop.permute.xlu0 %4043
      %4045 = vrot.lane.b32.xlu0 %v3617, 20
      %v4046 = vpop.permute.xlu0 %4045
      %4047 = vrot.lane.b32.xlu0 %v3618, 20
      %v4048 = vpop.permute.xlu0 %4047
      %4049 = vrot.lane.b32.xlu0 %v3619, 20
      %v4050 = vpop.permute.xlu0 %4049
      %4051 = vrot.lane.b32.xlu0 %v3620, 20
      %v4052 = vpop.permute.xlu0 %4051
      %4053 = vrot.lane.b32.xlu0 %v3621, 20
      %v4054 = vpop.permute.xlu0 %4053
      %4055 = vrot.lane.b32.xlu0 %v3622, 20
      %v4056 = vpop.permute.xlu0 %4055
      %4057 = vrot.lane.b32.xlu0 %v3623, 20
      %v4058 = vpop.permute.xlu0 %4057
      %4059 = vrot.lane.b32.xlu0 %v3624, 20
      %v4060 = vpop.permute.xlu0 %4059
      %4061 = vrot.lane.b32.xlu0 %v3625, 20
      %v4062 = vpop.permute.xlu0 %4061
      %4063 = vrot.lane.b32.xlu0 %v3626, 20
      %v4064 = vpop.permute.xlu0 %4063
      %4065 = vrot.lane.b32.xlu0 %v3627, 20
      %v4066 = vpop.permute.xlu0 %4065
      %4067 = vrot.lane.b32.xlu0 %v3628, 20
      %v4068 = vpop.permute.xlu0 %4067
      %4109 = vrot.lane.b32.xlu0 %v3629, 24
      %v4110 = vpop.permute.xlu0 %4109
      %4111 = vrot.lane.b32.xlu0 %v3630, 24
      %v4112 = vpop.permute.xlu0 %4111
      %4113 = vrot.lane.b32.xlu0 %v3631, 24
      %v4114 = vpop.permute.xlu0 %4113
      %4115 = vrot.lane.b32.xlu0 %v3632, 24
      %v4116 = vpop.permute.xlu0 %4115
      %4117 = vrot.lane.b32.xlu0 %v3633, 24
      %v4118 = vpop.permute.xlu0 %4117
      %4119 = vrot.lane.b32.xlu0 %v3634, 24
      %v4120 = vpop.permute.xlu0 %4119
      %4121 = vrot.lane.b32.xlu0 %v3635, 24
      %v4122 = vpop.permute.xlu0 %4121
      %4123 = vrot.lane.b32.xlu0 %v3636, 24
      %v4124 = vpop.permute.xlu0 %4123
      %4125 = vrot.lane.b32.xlu0 %v3637, 24
      %v4126 = vpop.permute.xlu0 %4125
      %4127 = vrot.lane.b32.xlu0 %v3638, 24
      %v4128 = vpop.permute.xlu0 %4127
      %4129 = vrot.lane.b32.xlu0 %v3639, 24
      %v4130 = vpop.permute.xlu0 %4129
      %4131 = vrot.lane.b32.xlu0 %v3640, 24
      %v4132 = vpop.permute.xlu0 %4131
      %4133 = vrot.lane.b32.xlu0 %v3641, 24
      %v4134 = vpop.permute.xlu0 %4133
      %4135 = vrot.lane.b32.xlu0 %v3642, 24
      %v4136 = vpop.permute.xlu0 %4135
      %4137 = vrot.lane.b32.xlu0 %v3643, 24
      %v4138 = vpop.permute.xlu0 %4137
      %4139 = vrot.lane.b32.xlu0 %v3644, 24
      %v4140 = vpop.permute.xlu0 %4139
      %4141 = vrot.lane.b32.xlu0 %v3645, 24
      %v4142 = vpop.permute.xlu0 %4141
      %4143 = vrot.lane.b32.xlu0 %v3646, 24
      %v4144 = vpop.permute.xlu0 %4143
      %4145 = vrot.lane.b32.xlu0 %v3647, 24
      %v4146 = vpop.permute.xlu0 %4145
      %4147 = vrot.lane.b32.xlu0 %v3648, 24
      %v4148 = vpop.permute.xlu0 %4147
      %4189 = vrot.lane.b32.xlu0 %v3649, 28
      %v4190 = vpop.permute.xlu0 %4189
      %4191 = vrot.lane.b32.xlu0 %v3650, 28
      %v4192 = vpop.permute.xlu0 %4191
      %4193 = vrot.lane.b32.xlu0 %v3651, 28
      %v4194 = vpop.permute.xlu0 %4193
      %4195 = vrot.lane.b32.xlu0 %v3652, 28
      %v4196 = vpop.permute.xlu0 %4195
      %4197 = vrot.lane.b32.xlu0 %v3653, 28
      %v4198 = vpop.permute.xlu0 %4197
      %4199 = vrot.lane.b32.xlu0 %v3654, 28
      %v4200 = vpop.permute.xlu0 %4199
      %4201 = vrot.lane.b32.xlu0 %v3655, 28
      %v4202 = vpop.permute.xlu0 %4201
      %4203 = vrot.lane.b32.xlu0 %v3656, 28
      %v4204 = vpop.permute.xlu0 %4203
      %4205 = vrot.lane.b32.xlu0 %v3657, 28
      %v4206 = vpop.permute.xlu0 %4205
      %4207 = vrot.lane.b32.xlu0 %v3658, 28
      %v4208 = vpop.permute.xlu0 %4207
      %4209 = vrot.lane.b32.xlu0 %v3659, 28
      %v4210 = vpop.permute.xlu0 %4209
      %4211 = vrot.lane.b32.xlu0 %v3660, 28
      %v4212 = vpop.permute.xlu0 %4211
      %4213 = vrot.lane.b32.xlu0 %v3661, 28
      %v4214 = vpop.permute.xlu0 %4213
      %4215 = vrot.lane.b32.xlu0 %v3662, 28
      %v4216 = vpop.permute.xlu0 %4215
      %4217 = vrot.lane.b32.xlu0 %v3663, 28
      %v4218 = vpop.permute.xlu0 %4217
      %4219 = vrot.lane.b32.xlu0 %v3664, 28
      %v4220 = vpop.permute.xlu0 %4219
      %4221 = vrot.lane.b32.xlu0 %v3665, 28
      %v4222 = vpop.permute.xlu0 %4221
      %4223 = vrot.lane.b32.xlu0 %v3666, 28
      %v4224 = vpop.permute.xlu0 %4223
      %4225 = vrot.lane.b32.xlu0 %v3667, 28
      %v4226 = vpop.permute.xlu0 %4225
      %4227 = vrot.lane.b32.xlu0 %v3668, 28
      %v4228 = vpop.permute.xlu0 %4227
      %4269 = vrot.lane.b32.xlu0 %v3669, 32
      %v4270 = vpop.permute.xlu0 %4269
      %4271 = vrot.lane.b32.xlu0 %v3670, 32
      %v4272 = vpop.permute.xlu0 %4271
      %4273 = vrot.lane.b32.xlu0 %v3671, 32
      %v4274 = vpop.permute.xlu0 %4273
      %4275 = vrot.lane.b32.xlu0 %v3672, 32
      %v4276 = vpop.permute.xlu0 %4275
      %4277 = vrot.lane.b32.xlu0 %v3673, 32
      %v4278 = vpop.permute.xlu0 %4277
      %4279 = vrot.lane.b32.xlu0 %v3674, 32
      %v4280 = vpop.permute.xlu0 %4279
      %4281 = vrot.lane.b32.xlu0 %v3675, 32
      %v4282 = vpop.permute.xlu0 %4281
      %4283 = vrot.lane.b32.xlu0 %v3676, 32
      %v4284 = vpop.permute.xlu0 %4283
      %4285 = vrot.lane.b32.xlu0 %v3677, 32
      %v4286 = vpop.permute.xlu0 %4285
      %4287 = vrot.lane.b32.xlu0 %v3678, 32
      %v4288 = vpop.permute.xlu0 %4287
      %4289 = vrot.lane.b32.xlu0 %v3679, 32
      %v4290 = vpop.permute.xlu0 %4289
      %4291 = vrot.lane.b32.xlu0 %v3680, 32
      %v4292 = vpop.permute.xlu0 %4291
      %4293 = vrot.lane.b32.xlu0 %v3681, 32
      %v4294 = vpop.permute.xlu0 %4293
      %4295 = vrot.lane.b32.xlu0 %v3682, 32
      %v4296 = vpop.permute.xlu0 %4295
      %4297 = vrot.lane.b32.xlu0 %v3683, 32
      %v4298 = vpop.permute.xlu0 %4297
      %4299 = vrot.lane.b32.xlu0 %v3684, 32
      %v4300 = vpop.permute.xlu0 %4299
      %4301 = vrot.lane.b32.xlu0 %v3685, 32
      %v4302 = vpop.permute.xlu0 %4301
      %4303 = vrot.lane.b32.xlu0 %v3686, 32
      %v4304 = vpop.permute.xlu0 %4303
      %4305 = vrot.lane.b32.xlu0 %v3687, 32
      %v4306 = vpop.permute.xlu0 %4305
      %4307 = vrot.lane.b32.xlu0 %v3688, 32
      %v4308 = vpop.permute.xlu0 %4307
      %v4329 = vsel %vm1350, %v3509, %v3710
      %v4330 = vsel %vm1350, %v3510, %v3712
      %v4331 = vsel %vm1350, %v3511, %v3714
      %v4332 = vsel %vm1350, %v3512, %v3716
      %v4333 = vsel %vm1350, %v3513, %v3718
      %v4334 = vsel %vm1350, %v3514, %v3720
      %v4335 = vsel %vm1350, %v3515, %v3722
      %v4336 = vsel %vm1350, %v3516, %v3724
      %v4337 = vsel %vm1350, %v3517, %v3726
      %v4338 = vsel %vm1350, %v3518, %v3728
      %v4339 = vsel %vm1350, %v3519, %v3730
      %v4340 = vsel %vm1350, %v3520, %v3732
      %v4341 = vsel %vm1350, %v3521, %v3734
      %v4342 = vsel %vm1350, %v3522, %v3736
      %v4343 = vsel %vm1350, %v3523, %v3738
      %v4344 = vsel %vm1350, %v3524, %v3740
      %v4345 = vsel %vm1350, %v3525, %v3742
      %v4346 = vsel %vm1350, %v3526, %v3744
      %v4347 = vsel %vm1350, %v3527, %v3746
      %v4348 = vsel %vm1350, %v3528, %v3748
      %v4349 = vsel %vm2651, %v4329, %v3790
      %v4350 = vsel %vm2651, %v4330, %v3792
      %v4351 = vsel %vm2651, %v4331, %v3794
      %v4352 = vsel %vm2651, %v4332, %v3796
      %v4353 = vsel %vm2651, %v4333, %v3798
      %v4354 = vsel %vm2651, %v4334, %v3800
      %v4355 = vsel %vm2651, %v4335, %v3802
      %v4356 = vsel %vm2651, %v4336, %v3804
      %v4357 = vsel %vm2651, %v4337, %v3806
      %v4358 = vsel %vm2651, %v4338, %v3808
      %v4359 = vsel %vm2651, %v4339, %v3810
      %v4360 = vsel %vm2651, %v4340, %v3812
      %v4361 = vsel %vm2651, %v4341, %v3814
      %v4362 = vsel %vm2651, %v4342, %v3816
      %v4363 = vsel %vm2651, %v4343, %v3818
      %v4364 = vsel %vm2651, %v4344, %v3820
      %v4365 = vsel %vm2651, %v4345, %v3822
      %v4366 = vsel %vm2651, %v4346, %v3824
      %v4367 = vsel %vm2651, %v4347, %v3826
      %v4368 = vsel %vm2651, %v4348, %v3828
      %v4369 = vsel %vm2676, %v4349, %v3870
      %v4370 = vsel %vm2676, %v4350, %v3872
      %v4371 = vsel %vm2676, %v4351, %v3874
      %v4372 = vsel %vm2676, %v4352, %v3876
      %v4373 = vsel %vm2676, %v4353, %v3878
      %v4374 = vsel %vm2676, %v4354, %v3880
      %v4375 = vsel %vm2676, %v4355, %v3882
      %v4376 = vsel %vm2676, %v4356, %v3884
      %v4377 = vsel %vm2676, %v4357, %v3886
      %v4378 = vsel %vm2676, %v4358, %v3888
      %v4379 = vsel %vm2676, %v4359, %v3890
      %v4380 = vsel %vm2676, %v4360, %v3892
      %v4381 = vsel %vm2676, %v4361, %v3894
      %v4382 = vsel %vm2676, %v4362, %v3896
      %v4383 = vsel %vm2676, %v4363, %v3898
      %v4384 = vsel %vm2676, %v4364, %v3900
      %v4385 = vsel %vm2676, %v4365, %v3902
      %v4386 = vsel %vm2676, %v4366, %v3904
      %v4387 = vsel %vm2676, %v4367, %v3906
      %v4388 = vsel %vm2676, %v4368, %v3908
      %v4389 = vsel %vm2701, %v4369, %v3950
      %v4390 = vsel %vm2701, %v4370, %v3952
      %v4391 = vsel %vm2701, %v4371, %v3954
      %v4392 = vsel %vm2701, %v4372, %v3956
      %v4393 = vsel %vm2701, %v4373, %v3958
      %v4394 = vsel %vm2701, %v4374, %v3960
      %v4395 = vsel %vm2701, %v4375, %v3962
      %v4396 = vsel %vm2701, %v4376, %v3964
      %v4397 = vsel %vm2701, %v4377, %v3966
      %v4398 = vsel %vm2701, %v4378, %v3968
      %v4399 = vsel %vm2701, %v4379, %v3970
      %v4400 = vsel %vm2701, %v4380, %v3972
      %v4401 = vsel %vm2701, %v4381, %v3974
      %v4402 = vsel %vm2701, %v4382, %v3976
      %v4403 = vsel %vm2701, %v4383, %v3978
      %v4404 = vsel %vm2701, %v4384, %v3980
      %v4405 = vsel %vm2701, %v4385, %v3982
      %v4406 = vsel %vm2701, %v4386, %v3984
      %v4407 = vsel %vm2701, %v4387, %v3986
      %v4408 = vsel %vm2701, %v4388, %v3988
      %v4409 = vsel %vm2726, %v4389, %v4030
      %v4410 = vsel %vm2726, %v4390, %v4032
      %v4411 = vsel %vm2726, %v4391, %v4034
      %v4412 = vsel %vm2726, %v4392, %v4036
      %v4413 = vsel %vm2726, %v4393, %v4038
      %v4414 = vsel %vm2726, %v4394, %v4040
      %v4415 = vsel %vm2726, %v4395, %v4042
      %v4416 = vsel %vm2726, %v4396, %v4044
      %v4417 = vsel %vm2726, %v4397, %v4046
      %v4418 = vsel %vm2726, %v4398, %v4048
      %v4419 = vsel %vm2726, %v4399, %v4050
      %v4420 = vsel %vm2726, %v4400, %v4052
      %v4421 = vsel %vm2726, %v4401, %v4054
      %v4422 = vsel %vm2726, %v4402, %v4056
      %v4423 = vsel %vm2726, %v4403, %v4058
      %v4424 = vsel %vm2726, %v4404, %v4060
      %v4425 = vsel %vm2726, %v4405, %v4062
      %v4426 = vsel %vm2726, %v4406, %v4064
      %v4427 = vsel %vm2726, %v4407, %v4066
      %v4428 = vsel %vm2726, %v4408, %v4068
      %v4429 = vsel %vm2751, %v4409, %v4110
      %v4430 = vsel %vm2751, %v4410, %v4112
      %v4431 = vsel %vm2751, %v4411, %v4114
      %v4432 = vsel %vm2751, %v4412, %v4116
      %v4433 = vsel %vm2751, %v4413, %v4118
      %v4434 = vsel %vm2751, %v4414, %v4120
      %v4435 = vsel %vm2751, %v4415, %v4122
      %v4436 = vsel %vm2751, %v4416, %v4124
      %v4437 = vsel %vm2751, %v4417, %v4126
      %v4438 = vsel %vm2751, %v4418, %v4128
      %v4439 = vsel %vm2751, %v4419, %v4130
      %v4440 = vsel %vm2751, %v4420, %v4132
      %v4441 = vsel %vm2751, %v4421, %v4134
      %v4442 = vsel %vm2751, %v4422, %v4136
      %v4443 = vsel %vm2751, %v4423, %v4138
      %v4444 = vsel %vm2751, %v4424, %v4140
      %v4445 = vsel %vm2751, %v4425, %v4142
      %v4446 = vsel %vm2751, %v4426, %v4144
      %v4447 = vsel %vm2751, %v4427, %v4146
      %v4448 = vsel %vm2751, %v4428, %v4148
      %v4449 = vsel %vm2776, %v4429, %v4190
      %v4450 = vsel %vm2776, %v4430, %v4192
      %v4451 = vsel %vm2776, %v4431, %v4194
      %v4452 = vsel %vm2776, %v4432, %v4196
      %v4453 = vsel %vm2776, %v4433, %v4198
      %v4454 = vsel %vm2776, %v4434, %v4200
      %v4455 = vsel %vm2776, %v4435, %v4202
      %v4456 = vsel %vm2776, %v4436, %v4204
      %v4457 = vsel %vm2776, %v4437, %v4206
      %v4458 = vsel %vm2776, %v4438, %v4208
      %v4459 = vsel %vm2776, %v4439, %v4210
      %v4460 = vsel %vm2776, %v4440, %v4212
      %v4461 = vsel %vm2776, %v4441, %v4214
      %v4462 = vsel %vm2776, %v4442, %v4216
      %v4463 = vsel %vm2776, %v4443, %v4218
      %v4464 = vsel %vm2776, %v4444, %v4220
      %v4465 = vsel %vm2776, %v4445, %v4222
      %v4466 = vsel %vm2776, %v4446, %v4224
      %v4467 = vsel %vm2776, %v4447, %v4226
      %v4468 = vsel %vm2776, %v4448, %v4228
      %v4469 = vsel %vm2801, %v4449, %v4270
      %v4470 = vsel %vm2801, %v4450, %v4272
      %v4471 = vsel %vm2801, %v4451, %v4274
      %v4472 = vsel %vm2801, %v4452, %v4276
      %v4473 = vsel %vm2801, %v4453, %v4278
      %v4474 = vsel %vm2801, %v4454, %v4280
      %v4475 = vsel %vm2801, %v4455, %v4282
      %v4476 = vsel %vm2801, %v4456, %v4284
      %v4477 = vsel %vm2801, %v4457, %v4286
      %v4478 = vsel %vm2801, %v4458, %v4288
      %v4479 = vsel %vm2801, %v4459, %v4290
      %v4480 = vsel %vm2801, %v4460, %v4292
      %v4481 = vsel %vm2801, %v4461, %v4294
      %v4482 = vsel %vm2801, %v4462, %v4296
      %v4483 = vsel %vm2801, %v4463, %v4298
      %v4484 = vsel %vm2801, %v4464, %v4300
      %v4485 = vsel %vm2801, %v4465, %v4302
      %v4486 = vsel %vm2801, %v4466, %v4304
      %v4487 = vsel %vm2801, %v4467, %v4306
      %v4488 = vsel %vm2801, %v4468, %v4308
      %v4489 = vpack.c.bf16 %v4470, %v4469
      %v4490 = vpack.c.bf16 %v4472, %v4471
      %v4491 = vpack.c.bf16 %v4474, %v4473
      %v4492 = vpack.c.bf16 %v4476, %v4475
      %v4493 = vpack.c.bf16 %v4478, %v4477
      %v4494 = vpack.c.bf16 %v4480, %v4479
      %v4495 = vpack.c.bf16 %v4482, %v4481
      %v4496 = vpack.c.bf16 %v4484, %v4483
      %v4497 = vpack.c.bf16 %v4486, %v4485
      %v4498 = vpack.c.bf16 %v4488, %v4487
      %v4499 = vld [vmem:[%s17] sm:$0xf]
      %v4500 = vld [vmem:[%s17 + $0x4] sm:$0xf]
      %v4501 = vld [vmem:[%s17 + $0x8] sm:$0xf]
      %v4502 = vld [vmem:[%s17 + $0xc] sm:$0xf]
      %v4503 = vld [vmem:[%s17 + $0x10] sm:$0x3]
      %v4504 = vld [vmem:[%s18] sm:$0x1]
      %v4506 = vlaneseq
      %v4507 = vshrl.u32 %v4506, 7
      %v4508 = vsub.s32 0, %v4507
      %v4509 = vrot.slane %v4504, %v4508
      %v4516 = vunpack.c.l.b16 %v4499
      %v4517 = vunpack.c.l.b16 %v4500
      %v4518 = vunpack.c.l.b16 %v4501
      %v4519 = vunpack.c.l.b16 %v4502
      %v4520 = vunpack.c.l.b16 %v4503
      %v4521 = vpack.c.b16 %v4517, %v4516
      %v4522 = vpack.c.b16 %v4519, %v4518
      %v4523 = vpack.c.b16 %v4520, %v4520
      %v4527 = vsel %vm2865, %v4489, 0
      %v4530 = vsel %vm2865, %v4490, 0
      %v4533 = vsel %vm2865, %v4491, 0
      %v4536 = vsel %vm2865, %v4492, 0
      %v4539 = vsel %vm2865, %v4493, 0
      %v4542 = vsel %vm2865, %v4494, 0
      %v4545 = vsel %vm2865, %v4495, 0
      %v4548 = vsel %vm2865, %v4496, 0
      %v4551 = vsel %vm2865, %v4497, 0
      %v4554 = vsel %vm2865, %v4498, 0
      %v4557 = vsel %vm1393, %v4523, 0
      %4559 = vmatprep.subr.bf16.mxu0 0
      %4560 = vmatpush1.bf16.msra.mxu0 0
      %4561 = vmatprep.subr.bf16.mxu0 0
      %4562 = vmatpush1.bf16.msra.mxu0 0
      %4563 = vmatprep.subr.bf16.mxu0 0
      %4564 = vmatpush1.bf16.msra.mxu0 0
      %4565 = vmatprep.subr.bf16.mxu0 0
      %4566 = vmatpush1.bf16.msra.mxu0 0
      %4567 = vmatprep.subr.bf16.mxu0 0
      %4568 = vmatpush1.bf16.msra.mxu0 0
      %4569 = vmatprep.subr.bf16.mxu0 0
      %4570 = vmatpush1.bf16.msra.mxu0 %v4557
      %4571 = vmatprep.subr.bf16.mxu0 0
      %4572 = vmatpush1.bf16.msra.mxu0 %v4522
      %4573 = vmatprep.subr.bf16.mxu0 0
      %4574 = vmatpush1.bf16.msra.mxu0 %v4521
      %4575 = vmatprep.subr.bf16.mxu0 0
      %4576 = vmatpush2.bf16.msra.mxu0 0
      %4577 = vmatprep.subr.bf16.mxu0 0
      %4578 = vmatpush2.bf16.msra.mxu0 0
      %4579 = vmatprep.subr.bf16.mxu0 0
      %4580 = vmatpush2.bf16.msra.mxu0 0
      %4581 = vmatprep.subr.bf16.mxu0 0
      %4582 = vmatpush2.bf16.msra.mxu0 0
      %4583 = vmatprep.subr.bf16.mxu0 0
      %4584 = vmatpush2.bf16.msra.mxu0 0
      %4585 = vmatprep.subr.bf16.mxu0 0
      %4586 = vmatpush2.bf16.msra.mxu0 0
      %4587 = vmatprep.subr.bf16.mxu0 0
      %4588 = vmatpush2.bf16.msra.mxu0 0
      %4589 = vmatprep.subr.bf16.mxu0 0
      %4590 = vmatpush2.bf16.msra.mxu0 0
      %4591 = vmatprep.mubr.bf16.mxu0 0
      %4592 = vmatmul.mubr.bf16.gmra.mxu0 %v4527
      %v4593 = vpop.f32.mrf.mxu0
      %v4594 = vadd.f32 %v4509, %v4593
      %v4595 = vpop.f32.mrf.mxu0
      %v4596 = vpop.f32.mrf.mxu0
      %v4597 = vadd.f32 %v4509, %v4596
      %v4598 = vpop.f32.mrf.mxu0
      %4599 = vmatprep.mubr.bf16.mxu0 0
      %4600 = vmatmul.mubr.bf16.gmra.mxu0 %v4530
      %v4601 = vpop.f32.mrf.mxu0
      %v4602 = vadd.f32 %v4509, %v4601
      %v4603 = vpop.f32.mrf.mxu0
      %v4604 = vpop.f32.mrf.mxu0
      %v4605 = vadd.f32 %v4509, %v4604
      %v4606 = vpop.f32.mrf.mxu0
      %4607 = vmatprep.mubr.bf16.mxu0 0
      %4608 = vmatmul.mubr.bf16.gmra.mxu0 %v4533
      %v4609 = vpop.f32.mrf.mxu0
      %v4610 = vadd.f32 %v4509, %v4609
      %v4611 = vpop.f32.mrf.mxu0
      %v4612 = vpop.f32.mrf.mxu0
      %v4613 = vadd.f32 %v4509, %v4612
      %v4614 = vpop.f32.mrf.mxu0
      %4615 = vmatprep.mubr.bf16.mxu0 0
      %4616 = vmatmul.mubr.bf16.gmra.mxu0 %v4536
      %v4617 = vpop.f32.mrf.mxu0
      %v4618 = vadd.f32 %v4509, %v4617
      %v4619 = vpop.f32.mrf.mxu0
      %v4620 = vpop.f32.mrf.mxu0
      %v4621 = vadd.f32 %v4509, %v4620
      %v4622 = vpop.f32.mrf.mxu0
      %4623 = vmatprep.mubr.bf16.mxu0 0
      %4624 = vmatmul.mubr.bf16.gmra.mxu0 %v4539
      %v4625 = vpop.f32.mrf.mxu0
      %v4626 = vadd.f32 %v4509, %v4625
      %v4627 = vpop.f32.mrf.mxu0
      %v4628 = vpop.f32.mrf.mxu0
      %v4629 = vadd.f32 %v4509, %v4628
      %v4630 = vpop.f32.mrf.mxu0
      %4631 = vmatprep.mubr.bf16.mxu0 0
      %4632 = vmatmul.mubr.bf16.gmra.mxu0 %v4542
      %v4633 = vpop.f32.mrf.mxu0
      %v4634 = vadd.f32 %v4509, %v4633
      %v4635 = vpop.f32.mrf.mxu0
      %v4636 = vpop.f32.mrf.mxu0
      %v4637 = vadd.f32 %v4509, %v4636
      %v4638 = vpop.f32.mrf.mxu0
      %4639 = vmatprep.mubr.bf16.mxu0 0
      %4640 = vmatmul.mubr.bf16.gmra.mxu0 %v4545
      %v4641 = vpop.f32.mrf.mxu0
      %v4642 = vadd.f32 %v4509, %v4641
      %v4643 = vpop.f32.mrf.mxu0
      %v4644 = vpop.f32.mrf.mxu0
      %v4645 = vadd.f32 %v4509, %v4644
      %v4646 = vpop.f32.mrf.mxu0
      %4647 = vmatprep.mubr.bf16.mxu0 0
      %4648 = vmatmul.mubr.bf16.gmra.mxu0 %v4548
      %v4649 = vpop.f32.mrf.mxu0
      %v4650 = vadd.f32 %v4509, %v4649
      %v4651 = vpop.f32.mrf.mxu0
      %v4652 = vpop.f32.mrf.mxu0
      %v4653 = vadd.f32 %v4509, %v4652
      %v4654 = vpop.f32.mrf.mxu0
      %4655 = vmatprep.mubr.bf16.mxu0 0
      %4656 = vmatmul.mubr.bf16.gmra.mxu0 %v4551
      %v4657 = vpop.f32.mrf.mxu0
      %v4658 = vadd.f32 %v4509, %v4657
      %v4659 = vpop.f32.mrf.mxu0
      %v4660 = vpop.f32.mrf.mxu0
      %v4661 = vadd.f32 %v4509, %v4660
      %v4662 = vpop.f32.mrf.mxu0
      %4663 = vmatprep.mubr.bf16.mxu0 0
      %4664 = vmatmul.mubr.bf16.gmra.mxu0 %v4554
      %v4665 = vpop.f32.mrf.mxu0
      %v4666 = vadd.f32 %v4509, %v4665
      %v4667 = vpop.f32.mrf.mxu0
      %v4668 = vpop.f32.mrf.mxu0
      %v4669 = vadd.f32 %v4509, %v4668
      %v4670 = vpop.f32.mrf.mxu0
      %4671 = vdwg.mxu0
      %4692 = vrot.lane.b32.xlu0 %v4594, 8
      %v4693 = vpop.permute.xlu0 %4692
      %4694 = vrot.lane.b32.xlu0 %v4597, 8
      %v4695 = vpop.permute.xlu0 %4694
      %4696 = vrot.lane.b32.xlu0 %v4602, 8
      %v4697 = vpop.permute.xlu0 %4696
      %4698 = vrot.lane.b32.xlu0 %v4605, 8
      %v4699 = vpop.permute.xlu0 %4698
      %4700 = vrot.lane.b32.xlu0 %v4610, 8
      %v4701 = vpop.permute.xlu0 %4700
      %4702 = vrot.lane.b32.xlu0 %v4613, 8
      %v4703 = vpop.permute.xlu0 %4702
      %4704 = vrot.lane.b32.xlu0 %v4618, 8
      %v4705 = vpop.permute.xlu0 %4704
      %4706 = vrot.lane.b32.xlu0 %v4621, 8
      %v4707 = vpop.permute.xlu0 %4706
      %4708 = vrot.lane.b32.xlu0 %v4626, 8
      %v4709 = vpop.permute.xlu0 %4708
      %4710 = vrot.lane.b32.xlu0 %v4629, 8
      %v4711 = vpop.permute.xlu0 %4710
      %4712 = vrot.lane.b32.xlu0 %v4634, 8
      %v4713 = vpop.permute.xlu0 %4712
      %4714 = vrot.lane.b32.xlu0 %v4637, 8
      %v4715 = vpop.permute.xlu0 %4714
      %4716 = vrot.lane.b32.xlu0 %v4642, 8
      %v4717 = vpop.permute.xlu0 %4716
      %4718 = vrot.lane.b32.xlu0 %v4645, 8
      %v4719 = vpop.permute.xlu0 %4718
      %4720 = vrot.lane.b32.xlu0 %v4650, 8
      %v4721 = vpop.permute.xlu0 %4720
      %4722 = vrot.lane.b32.xlu0 %v4653, 8
      %v4723 = vpop.permute.xlu0 %4722
      %4724 = vrot.lane.b32.xlu0 %v4658, 8
      %v4725 = vpop.permute.xlu0 %4724
      %4726 = vrot.lane.b32.xlu0 %v4661, 8
      %v4727 = vpop.permute.xlu0 %4726
      %4728 = vrot.lane.b32.xlu0 %v4666, 8
      %v4729 = vpop.permute.xlu0 %4728
      %4730 = vrot.lane.b32.xlu0 %v4669, 8
      %v4731 = vpop.permute.xlu0 %4730
      %v4752 = vsel %vm2651, %v3132, %v4693
      %v4753 = vsel %vm2651, %v3133, %v4695
      %v4754 = vsel %vm2651, %v3134, %v4697
      %v4755 = vsel %vm2651, %v3135, %v4699
      %v4756 = vsel %vm2651, %v3136, %v4701
      %v4757 = vsel %vm2651, %v3137, %v4703
      %v4758 = vsel %vm2651, %v3138, %v4705
      %v4759 = vsel %vm2651, %v3139, %v4707
      %v4760 = vsel %vm2651, %v3140, %v4709
      %v4761 = vsel %vm2651, %v3141, %v4711
      %v4762 = vsel %vm2651, %v3142, %v4713
      %v4763 = vsel %vm2651, %v3143, %v4715
      %v4764 = vsel %vm2651, %v3144, %v4717
      %v4765 = vsel %vm2651, %v3145, %v4719
      %v4766 = vsel %vm2651, %v3146, %v4721
      %v4767 = vsel %vm2651, %v3147, %v4723
      %v4768 = vsel %vm2651, %v3148, %v4725
      %v4769 = vsel %vm2651, %v3149, %v4727
      %v4770 = vsel %vm2651, %v3150, %v4729
      %v4771 = vsel %vm2651, %v3151, %v4731
      %v4772 = vld [vmem:[%s19] sm:$0x1]
      %v4774 = vlaneseq
      %v4775 = vshrl.u32 %v4774, 7
      %v4776 = vsub.s32 0, %v4775
      %v4777 = vrot.slane %v4772, %v4776
      %v4779 = vmul.f32 %v4752, %v4777
      %v4780 = vmul.f32 %v4753, %v4777
      %v4781 = vmul.f32 %v4754, %v4777
      %v4782 = vmul.f32 %v4755, %v4777
      %v4783 = vmul.f32 %v4756, %v4777
      %v4784 = vmul.f32 %v4757, %v4777
      %v4785 = vmul.f32 %v4758, %v4777
      %v4786 = vmul.f32 %v4759, %v4777
      %v4787 = vmul.f32 %v4760, %v4777
      %v4788 = vmul.f32 %v4761, %v4777
      %v4789 = vmul.f32 %v4762, %v4777
      %v4790 = vmul.f32 %v4763, %v4777
      %v4791 = vmul.f32 %v4764, %v4777
      %v4792 = vmul.f32 %v4765, %v4777
      %v4793 = vmul.f32 %v4766, %v4777
      %v4794 = vmul.f32 %v4767, %v4777
      %v4795 = vmul.f32 %v4768, %v4777
      %v4796 = vmul.f32 %v4769, %v4777
      %v4797 = vmul.f32 %v4770, %v4777
      %v4798 = vmul.f32 %v4771, %v4777
      %v4799 = vld [vmem:[%s20] sm:$0x1]
      %v4801 = vlaneseq
      %v4802 = vshrl.u32 %v4801, 7
      %v4803 = vsub.s32 0, %v4802
      %v4804 = vrot.slane %v4799, %v4803
      %v4806 = vadd.f32 %v4779, %v4804
      %v4807 = vadd.f32 %v4780, %v4804
      %v4808 = vadd.f32 %v4781, %v4804
      %v4809 = vadd.f32 %v4782, %v4804
      %v4810 = vadd.f32 %v4783, %v4804
      %v4811 = vadd.f32 %v4784, %v4804
      %v4812 = vadd.f32 %v4785, %v4804
      %v4813 = vadd.f32 %v4786, %v4804
      %v4814 = vadd.f32 %v4787, %v4804
      %v4815 = vadd.f32 %v4788, %v4804
      %v4816 = vadd.f32 %v4789, %v4804
      %v4817 = vadd.f32 %v4790, %v4804
      %v4818 = vadd.f32 %v4791, %v4804
      %v4819 = vadd.f32 %v4792, %v4804
      %v4820 = vadd.f32 %v4793, %v4804
      %v4821 = vadd.f32 %v4794, %v4804
      %v4822 = vadd.f32 %v4795, %v4804
      %v4823 = vadd.f32 %v4796, %v4804
      %v4824 = vadd.f32 %v4797, %v4804
      %v4825 = vadd.f32 %v4798, %v4804
      %v4826 = vmax.f32 %v4806, 0.0
      %v4827 = vmax.f32 %v4807, 0.0
      %v4828 = vmax.f32 %v4808, 0.0
      %v4829 = vmax.f32 %v4809, 0.0
      %v4830 = vmax.f32 %v4810, 0.0
      %v4831 = vmax.f32 %v4811, 0.0
      %v4832 = vmax.f32 %v4812, 0.0
      %v4833 = vmax.f32 %v4813, 0.0
      %v4834 = vmax.f32 %v4814, 0.0
      %v4835 = vmax.f32 %v4815, 0.0
      %v4836 = vmax.f32 %v4816, 0.0
      %v4837 = vmax.f32 %v4817, 0.0
      %v4838 = vmax.f32 %v4818, 0.0
      %v4839 = vmax.f32 %v4819, 0.0
      %v4840 = vmax.f32 %v4820, 0.0
      %v4841 = vmax.f32 %v4821, 0.0
      %v4842 = vmax.f32 %v4822, 0.0
      %v4843 = vmax.f32 %v4823, 0.0
      %v4844 = vmax.f32 %v4824, 0.0
      %v4845 = vmax.f32 %v4825, 0.0
      %v4846 = vpack.c.bf16 %v4827, %v4826
      %v4847 = vpack.c.bf16 %v4829, %v4828
      %v4848 = vpack.c.bf16 %v4831, %v4830
      %v4849 = vpack.c.bf16 %v4833, %v4832
      %v4850 = vpack.c.bf16 %v4835, %v4834
      %v4851 = vpack.c.bf16 %v4837, %v4836
      %v4852 = vpack.c.bf16 %v4839, %v4838
      %v4853 = vpack.c.bf16 %v4841, %v4840
      %v4854 = vpack.c.bf16 %v4843, %v4842
      %v4855 = vpack.c.bf16 %v4845, %v4844
      %v4856 = vld [vmem:[%s21] sm:$0xf]
      %v4857 = vld [vmem:[%s21 + $0x4] sm:$0x3]
      %v4858 = vld [vmem:[%s22] sm:$0x1]
      %v4860 = vlaneseq
      %v4861 = vshrl.u32 %v4860, 7
      %v4862 = vsub.s32 0, %v4861
      %v4863 = vrot.slane %v4858, %v4862
      %v4867 = vunpack.c.l.b16 %v4856
      %v4868 = vunpack.c.l.b16 %v4857
      %v4869 = vpack.c.b16 %v4868, %v4867
      %v4871 = vsel %vm2676, %v4846, 0
      %v4874 = vsel %vm2676, %v4847, 0
      %v4877 = vsel %vm2676, %v4848, 0
      %v4880 = vsel %vm2676, %v4849, 0
      %v4883 = vsel %vm2676, %v4850, 0
      %v4886 = vsel %vm2676, %v4851, 0
      %v4889 = vsel %vm2676, %v4852, 0
      %v4892 = vsel %vm2676, %v4853, 0
      %v4895 = vsel %vm2676, %v4854, 0
      %v4898 = vsel %vm2676, %v4855, 0
      %vm4900 = vcmask 1045504
      %v4902 = vsel %vm4900, %v4869, 0
      %4904 = vmatprep.subr.bf16.mxu0 0
      %4905 = vmatpush1.bf16.msra.mxu0 0
      %4906 = vmatprep.subr.bf16.mxu0 0
      %4907 = vmatpush1.bf16.msra.mxu0 0
      %4908 = vmatprep.subr.bf16.mxu0 0
      %4909 = vmatpush1.bf16.msra.mxu0 0
      %4910 = vmatprep.subr.bf16.mxu0 0
      %4911 = vmatpush1.bf16.msra.mxu0 0
      %4912 = vmatprep.subr.bf16.mxu0 0
      %4913 = vmatpush1.bf16.msra.mxu0 0
      %4914 = vmatprep.subr.bf16.mxu0 0
      %4915 = vmatpush1.bf16.msra.mxu0 0
      %4916 = vmatprep.subr.bf16.mxu0 0
      %4917 = vmatpush1.bf16.msra.mxu0 0
      %4918 = vmatprep.subr.bf16.mxu0 0
      %4919 = vmatpush1.bf16.msra.mxu0 %v4902
      %4920 = vmatprep.subr.bf16.mxu0 0
      %4921 = vmatpush2.bf16.msra.mxu0 0
      %4922 = vmatprep.subr.bf16.mxu0 0
      %4923 = vmatpush2.bf16.msra.mxu0 0
      %4924 = vmatprep.subr.bf16.mxu0 0
      %4925 = vmatpush2.bf16.msra.mxu0 0
      %4926 = vmatprep.subr.bf16.mxu0 0
      %4927 = vmatpush2.bf16.msra.mxu0 0
      %4928 = vmatprep.subr.bf16.mxu0 0
      %4929 = vmatpush2.bf16.msra.mxu0 0
      %4930 = vmatprep.subr.bf16.mxu0 0
      %4931 = vmatpush2.bf16.msra.mxu0 0
      %4932 = vmatprep.subr.bf16.mxu0 0
      %4933 = vmatpush2.bf16.msra.mxu0 0
      %4934 = vmatprep.subr.bf16.mxu0 0
      %4935 = vmatpush2.bf16.msra.mxu0 0
      %4936 = vmatprep.mubr.bf16.mxu0 0
      %4937 = vmatmul.mubr.bf16.gmra.mxu0 %v4871
      %v4938 = vpop.f32.mrf.mxu0
      %v4939 = vadd.f32 %v4863, %v4938
      %v4940 = vpop.f32.mrf.mxu0
      %v4941 = vpop.f32.mrf.mxu0
      %v4942 = vadd.f32 %v4863, %v4941
      %v4943 = vpop.f32.mrf.mxu0
      %4944 = vmatprep.mubr.bf16.mxu0 0
      %4945 = vmatmul.mubr.bf16.gmra.mxu0 %v4874
      %v4946 = vpop.f32.mrf.mxu0
      %v4947 = vadd.f32 %v4863, %v4946
      %v4948 = vpop.f32.mrf.mxu0
      %v4949 = vpop.f32.mrf.mxu0
      %v4950 = vadd.f32 %v4863, %v4949
      %v4951 = vpop.f32.mrf.mxu0
      %4952 = vmatprep.mubr.bf16.mxu0 0
      %4953 = vmatmul.mubr.bf16.gmra.mxu0 %v4877
      %v4954 = vpop.f32.mrf.mxu0
      %v4955 = vadd.f32 %v4863, %v4954
      %v4956 = vpop.f32.mrf.mxu0
      %v4957 = vpop.f32.mrf.mxu0
      %v4958 = vadd.f32 %v4863, %v4957
      %v4959 = vpop.f32.mrf.mxu0
      %4960 = vmatprep.mubr.bf16.mxu0 0
      %4961 = vmatmul.mubr.bf16.gmra.mxu0 %v4880
      %v4962 = vpop.f32.mrf.mxu0
      %v4963 = vadd.f32 %v4863, %v4962
      %v4964 = vpop.f32.mrf.mxu0
      %v4965 = vpop.f32.mrf.mxu0
      %v4966 = vadd.f32 %v4863, %v4965
      %v4967 = vpop.f32.mrf.mxu0
      %4968 = vmatprep.mubr.bf16.mxu0 0
      %4969 = vmatmul.mubr.bf16.gmra.mxu0 %v4883
      %v4970 = vpop.f32.mrf.mxu0
      %v4971 = vadd.f32 %v4863, %v4970
      %v4972 = vpop.f32.mrf.mxu0
      %v4973 = vpop.f32.mrf.mxu0
      %v4974 = vadd.f32 %v4863, %v4973
      %v4975 = vpop.f32.mrf.mxu0
      %4976 = vmatprep.mubr.bf16.mxu0 0
      %4977 = vmatmul.mubr.bf16.gmra.mxu0 %v4886
      %v4978 = vpop.f32.mrf.mxu0
      %v4979 = vadd.f32 %v4863, %v4978
      %v4980 = vpop.f32.mrf.mxu0
      %v4981 = vpop.f32.mrf.mxu0
      %v4982 = vadd.f32 %v4863, %v4981
      %v4983 = vpop.f32.mrf.mxu0
      %4984 = vmatprep.mubr.bf16.mxu0 0
      %4985 = vmatmul.mubr.bf16.gmra.mxu0 %v4889
      %v4986 = vpop.f32.mrf.mxu0
      %v4987 = vadd.f32 %v4863, %v4986
      %v4988 = vpop.f32.mrf.mxu0
      %v4989 = vpop.f32.mrf.mxu0
      %v4990 = vadd.f32 %v4863, %v4989
      %v4991 = vpop.f32.mrf.mxu0
      %4992 = vmatprep.mubr.bf16.mxu0 0
      %4993 = vmatmul.mubr.bf16.gmra.mxu0 %v4892
      %v4994 = vpop.f32.mrf.mxu0
      %v4995 = vadd.f32 %v4863, %v4994
      %v4996 = vpop.f32.mrf.mxu0
      %v4997 = vpop.f32.mrf.mxu0
      %v4998 = vadd.f32 %v4863, %v4997
      %v4999 = vpop.f32.mrf.mxu0
      %5000 = vmatprep.mubr.bf16.mxu0 0
      %5001 = vmatmul.mubr.bf16.gmra.mxu0 %v4895
      %v5002 = vpop.f32.mrf.mxu0
      %v5003 = vadd.f32 %v4863, %v5002
      %v5004 = vpop.f32.mrf.mxu0
      %v5005 = vpop.f32.mrf.mxu0
      %v5006 = vadd.f32 %v4863, %v5005
      %v5007 = vpop.f32.mrf.mxu0
      %5008 = vmatprep.mubr.bf16.mxu0 0
      %5009 = vmatmul.mubr.bf16.gmra.mxu0 %v4898
      %v5010 = vpop.f32.mrf.mxu0
      %v5011 = vadd.f32 %v4863, %v5010
      %v5012 = vpop.f32.mrf.mxu0
      %v5013 = vpop.f32.mrf.mxu0
      %v5014 = vadd.f32 %v4863, %v5013
      %v5015 = vpop.f32.mrf.mxu0
      %5016 = vdwg.mxu0
      %v5017 = vmax.f32 %v4939, 0.0
      %v5018 = vmax.f32 %v4942, 0.0
      %v5019 = vmax.f32 %v4947, 0.0
      %v5020 = vmax.f32 %v4950, 0.0
      %v5021 = vmax.f32 %v4955, 0.0
      %v5022 = vmax.f32 %v4958, 0.0
      %v5023 = vmax.f32 %v4963, 0.0
      %v5024 = vmax.f32 %v4966, 0.0
      %v5025 = vmax.f32 %v4971, 0.0
      %v5026 = vmax.f32 %v4974, 0.0
      %v5027 = vmax.f32 %v4979, 0.0
      %v5028 = vmax.f32 %v4982, 0.0
      %v5029 = vmax.f32 %v4987, 0.0
      %v5030 = vmax.f32 %v4990, 0.0
      %v5031 = vmax.f32 %v4995, 0.0
      %v5032 = vmax.f32 %v4998, 0.0
      %v5033 = vmax.f32 %v5003, 0.0
      %v5034 = vmax.f32 %v5006, 0.0
      %v5035 = vmax.f32 %v5011, 0.0
      %v5036 = vmax.f32 %v5014, 0.0
      %v5037 = vmul.f32 %v5017, %v1570
      %v5038 = vmul.f32 %v5018, %v1570
      %v5039 = vmul.f32 %v5035, %v1577
      %v5040 = vmul.f32 %v5036, %v1577
      %5041 = vst.msk [vmem:[#allocation2] sm:$0x1] %vm1584, 0.0
      %5042 = vst.msk [vmem:[#allocation2 + $0x18] sm:$0x1] %vm1584, 0.0
      %5043 = vst.msk [vmem:[#allocation2 + $0x30] sm:$0x1] %vm1584, 0.0
      %5044 = vst.msk [vmem:[#allocation2 + $0x48] sm:$0x1] %vm1584, 0.0
      %5045 = vst.msk [vmem:[#allocation2 + $0x60] sm:$0x1] %vm1584, 0.0
      %5046 = vst.msk [vmem:[#allocation2 + $0x78] sm:$0x1] %vm1584, 0.0
      %5047 = vst.msk [vmem:[#allocation2 + $0x90] sm:$0x1] %vm1584, 0.0
      %5048 = vst.msk [vmem:[#allocation2 + $0xa8] sm:$0x1] %vm1584, 0.0
      %5049 = vst.msk [vmem:[#allocation2 + $0xc0] sm:$0x1] %vm1584, 0.0
      %5050 = vst.msk [vmem:[#allocation2 + $0xd8] sm:$0x1] %vm1584, 0.0
      %5051 = vst.msk [vmem:[#allocation2 + $0x11] sm:$0x1] %vm1584, 0.0
      %5052 = vst.msk [vmem:[#allocation2 + $0x29] sm:$0x1] %vm1584, 0.0
      %5053 = vst.msk [vmem:[#allocation2 + $0x41] sm:$0x1] %vm1584, 0.0
      %5054 = vst.msk [vmem:[#allocation2 + $0x59] sm:$0x1] %vm1584, 0.0
      %5055 = vst.msk [vmem:[#allocation2 + $0x71] sm:$0x1] %vm1584, 0.0
      %5056 = vst.msk [vmem:[#allocation2 + $0x89] sm:$0x1] %vm1584, 0.0
      %5057 = vst.msk [vmem:[#allocation2 + $0xa1] sm:$0x1] %vm1584, 0.0
      %5058 = vst.msk [vmem:[#allocation2 + $0xb9] sm:$0x1] %vm1584, 0.0
      %5059 = vst.msk [vmem:[#allocation2 + $0xd1] sm:$0x1] %vm1584, 0.0
      %5060 = vst.msk [vmem:[#allocation2 + $0xe9] sm:$0x1] %vm1584, 0.0
      %5061 = vst.msk [vmem:[#allocation2 + $0x1] sm:$0xff] %vm1350, %v5037
      %5062 = vst.msk [vmem:[#allocation2 + $0x9] sm:$0xff] %vm1350, %v5038
      %5063 = vst.msk [vmem:[#allocation2 + $0x19] sm:$0xff] %vm1350, %v5019
      %5064 = vst.msk [vmem:[#allocation2 + $0x21] sm:$0xff] %vm1350, %v5020
      %5065 = vst.msk [vmem:[#allocation2 + $0x31] sm:$0xff] %vm1350, %v5021
      %5066 = vst.msk [vmem:[#allocation2 + $0x39] sm:$0xff] %vm1350, %v5022
      %5067 = vst.msk [vmem:[#allocation2 + $0x49] sm:$0xff] %vm1350, %v5023
      %5068 = vst.msk [vmem:[#allocation2 + $0x51] sm:$0xff] %vm1350, %v5024
      %5069 = vst.msk [vmem:[#allocation2 + $0x61] sm:$0xff] %vm1350, %v5025
      %5070 = vst.msk [vmem:[#allocation2 + $0x69] sm:$0xff] %vm1350, %v5026
      %5071 = vst.msk [vmem:[#allocation2 + $0x79] sm:$0xff] %vm1350, %v5027
      %5072 = vst.msk [vmem:[#allocation2 + $0x81] sm:$0xff] %vm1350, %v5028
      %5073 = vst.msk [vmem:[#allocation2 + $0x91] sm:$0xff] %vm1350, %v5029
      %5074 = vst.msk [vmem:[#allocation2 + $0x99] sm:$0xff] %vm1350, %v5030
      %5075 = vst.msk [vmem:[#allocation2 + $0xa9] sm:$0xff] %vm1350, %v5031
      %5076 = vst.msk [vmem:[#allocation2 + $0xb1] sm:$0xff] %vm1350, %v5032
      %5077 = vst.msk [vmem:[#allocation2 + $0xc1] sm:$0xff] %vm1350, %v5033
      %5078 = vst.msk [vmem:[#allocation2 + $0xc9] sm:$0xff] %vm1350, %v5034
      %5079 = vst.msk [vmem:[#allocation2 + $0xd9] sm:$0xff] %vm1350, %v5039
      %5080 = vst.msk [vmem:[#allocation2 + $0xe1] sm:$0xff] %vm1350, %v5040
      %v5081 = vld [vmem:[#allocation2] sm:$0xff]
      %v5082 = vld [vmem:[#allocation2 + $0x8] sm:$0xff]
      %v5083 = vld [vmem:[#allocation2 + $0x18] sm:$0xff]
      %v5084 = vld [vmem:[#allocation2 + $0x20] sm:$0xff]
      %v5085 = vld [vmem:[#allocation2 + $0x30] sm:$0xff]
      %v5086 = vld [vmem:[#allocation2 + $0x38] sm:$0xff]
      %v5087 = vld [vmem:[#allocation2 + $0x48] sm:$0xff]
      %v5088 = vld [vmem:[#allocation2 + $0x50] sm:$0xff]
      %v5089 = vld [vmem:[#allocation2 + $0x60] sm:$0xff]
      %v5090 = vld [vmem:[#allocation2 + $0x68] sm:$0xff]
      %v5091 = vld [vmem:[#allocation2 + $0x78] sm:$0xff]
      %v5092 = vld [vmem:[#allocation2 + $0x80] sm:$0xff]
      %v5093 = vld [vmem:[#allocation2 + $0x90] sm:$0xff]
      %v5094 = vld [vmem:[#allocation2 + $0x98] sm:$0xff]
      %v5095 = vld [vmem:[#allocation2 + $0xa8] sm:$0xff]
      %v5096 = vld [vmem:[#allocation2 + $0xb0] sm:$0xff]
      %v5097 = vld [vmem:[#allocation2 + $0x1] sm:$0xff]
      %v5098 = vld [vmem:[#allocation2 + $0x9] sm:$0xff]
      %v5099 = vld [vmem:[#allocation2 + $0x19] sm:$0xff]
      %v5100 = vld [vmem:[#allocation2 + $0x21] sm:$0xff]
      %v5101 = vld [vmem:[#allocation2 + $0x31] sm:$0xff]
      %v5102 = vld [vmem:[#allocation2 + $0x39] sm:$0xff]
      %v5103 = vld [vmem:[#allocation2 + $0x49] sm:$0xff]
      %v5104 = vld [vmem:[#allocation2 + $0x51] sm:$0xff]
      %v5105 = vld [vmem:[#allocation2 + $0x61] sm:$0xff]
      %v5106 = vld [vmem:[#allocation2 + $0x69] sm:$0xff]
      %v5107 = vld [vmem:[#allocation2 + $0x79] sm:$0xff]
      %v5108 = vld [vmem:[#allocation2 + $0x81] sm:$0xff]
      %v5109 = vld [vmem:[#allocation2 + $0x91] sm:$0xff]
      %v5110 = vld [vmem:[#allocation2 + $0x99] sm:$0xff]
      %v5111 = vld [vmem:[#allocation2 + $0xa9] sm:$0xff]
      %v5112 = vld [vmem:[#allocation2 + $0xb1] sm:$0xff]
      %v5113 = vld [vmem:[#allocation2 + $0x2] sm:$0xff]
      %v5114 = vld [vmem:[#allocation2 + $0xa] sm:$0xff]
      %v5115 = vld [vmem:[#allocation2 + $0x1a] sm:$0xff]
      %v5116 = vld [vmem:[#allocation2 + $0x22] sm:$0xff]
      %v5117 = vld [vmem:[#allocation2 + $0x32] sm:$0xff]
      %v5118 = vld [vmem:[#allocation2 + $0x3a] sm:$0xff]
      %v5119 = vld [vmem:[#allocation2 + $0x4a] sm:$0xff]
      %v5120 = vld [vmem:[#allocation2 + $0x52] sm:$0xff]
      %v5121 = vld [vmem:[#allocation2 + $0x62] sm:$0xff]
      %v5122 = vld [vmem:[#allocation2 + $0x6a] sm:$0xff]
      %v5123 = vld [vmem:[#allocation2 + $0x7a] sm:$0xff]
      %v5124 = vld [vmem:[#allocation2 + $0x82] sm:$0xff]
      %v5125 = vld [vmem:[#allocation2 + $0x92] sm:$0xff]
      %v5126 = vld [vmem:[#allocation2 + $0x9a] sm:$0xff]
      %v5127 = vld [vmem:[#allocation2 + $0xaa] sm:$0xff]
      %v5128 = vld [vmem:[#allocation2 + $0xb2] sm:$0xff]
      %v5129 = vld [vmem:[%s1713] sm:$0xff]
      %v5130 = vld [vmem:[%s1713 + $0x8] sm:$0xff]
      %v5131 = vld [vmem:[%s1713 + $0x18] sm:$0xff]
      %v5132 = vld [vmem:[%s1713 + $0x20] sm:$0xff]
      %v5133 = vld [vmem:[%s1713 + $0x30] sm:$0xff]
      %v5134 = vld [vmem:[%s1713 + $0x38] sm:$0xff]
      %v5135 = vld [vmem:[%s1713 + $0x48] sm:$0xff]
      %v5136 = vld [vmem:[%s1713 + $0x50] sm:$0xff]
      %v5137 = vld [vmem:[%s1713 + $0x60] sm:$0xff]
      %v5138 = vld [vmem:[%s1713 + $0x68] sm:$0xff]
      %v5139 = vld [vmem:[%s1713 + $0x78] sm:$0xff]
      %v5140 = vld [vmem:[%s1713 + $0x80] sm:$0xff]
      %v5141 = vld [vmem:[%s1713 + $0x90] sm:$0xff]
      %v5142 = vld [vmem:[%s1713 + $0x98] sm:$0xff]
      %v5143 = vld [vmem:[%s1713 + $0xa8] sm:$0xff]
      %v5144 = vld [vmem:[%s1713 + $0xb0] sm:$0xff]
      %v5145 = vld [vmem:[%s1713 + $0x1] sm:$0xff]
      %v5146 = vld [vmem:[%s1713 + $0x9] sm:$0xff]
      %v5147 = vld [vmem:[%s1713 + $0x19] sm:$0xff]
      %v5148 = vld [vmem:[%s1713 + $0x21] sm:$0xff]
      %v5149 = vld [vmem:[%s1713 + $0x31] sm:$0xff]
      %v5150 = vld [vmem:[%s1713 + $0x39] sm:$0xff]
      %v5151 = vld [vmem:[%s1713 + $0x49] sm:$0xff]
      %v5152 = vld [vmem:[%s1713 + $0x51] sm:$0xff]
      %v5153 = vld [vmem:[%s1713 + $0x61] sm:$0xff]
      %v5154 = vld [vmem:[%s1713 + $0x69] sm:$0xff]
      %v5155 = vld [vmem:[%s1713 + $0x79] sm:$0xff]
      %v5156 = vld [vmem:[%s1713 + $0x81] sm:$0xff]
      %v5157 = vld [vmem:[%s1713 + $0x91] sm:$0xff]
      %v5158 = vld [vmem:[%s1713 + $0x99] sm:$0xff]
      %v5159 = vld [vmem:[%s1713 + $0xa9] sm:$0xff]
      %v5160 = vld [vmem:[%s1713 + $0xb1] sm:$0xff]
      %v5161 = vld [vmem:[%s1713 + $0x2] sm:$0xff]
      %v5162 = vld [vmem:[%s1713 + $0xa] sm:$0xff]
      %v5163 = vld [vmem:[%s1713 + $0x1a] sm:$0xff]
      %v5164 = vld [vmem:[%s1713 + $0x22] sm:$0xff]
      %v5165 = vld [vmem:[%s1713 + $0x32] sm:$0xff]
      %v5166 = vld [vmem:[%s1713 + $0x3a] sm:$0xff]
      %v5167 = vld [vmem:[%s1713 + $0x4a] sm:$0xff]
      %v5168 = vld [vmem:[%s1713 + $0x52] sm:$0xff]
      %v5169 = vld [vmem:[%s1713 + $0x62] sm:$0xff]
      %v5170 = vld [vmem:[%s1713 + $0x6a] sm:$0xff]
      %v5171 = vld [vmem:[%s1713 + $0x7a] sm:$0xff]
      %v5172 = vld [vmem:[%s1713 + $0x82] sm:$0xff]
      %v5173 = vld [vmem:[%s1713 + $0x92] sm:$0xff]
      %v5174 = vld [vmem:[%s1713 + $0x9a] sm:$0xff]
      %v5175 = vld [vmem:[%s1713 + $0xaa] sm:$0xff]
      %v5176 = vld [vmem:[%s1713 + $0xb2] sm:$0xff]
      %v5177 = vld [vmem:[%s1786] sm:$0xff]
      %v5178 = vld [vmem:[%s1786 + $0x8] sm:$0xff]
      %v5179 = vld [vmem:[%s1786 + $0x18] sm:$0xff]
      %v5180 = vld [vmem:[%s1786 + $0x20] sm:$0xff]
      %v5181 = vld [vmem:[%s1786 + $0x30] sm:$0xff]
      %v5182 = vld [vmem:[%s1786 + $0x38] sm:$0xff]
      %v5183 = vld [vmem:[%s1786 + $0x48] sm:$0xff]
      %v5184 = vld [vmem:[%s1786 + $0x50] sm:$0xff]
      %v5185 = vld [vmem:[%s1786 + $0x60] sm:$0xff]
      %v5186 = vld [vmem:[%s1786 + $0x68] sm:$0xff]
      %v5187 = vld [vmem:[%s1786 + $0x78] sm:$0xff]
      %v5188 = vld [vmem:[%s1786 + $0x80] sm:$0xff]
      %v5189 = vld [vmem:[%s1786 + $0x90] sm:$0xff]
      %v5190 = vld [vmem:[%s1786 + $0x98] sm:$0xff]
      %v5191 = vld [vmem:[%s1786 + $0xa8] sm:$0xff]
      %v5192 = vld [vmem:[%s1786 + $0xb0] sm:$0xff]
      %v5193 = vld [vmem:[%s1786 + $0x1] sm:$0xff]
      %v5194 = vld [vmem:[%s1786 + $0x9] sm:$0xff]
      %v5195 = vld [vmem:[%s1786 + $0x19] sm:$0xff]
      %v5196 = vld [vmem:[%s1786 + $0x21] sm:$0xff]
      %v5197 = vld [vmem:[%s1786 + $0x31] sm:$0xff]
      %v5198 = vld [vmem:[%s1786 + $0x39] sm:$0xff]
      %v5199 = vld [vmem:[%s1786 + $0x49] sm:$0xff]
      %v5200 = vld [vmem:[%s1786 + $0x51] sm:$0xff]
      %v5201 = vld [vmem:[%s1786 + $0x61] sm:$0xff]
      %v5202 = vld [vmem:[%s1786 + $0x69] sm:$0xff]
      %v5203 = vld [vmem:[%s1786 + $0x79] sm:$0xff]
      %v5204 = vld [vmem:[%s1786 + $0x81] sm:$0xff]
      %v5205 = vld [vmem:[%s1786 + $0x91] sm:$0xff]
      %v5206 = vld [vmem:[%s1786 + $0x99] sm:$0xff]
      %v5207 = vld [vmem:[%s1786 + $0xa9] sm:$0xff]
      %v5208 = vld [vmem:[%s1786 + $0xb1] sm:$0xff]
      %v5209 = vld [vmem:[%s1786 + $0x2] sm:$0xff]
      %v5210 = vld [vmem:[%s1786 + $0xa] sm:$0xff]
      %v5211 = vld [vmem:[%s1786 + $0x1a] sm:$0xff]
      %v5212 = vld [vmem:[%s1786 + $0x22] sm:$0xff]
      %v5213 = vld [vmem:[%s1786 + $0x32] sm:$0xff]
      %v5214 = vld [vmem:[%s1786 + $0x3a] sm:$0xff]
      %v5215 = vld [vmem:[%s1786 + $0x4a] sm:$0xff]
      %v5216 = vld [vmem:[%s1786 + $0x52] sm:$0xff]
      %v5217 = vld [vmem:[%s1786 + $0x62] sm:$0xff]
      %v5218 = vld [vmem:[%s1786 + $0x6a] sm:$0xff]
      %v5219 = vld [vmem:[%s1786 + $0x7a] sm:$0xff]
      %v5220 = vld [vmem:[%s1786 + $0x82] sm:$0xff]
      %v5221 = vld [vmem:[%s1786 + $0x92] sm:$0xff]
      %v5222 = vld [vmem:[%s1786 + $0x9a] sm:$0xff]
      %v5223 = vld [vmem:[%s1786 + $0xaa] sm:$0xff]
      %v5224 = vld [vmem:[%s1786 + $0xb2] sm:$0xff]
      %5241 = vrot.lane.b32.xlu0 %v5097, 4
      %v5242 = vpop.permute.xlu0 %5241
      %5243 = vrot.lane.b32.xlu0 %v5098, 4
      %v5244 = vpop.permute.xlu0 %5243
      %5245 = vrot.lane.b32.xlu0 %v5099, 4
      %v5246 = vpop.permute.xlu0 %5245
      %5247 = vrot.lane.b32.xlu0 %v5100, 4
      %v5248 = vpop.permute.xlu0 %5247
      %5249 = vrot.lane.b32.xlu0 %v5101, 4
      %v5250 = vpop.permute.xlu0 %5249
      %5251 = vrot.lane.b32.xlu0 %v5102, 4
      %v5252 = vpop.permute.xlu0 %5251
      %5253 = vrot.lane.b32.xlu0 %v5103, 4
      %v5254 = vpop.permute.xlu0 %5253
      %5255 = vrot.lane.b32.xlu0 %v5104, 4
      %v5256 = vpop.permute.xlu0 %5255
      %5257 = vrot.lane.b32.xlu0 %v5105, 4
      %v5258 = vpop.permute.xlu0 %5257
      %5259 = vrot.lane.b32.xlu0 %v5106, 4
      %v5260 = vpop.permute.xlu0 %5259
      %5261 = vrot.lane.b32.xlu0 %v5107, 4
      %v5262 = vpop.permute.xlu0 %5261
      %5263 = vrot.lane.b32.xlu0 %v5108, 4
      %v5264 = vpop.permute.xlu0 %5263
      %5265 = vrot.lane.b32.xlu0 %v5109, 4
      %v5266 = vpop.permute.xlu0 %5265
      %5267 = vrot.lane.b32.xlu0 %v5110, 4
      %v5268 = vpop.permute.xlu0 %5267
      %5269 = vrot.lane.b32.xlu0 %v5111, 4
      %v5270 = vpop.permute.xlu0 %5269
      %5271 = vrot.lane.b32.xlu0 %v5112, 4
      %v5272 = vpop.permute.xlu0 %5271
      %5305 = vrot.lane.b32.xlu0 %v5113, 8
      %v5306 = vpop.permute.xlu0 %5305
      %5307 = vrot.lane.b32.xlu0 %v5114, 8
      %v5308 = vpop.permute.xlu0 %5307
      %5309 = vrot.lane.b32.xlu0 %v5115, 8
      %v5310 = vpop.permute.xlu0 %5309
      %5311 = vrot.lane.b32.xlu0 %v5116, 8
      %v5312 = vpop.permute.xlu0 %5311
      %5313 = vrot.lane.b32.xlu0 %v5117, 8
      %v5314 = vpop.permute.xlu0 %5313
      %5315 = vrot.lane.b32.xlu0 %v5118, 8
      %v5316 = vpop.permute.xlu0 %5315
      %5317 = vrot.lane.b32.xlu0 %v5119, 8
      %v5318 = vpop.permute.xlu0 %5317
      %5319 = vrot.lane.b32.xlu0 %v5120, 8
      %v5320 = vpop.permute.xlu0 %5319
      %5321 = vrot.lane.b32.xlu0 %v5121, 8
      %v5322 = vpop.permute.xlu0 %5321
      %5323 = vrot.lane.b32.xlu0 %v5122, 8
      %v5324 = vpop.permute.xlu0 %5323
      %5325 = vrot.lane.b32.xlu0 %v5123, 8
      %v5326 = vpop.permute.xlu0 %5325
      %5327 = vrot.lane.b32.xlu0 %v5124, 8
      %v5328 = vpop.permute.xlu0 %5327
      %5329 = vrot.lane.b32.xlu0 %v5125, 8
      %v5330 = vpop.permute.xlu0 %5329
      %5331 = vrot.lane.b32.xlu0 %v5126, 8
      %v5332 = vpop.permute.xlu0 %5331
      %5333 = vrot.lane.b32.xlu0 %v5127, 8
      %v5334 = vpop.permute.xlu0 %5333
      %5335 = vrot.lane.b32.xlu0 %v5128, 8
      %v5336 = vpop.permute.xlu0 %5335
      %5369 = vrot.lane.b32.xlu0 %v5129, 12
      %v5370 = vpop.permute.xlu0 %5369
      %5371 = vrot.lane.b32.xlu0 %v5130, 12
      %v5372 = vpop.permute.xlu0 %5371
      %5373 = vrot.lane.b32.xlu0 %v5131, 12
      %v5374 = vpop.permute.xlu0 %5373
      %5375 = vrot.lane.b32.xlu0 %v5132, 12
      %v5376 = vpop.permute.xlu0 %5375
      %5377 = vrot.lane.b32.xlu0 %v5133, 12
      %v5378 = vpop.permute.xlu0 %5377
      %5379 = vrot.lane.b32.xlu0 %v5134, 12
      %v5380 = vpop.permute.xlu0 %5379
      %5381 = vrot.lane.b32.xlu0 %v5135, 12
      %v5382 = vpop.permute.xlu0 %5381
      %5383 = vrot.lane.b32.xlu0 %v5136, 12
      %v5384 = vpop.permute.xlu0 %5383
      %5385 = vrot.lane.b32.xlu0 %v5137, 12
      %v5386 = vpop.permute.xlu0 %5385
      %5387 = vrot.lane.b32.xlu0 %v5138, 12
      %v5388 = vpop.permute.xlu0 %5387
      %5389 = vrot.lane.b32.xlu0 %v5139, 12
      %v5390 = vpop.permute.xlu0 %5389
      %5391 = vrot.lane.b32.xlu0 %v5140, 12
      %v5392 = vpop.permute.xlu0 %5391
      %5393 = vrot.lane.b32.xlu0 %v5141, 12
      %v5394 = vpop.permute.xlu0 %5393
      %5395 = vrot.lane.b32.xlu0 %v5142, 12
      %v5396 = vpop.permute.xlu0 %5395
      %5397 = vrot.lane.b32.xlu0 %v5143, 12
      %v5398 = vpop.permute.xlu0 %5397
      %5399 = vrot.lane.b32.xlu0 %v5144, 12
      %v5400 = vpop.permute.xlu0 %5399
      %5433 = vrot.lane.b32.xlu0 %v5145, 16
      %v5434 = vpop.permute.xlu0 %5433
      %5435 = vrot.lane.b32.xlu0 %v5146, 16
      %v5436 = vpop.permute.xlu0 %5435
      %5437 = vrot.lane.b32.xlu0 %v5147, 16
      %v5438 = vpop.permute.xlu0 %5437
      %5439 = vrot.lane.b32.xlu0 %v5148, 16
      %v5440 = vpop.permute.xlu0 %5439
      %5441 = vrot.lane.b32.xlu0 %v5149, 16
      %v5442 = vpop.permute.xlu0 %5441
      %5443 = vrot.lane.b32.xlu0 %v5150, 16
      %v5444 = vpop.permute.xlu0 %5443
      %5445 = vrot.lane.b32.xlu0 %v5151, 16
      %v5446 = vpop.permute.xlu0 %5445
      %5447 = vrot.lane.b32.xlu0 %v5152, 16
      %v5448 = vpop.permute.xlu0 %5447
      %5449 = vrot.lane.b32.xlu0 %v5153, 16
      %v5450 = vpop.permute.xlu0 %5449
      %5451 = vrot.lane.b32.xlu0 %v5154, 16
      %v5452 = vpop.permute.xlu0 %5451
      %5453 = vrot.lane.b32.xlu0 %v5155, 16
      %v5454 = vpop.permute.xlu0 %5453
      %5455 = vrot.lane.b32.xlu0 %v5156, 16
      %v5456 = vpop.permute.xlu0 %5455
      %5457 = vrot.lane.b32.xlu0 %v5157, 16
      %v5458 = vpop.permute.xlu0 %5457
      %5459 = vrot.lane.b32.xlu0 %v5158, 16
      %v5460 = vpop.permute.xlu0 %5459
      %5461 = vrot.lane.b32.xlu0 %v5159, 16
      %v5462 = vpop.permute.xlu0 %5461
      %5463 = vrot.lane.b32.xlu0 %v5160, 16
      %v5464 = vpop.permute.xlu0 %5463
      %5497 = vrot.lane.b32.xlu0 %v5161, 20
      %v5498 = vpop.permute.xlu0 %5497
      %5499 = vrot.lane.b32.xlu0 %v5162, 20
      %v5500 = vpop.permute.xlu0 %5499
      %5501 = vrot.lane.b32.xlu0 %v5163, 20
      %v5502 = vpop.permute.xlu0 %5501
      %5503 = vrot.lane.b32.xlu0 %v5164, 20
      %v5504 = vpop.permute.xlu0 %5503
      %5505 = vrot.lane.b32.xlu0 %v5165, 20
      %v5506 = vpop.permute.xlu0 %5505
      %5507 = vrot.lane.b32.xlu0 %v5166, 20
      %v5508 = vpop.permute.xlu0 %5507
      %5509 = vrot.lane.b32.xlu0 %v5167, 20
      %v5510 = vpop.permute.xlu0 %5509
      %5511 = vrot.lane.b32.xlu0 %v5168, 20
      %v5512 = vpop.permute.xlu0 %5511
      %5513 = vrot.lane.b32.xlu0 %v5169, 20
      %v5514 = vpop.permute.xlu0 %5513
      %5515 = vrot.lane.b32.xlu0 %v5170, 20
      %v5516 = vpop.permute.xlu0 %5515
      %5517 = vrot.lane.b32.xlu0 %v5171, 20
      %v5518 = vpop.permute.xlu0 %5517
      %5519 = vrot.lane.b32.xlu0 %v5172, 20
      %v5520 = vpop.permute.xlu0 %5519
      %5521 = vrot.lane.b32.xlu0 %v5173, 20
      %v5522 = vpop.permute.xlu0 %5521
      %5523 = vrot.lane.b32.xlu0 %v5174, 20
      %v5524 = vpop.permute.xlu0 %5523
      %5525 = vrot.lane.b32.xlu0 %v5175, 20
      %v5526 = vpop.permute.xlu0 %5525
      %5527 = vrot.lane.b32.xlu0 %v5176, 20
      %v5528 = vpop.permute.xlu0 %5527
      %5561 = vrot.lane.b32.xlu0 %v5177, 24
      %v5562 = vpop.permute.xlu0 %5561
      %5563 = vrot.lane.b32.xlu0 %v5178, 24
      %v5564 = vpop.permute.xlu0 %5563
      %5565 = vrot.lane.b32.xlu0 %v5179, 24
      %v5566 = vpop.permute.xlu0 %5565
      %5567 = vrot.lane.b32.xlu0 %v5180, 24
      %v5568 = vpop.permute.xlu0 %5567
      %5569 = vrot.lane.b32.xlu0 %v5181, 24
      %v5570 = vpop.permute.xlu0 %5569
      %5571 = vrot.lane.b32.xlu0 %v5182, 24
      %v5572 = vpop.permute.xlu0 %5571
      %5573 = vrot.lane.b32.xlu0 %v5183, 24
      %v5574 = vpop.permute.xlu0 %5573
      %5575 = vrot.lane.b32.xlu0 %v5184, 24
      %v5576 = vpop.permute.xlu0 %5575
      %5577 = vrot.lane.b32.xlu0 %v5185, 24
      %v5578 = vpop.permute.xlu0 %5577
      %5579 = vrot.lane.b32.xlu0 %v5186, 24
      %v5580 = vpop.permute.xlu0 %5579
      %5581 = vrot.lane.b32.xlu0 %v5187, 24
      %v5582 = vpop.permute.xlu0 %5581
      %5583 = vrot.lane.b32.xlu0 %v5188, 24
      %v5584 = vpop.permute.xlu0 %5583
      %5585 = vrot.lane.b32.xlu0 %v5189, 24
      %v5586 = vpop.permute.xlu0 %5585
      %5587 = vrot.lane.b32.xlu0 %v5190, 24
      %v5588 = vpop.permute.xlu0 %5587
      %5589 = vrot.lane.b32.xlu0 %v5191, 24
      %v5590 = vpop.permute.xlu0 %5589
      %5591 = vrot.lane.b32.xlu0 %v5192, 24
      %v5592 = vpop.permute.xlu0 %5591
      %5625 = vrot.lane.b32.xlu0 %v5193, 28
      %v5626 = vpop.permute.xlu0 %5625
      %5627 = vrot.lane.b32.xlu0 %v5194, 28
      %v5628 = vpop.permute.xlu0 %5627
      %5629 = vrot.lane.b32.xlu0 %v5195, 28
      %v5630 = vpop.permute.xlu0 %5629
      %5631 = vrot.lane.b32.xlu0 %v5196, 28
      %v5632 = vpop.permute.xlu0 %5631
      %5633 = vrot.lane.b32.xlu0 %v5197, 28
      %v5634 = vpop.permute.xlu0 %5633
      %5635 = vrot.lane.b32.xlu0 %v5198, 28
      %v5636 = vpop.permute.xlu0 %5635
      %5637 = vrot.lane.b32.xlu0 %v5199, 28
      %v5638 = vpop.permute.xlu0 %5637
      %5639 = vrot.lane.b32.xlu0 %v5200, 28
      %v5640 = vpop.permute.xlu0 %5639
      %5641 = vrot.lane.b32.xlu0 %v5201, 28
      %v5642 = vpop.permute.xlu0 %5641
      %5643 = vrot.lane.b32.xlu0 %v5202, 28
      %v5644 = vpop.permute.xlu0 %5643
      %5645 = vrot.lane.b32.xlu0 %v5203, 28
      %v5646 = vpop.permute.xlu0 %5645
      %5647 = vrot.lane.b32.xlu0 %v5204, 28
      %v5648 = vpop.permute.xlu0 %5647
      %5649 = vrot.lane.b32.xlu0 %v5205, 28
      %v5650 = vpop.permute.xlu0 %5649
      %5651 = vrot.lane.b32.xlu0 %v5206, 28
      %v5652 = vpop.permute.xlu0 %5651
      %5653 = vrot.lane.b32.xlu0 %v5207, 28
      %v5654 = vpop.permute.xlu0 %5653
      %5655 = vrot.lane.b32.xlu0 %v5208, 28
      %v5656 = vpop.permute.xlu0 %5655
      %5689 = vrot.lane.b32.xlu0 %v5209, 32
      %v5690 = vpop.permute.xlu0 %5689
      %5691 = vrot.lane.b32.xlu0 %v5210, 32
      %v5692 = vpop.permute.xlu0 %5691
      %5693 = vrot.lane.b32.xlu0 %v5211, 32
      %v5694 = vpop.permute.xlu0 %5693
      %5695 = vrot.lane.b32.xlu0 %v5212, 32
      %v5696 = vpop.permute.xlu0 %5695
      %5697 = vrot.lane.b32.xlu0 %v5213, 32
      %v5698 = vpop.permute.xlu0 %5697
      %5699 = vrot.lane.b32.xlu0 %v5214, 32
      %v5700 = vpop.permute.xlu0 %5699
      %5701 = vrot.lane.b32.xlu0 %v5215, 32
      %v5702 = vpop.permute.xlu0 %5701
      %5703 = vrot.lane.b32.xlu0 %v5216, 32
      %v5704 = vpop.permute.xlu0 %5703
      %5705 = vrot.lane.b32.xlu0 %v5217, 32
      %v5706 = vpop.permute.xlu0 %5705
      %5707 = vrot.lane.b32.xlu0 %v5218, 32
      %v5708 = vpop.permute.xlu0 %5707
      %5709 = vrot.lane.b32.xlu0 %v5219, 32
      %v5710 = vpop.permute.xlu0 %5709
      %5711 = vrot.lane.b32.xlu0 %v5220, 32
      %v5712 = vpop.permute.xlu0 %5711
      %5713 = vrot.lane.b32.xlu0 %v5221, 32
      %v5714 = vpop.permute.xlu0 %5713
      %5715 = vrot.lane.b32.xlu0 %v5222, 32
      %v5716 = vpop.permute.xlu0 %5715
      %5717 = vrot.lane.b32.xlu0 %v5223, 32
      %v5718 = vpop.permute.xlu0 %5717
      %5719 = vrot.lane.b32.xlu0 %v5224, 32
      %v5720 = vpop.permute.xlu0 %5719
      %v5737 = vsel %vm1350, %v5081, %v5242
      %v5738 = vsel %vm1350, %v5082, %v5244
      %v5739 = vsel %vm1350, %v5083, %v5246
      %v5740 = vsel %vm1350, %v5084, %v5248
      %v5741 = vsel %vm1350, %v5085, %v5250
      %v5742 = vsel %vm1350, %v5086, %v5252
      %v5743 = vsel %vm1350, %v5087, %v5254
      %v5744 = vsel %vm1350, %v5088, %v5256
      %v5745 = vsel %vm1350, %v5089, %v5258
      %v5746 = vsel %vm1350, %v5090, %v5260
      %v5747 = vsel %vm1350, %v5091, %v5262
      %v5748 = vsel %vm1350, %v5092, %v5264
      %v5749 = vsel %vm1350, %v5093, %v5266
      %v5750 = vsel %vm1350, %v5094, %v5268
      %v5751 = vsel %vm1350, %v5095, %v5270
      %v5752 = vsel %vm1350, %v5096, %v5272
      %v5753 = vsel %vm2651, %v5737, %v5306
      %v5754 = vsel %vm2651, %v5738, %v5308
      %v5755 = vsel %vm2651, %v5739, %v5310
      %v5756 = vsel %vm2651, %v5740, %v5312
      %v5757 = vsel %vm2651, %v5741, %v5314
      %v5758 = vsel %vm2651, %v5742, %v5316
      %v5759 = vsel %vm2651, %v5743, %v5318
      %v5760 = vsel %vm2651, %v5744, %v5320
      %v5761 = vsel %vm2651, %v5745, %v5322
      %v5762 = vsel %vm2651, %v5746, %v5324
      %v5763 = vsel %vm2651, %v5747, %v5326
      %v5764 = vsel %vm2651, %v5748, %v5328
      %v5765 = vsel %vm2651, %v5749, %v5330
      %v5766 = vsel %vm2651, %v5750, %v5332
      %v5767 = vsel %vm2651, %v5751, %v5334
      %v5768 = vsel %vm2651, %v5752, %v5336
      %v5769 = vsel %vm2676, %v5753, %v5370
      %v5770 = vsel %vm2676, %v5754, %v5372
      %v5771 = vsel %vm2676, %v5755, %v5374
      %v5772 = vsel %vm2676, %v5756, %v5376
      %v5773 = vsel %vm2676, %v5757, %v5378
      %v5774 = vsel %vm2676, %v5758, %v5380
      %v5775 = vsel %vm2676, %v5759, %v5382
      %v5776 = vsel %vm2676, %v5760, %v5384
      %v5777 = vsel %vm2676, %v5761, %v5386
      %v5778 = vsel %vm2676, %v5762, %v5388
      %v5779 = vsel %vm2676, %v5763, %v5390
      %v5780 = vsel %vm2676, %v5764, %v5392
      %v5781 = vsel %vm2676, %v5765, %v5394
      %v5782 = vsel %vm2676, %v5766, %v5396
      %v5783 = vsel %vm2676, %v5767, %v5398
      %v5784 = vsel %vm2676, %v5768, %v5400
      %v5785 = vsel %vm2701, %v5769, %v5434
      %v5786 = vsel %vm2701, %v5770, %v5436
      %v5787 = vsel %vm2701, %v5771, %v5438
      %v5788 = vsel %vm2701, %v5772, %v5440
      %v5789 = vsel %vm2701, %v5773, %v5442
      %v5790 = vsel %vm2701, %v5774, %v5444
      %v5791 = vsel %vm2701, %v5775, %v5446
      %v5792 = vsel %vm2701, %v5776, %v5448
      %v5793 = vsel %vm2701, %v5777, %v5450
      %v5794 = vsel %vm2701, %v5778, %v5452
      %v5795 = vsel %vm2701, %v5779, %v5454
      %v5796 = vsel %vm2701, %v5780, %v5456
      %v5797 = vsel %vm2701, %v5781, %v5458
      %v5798 = vsel %vm2701, %v5782, %v5460
      %v5799 = vsel %vm2701, %v5783, %v5462
      %v5800 = vsel %vm2701, %v5784, %v5464
      %v5801 = vsel %vm2726, %v5785, %v5498
      %v5802 = vsel %vm2726, %v5786, %v5500
      %v5803 = vsel %vm2726, %v5787, %v5502
      %v5804 = vsel %vm2726, %v5788, %v5504
      %v5805 = vsel %vm2726, %v5789, %v5506
      %v5806 = vsel %vm2726, %v5790, %v5508
      %v5807 = vsel %vm2726, %v5791, %v5510
      %v5808 = vsel %vm2726, %v5792, %v5512
      %v5809 = vsel %vm2726, %v5793, %v5514
      %v5810 = vsel %vm2726, %v5794, %v5516
      %v5811 = vsel %vm2726, %v5795, %v5518
      %v5812 = vsel %vm2726, %v5796, %v5520
      %v5813 = vsel %vm2726, %v5797, %v5522
      %v5814 = vsel %vm2726, %v5798, %v5524
      %v5815 = vsel %vm2726, %v5799, %v5526
      %v5816 = vsel %vm2726, %v5800, %v5528
      %v5817 = vsel %vm2751, %v5801, %v5562
      %v5818 = vsel %vm2751, %v5802, %v5564
      %v5819 = vsel %vm2751, %v5803, %v5566
      %v5820 = vsel %vm2751, %v5804, %v5568
      %v5821 = vsel %vm2751, %v5805, %v5570
      %v5822 = vsel %vm2751, %v5806, %v5572
      %v5823 = vsel %vm2751, %v5807, %v5574
      %v5824 = vsel %vm2751, %v5808, %v5576
      %v5825 = vsel %vm2751, %v5809, %v5578
      %v5826 = vsel %vm2751, %v5810, %v5580
      %v5827 = vsel %vm2751, %v5811, %v5582
      %v5828 = vsel %vm2751, %v5812, %v5584
      %v5829 = vsel %vm2751, %v5813, %v5586
      %v5830 = vsel %vm2751, %v5814, %v5588
      %v5831 = vsel %vm2751, %v5815, %v5590
      %v5832 = vsel %vm2751, %v5816, %v5592
      %v5833 = vsel %vm2776, %v5817, %v5626
      %v5834 = vsel %vm2776, %v5818, %v5628
      %v5835 = vsel %vm2776, %v5819, %v5630
      %v5836 = vsel %vm2776, %v5820, %v5632
      %v5837 = vsel %vm2776, %v5821, %v5634
      %v5838 = vsel %vm2776, %v5822, %v5636
      %v5839 = vsel %vm2776, %v5823, %v5638
      %v5840 = vsel %vm2776, %v5824, %v5640
      %v5841 = vsel %vm2776, %v5825, %v5642
      %v5842 = vsel %vm2776, %v5826, %v5644
      %v5843 = vsel %vm2776, %v5827, %v5646
      %v5844 = vsel %vm2776, %v5828, %v5648
      %v5845 = vsel %vm2776, %v5829, %v5650
      %v5846 = vsel %vm2776, %v5830, %v5652
      %v5847 = vsel %vm2776, %v5831, %v5654
      %v5848 = vsel %vm2776, %v5832, %v5656
      %v5849 = vsel %vm2801, %v5833, %v5690
      %v5850 = vsel %vm2801, %v5834, %v5692
      %v5851 = vsel %vm2801, %v5835, %v5694
      %v5852 = vsel %vm2801, %v5836, %v5696
      %v5853 = vsel %vm2801, %v5837, %v5698
      %v5854 = vsel %vm2801, %v5838, %v5700
      %v5855 = vsel %vm2801, %v5839, %v5702
      %v5856 = vsel %vm2801, %v5840, %v5704
      %v5857 = vsel %vm2801, %v5841, %v5706
      %v5858 = vsel %vm2801, %v5842, %v5708
      %v5859 = vsel %vm2801, %v5843, %v5710
      %v5860 = vsel %vm2801, %v5844, %v5712
      %v5861 = vsel %vm2801, %v5845, %v5714
      %v5862 = vsel %vm2801, %v5846, %v5716
      %v5863 = vsel %vm2801, %v5847, %v5718
      %v5864 = vsel %vm2801, %v5848, %v5720
      %v5865 = vpack.c.bf16 %v5850, %v5849
      %v5866 = vpack.c.bf16 %v5852, %v5851
      %v5867 = vpack.c.bf16 %v5854, %v5853
      %v5868 = vpack.c.bf16 %v5856, %v5855
      %v5869 = vpack.c.bf16 %v5858, %v5857
      %v5870 = vpack.c.bf16 %v5860, %v5859
      %v5871 = vpack.c.bf16 %v5862, %v5861
      %v5872 = vpack.c.bf16 %v5864, %v5863
      %v5873 = vld [vmem:[%s23] sm:$0xf]
      %v5874 = vld [vmem:[%s23 + $0x4] sm:$0xf]
      %v5875 = vld [vmem:[%s23 + $0x8] sm:$0xf]
      %v5876 = vld [vmem:[%s23 + $0xc] sm:$0xf]
      %v5877 = vld [vmem:[%s23 + $0x10] sm:$0x3]
      %v5878 = vld [vmem:[%s24] sm:$0x1]
      %v5880 = vlaneseq
      %v5881 = vshrl.u32 %v5880, 7
      %v5882 = vsub.s32 0, %v5881
      %v5883 = vrot.slane %v5878, %v5882
      %v5890 = vunpack.c.l.b16 %v5873
      %v5891 = vunpack.c.l.b16 %v5874
      %v5892 = vunpack.c.l.b16 %v5875
      %v5893 = vunpack.c.l.b16 %v5876
      %v5894 = vunpack.c.l.b16 %v5877
      %v5895 = vpack.c.b16 %v5891, %v5890
      %v5896 = vpack.c.b16 %v5893, %v5892
      %v5897 = vpack.c.b16 %v5894, %v5894
      %v5901 = vsel %vm2865, %v5865, 0
      %v5904 = vsel %vm2865, %v5866, 0
      %v5907 = vsel %vm2865, %v5867, 0
      %v5910 = vsel %vm2865, %v5868, 0
      %v5913 = vsel %vm2865, %v5869, 0
      %v5916 = vsel %vm2865, %v5870, 0
      %v5919 = vsel %vm2865, %v5871, 0
      %v5922 = vsel %vm2865, %v5872, 0
      %v5925 = vsel %vm1393, %v5897, 0
      %5927 = vmatprep.subr.bf16.mxu0 0
      %5928 = vmatpush1.bf16.msra.mxu0 0
      %5929 = vmatprep.subr.bf16.mxu0 0
      %5930 = vmatpush1.bf16.msra.mxu0 0
      %5931 = vmatprep.subr.bf16.mxu0 0
      %5932 = vmatpush1.bf16.msra.mxu0 0
      %5933 = vmatprep.subr.bf16.mxu0 0
      %5934 = vmatpush1.bf16.msra.mxu0 0
      %5935 = vmatprep.subr.bf16.mxu0 0
      %5936 = vmatpush1.bf16.msra.mxu0 0
      %5937 = vmatprep.subr.bf16.mxu0 0
      %5938 = vmatpush1.bf16.msra.mxu0 %v5925
      %5939 = vmatprep.subr.bf16.mxu0 0
      %5940 = vmatpush1.bf16.msra.mxu0 %v5896
      %5941 = vmatprep.subr.bf16.mxu0 0
      %5942 = vmatpush1.bf16.msra.mxu0 %v5895
      %5943 = vmatprep.subr.bf16.mxu0 0
      %5944 = vmatpush2.bf16.msra.mxu0 0
      %5945 = vmatprep.subr.bf16.mxu0 0
      %5946 = vmatpush2.bf16.msra.mxu0 0
      %5947 = vmatprep.subr.bf16.mxu0 0
      %5948 = vmatpush2.bf16.msra.mxu0 0
      %5949 = vmatprep.subr.bf16.mxu0 0
      %5950 = vmatpush2.bf16.msra.mxu0 0
      %5951 = vmatprep.subr.bf16.mxu0 0
      %5952 = vmatpush2.bf16.msra.mxu0 0
      %5953 = vmatprep.subr.bf16.mxu0 0
      %5954 = vmatpush2.bf16.msra.mxu0 0
      %5955 = vmatprep.subr.bf16.mxu0 0
      %5956 = vmatpush2.bf16.msra.mxu0 0
      %5957 = vmatprep.subr.bf16.mxu0 0
      %5958 = vmatpush2.bf16.msra.mxu0 0
      %5959 = vmatprep.mubr.bf16.mxu0 0
      %5960 = vmatmul.mubr.bf16.gmra.mxu0 %v5901
      %v5961 = vpop.f32.mrf.mxu0
      %v5962 = vadd.f32 %v5883, %v5961
      %v5963 = vpop.f32.mrf.mxu0
      %v5964 = vpop.f32.mrf.mxu0
      %v5965 = vadd.f32 %v5883, %v5964
      %v5966 = vpop.f32.mrf.mxu0
      %5967 = vmatprep.mubr.bf16.mxu0 0
      %5968 = vmatmul.mubr.bf16.gmra.mxu0 %v5904
      %v5969 = vpop.f32.mrf.mxu0
      %v5970 = vadd.f32 %v5883, %v5969
      %v5971 = vpop.f32.mrf.mxu0
      %v5972 = vpop.f32.mrf.mxu0
      %v5973 = vadd.f32 %v5883, %v5972
      %v5974 = vpop.f32.mrf.mxu0
      %5975 = vmatprep.mubr.bf16.mxu0 0
      %5976 = vmatmul.mubr.bf16.gmra.mxu0 %v5907
      %v5977 = vpop.f32.mrf.mxu0
      %v5978 = vadd.f32 %v5883, %v5977
      %v5979 = vpop.f32.mrf.mxu0
      %v5980 = vpop.f32.mrf.mxu0
      %v5981 = vadd.f32 %v5883, %v5980
      %v5982 = vpop.f32.mrf.mxu0
      %5983 = vmatprep.mubr.bf16.mxu0 0
      %5984 = vmatmul.mubr.bf16.gmra.mxu0 %v5910
      %v5985 = vpop.f32.mrf.mxu0
      %v5986 = vadd.f32 %v5883, %v5985
      %v5987 = vpop.f32.mrf.mxu0
      %v5988 = vpop.f32.mrf.mxu0
      %v5989 = vadd.f32 %v5883, %v5988
      %v5990 = vpop.f32.mrf.mxu0
      %5991 = vmatprep.mubr.bf16.mxu0 0
      %5992 = vmatmul.mubr.bf16.gmra.mxu0 %v5913
      %v5993 = vpop.f32.mrf.mxu0
      %v5994 = vadd.f32 %v5883, %v5993
      %v5995 = vpop.f32.mrf.mxu0
      %v5996 = vpop.f32.mrf.mxu0
      %v5997 = vadd.f32 %v5883, %v5996
      %v5998 = vpop.f32.mrf.mxu0
      %5999 = vmatprep.mubr.bf16.mxu0 0
      %6000 = vmatmul.mubr.bf16.gmra.mxu0 %v5916
      %v6001 = vpop.f32.mrf.mxu0
      %v6002 = vadd.f32 %v5883, %v6001
      %v6003 = vpop.f32.mrf.mxu0
      %v6004 = vpop.f32.mrf.mxu0
      %v6005 = vadd.f32 %v5883, %v6004
      %v6006 = vpop.f32.mrf.mxu0
      %6007 = vmatprep.mubr.bf16.mxu0 0
      %6008 = vmatmul.mubr.bf16.gmra.mxu0 %v5919
      %v6009 = vpop.f32.mrf.mxu0
      %v6010 = vadd.f32 %v5883, %v6009
      %v6011 = vpop.f32.mrf.mxu0
      %v6012 = vpop.f32.mrf.mxu0
      %v6013 = vadd.f32 %v5883, %v6012
      %v6014 = vpop.f32.mrf.mxu0
      %6015 = vmatprep.mubr.bf16.mxu0 0
      %6016 = vmatmul.mubr.bf16.gmra.mxu0 %v5922
      %v6017 = vpop.f32.mrf.mxu0
      %v6018 = vadd.f32 %v5883, %v6017
      %v6019 = vpop.f32.mrf.mxu0
      %v6020 = vpop.f32.mrf.mxu0
      %v6021 = vadd.f32 %v5883, %v6020
      %v6022 = vpop.f32.mrf.mxu0
      %6023 = vdwg.mxu0
      %6040 = vrot.lane.b32.xlu0 %v5962, 12
      %v6041 = vpop.permute.xlu0 %6040
      %6042 = vrot.lane.b32.xlu0 %v5965, 12
      %v6043 = vpop.permute.xlu0 %6042
      %6044 = vrot.lane.b32.xlu0 %v5970, 12
      %v6045 = vpop.permute.xlu0 %6044
      %6046 = vrot.lane.b32.xlu0 %v5973, 12
      %v6047 = vpop.permute.xlu0 %6046
      %6048 = vrot.lane.b32.xlu0 %v5978, 12
      %v6049 = vpop.permute.xlu0 %6048
      %6050 = vrot.lane.b32.xlu0 %v5981, 12
      %v6051 = vpop.permute.xlu0 %6050
      %6052 = vrot.lane.b32.xlu0 %v5986, 12
      %v6053 = vpop.permute.xlu0 %6052
      %6054 = vrot.lane.b32.xlu0 %v5989, 12
      %v6055 = vpop.permute.xlu0 %6054
      %6056 = vrot.lane.b32.xlu0 %v5994, 12
      %v6057 = vpop.permute.xlu0 %6056
      %6058 = vrot.lane.b32.xlu0 %v5997, 12
      %v6059 = vpop.permute.xlu0 %6058
      %6060 = vrot.lane.b32.xlu0 %v6002, 12
      %v6061 = vpop.permute.xlu0 %6060
      %6062 = vrot.lane.b32.xlu0 %v6005, 12
      %v6063 = vpop.permute.xlu0 %6062
      %6064 = vrot.lane.b32.xlu0 %v6010, 12
      %v6065 = vpop.permute.xlu0 %6064
      %6066 = vrot.lane.b32.xlu0 %v6013, 12
      %v6067 = vpop.permute.xlu0 %6066
      %6068 = vrot.lane.b32.xlu0 %v6018, 12
      %v6069 = vpop.permute.xlu0 %6068
      %6070 = vrot.lane.b32.xlu0 %v6021, 12
      %v6071 = vpop.permute.xlu0 %6070
      %v6088 = vsel %vm2676, %v4754, %v6041
      %v6089 = vsel %vm2676, %v4755, %v6043
      %v6090 = vsel %vm2676, %v4756, %v6045
      %v6091 = vsel %vm2676, %v4757, %v6047
      %v6092 = vsel %vm2676, %v4758, %v6049
      %v6093 = vsel %vm2676, %v4759, %v6051
      %v6094 = vsel %vm2676, %v4760, %v6053
      %v6095 = vsel %vm2676, %v4761, %v6055
      %v6096 = vsel %vm2676, %v4762, %v6057
      %v6097 = vsel %vm2676, %v4763, %v6059
      %v6098 = vsel %vm2676, %v4764, %v6061
      %v6099 = vsel %vm2676, %v4765, %v6063
      %v6100 = vsel %vm2676, %v4766, %v6065
      %v6101 = vsel %vm2676, %v4767, %v6067
      %v6102 = vsel %vm2676, %v4768, %v6069
      %v6103 = vsel %vm2676, %v4769, %v6071
      %6104 = vst.msk [vmem:[%s1193] sm:$0xff] %vm2701, %v6088
      %6105 = vst.msk [vmem:[%s1193 + $0x8] sm:$0xff] %vm2701, %v6089
      %6106 = vst.msk [vmem:[%s1193 + $0x10] sm:$0xff] %vm2701, %v6090
      %6107 = vst.msk [vmem:[%s1193 + $0x18] sm:$0xff] %vm2701, %v6091
      %6108 = vst.msk [vmem:[%s1193 + $0x20] sm:$0xff] %vm2701, %v6092
      %6109 = vst.msk [vmem:[%s1193 + $0x28] sm:$0xff] %vm2701, %v6093
      %6110 = vst.msk [vmem:[%s1193 + $0x30] sm:$0xff] %vm2701, %v6094
      %6111 = vst.msk [vmem:[%s1193 + $0x38] sm:$0xff] %vm2701, %v6095
      %6112 = vst.msk [vmem:[%s1193 + $0x40] sm:$0xff] %vm2701, %v6096
      %6113 = vst.msk [vmem:[%s1193 + $0x48] sm:$0xff] %vm2701, %v6097
      %6114 = vst.msk [vmem:[%s1193 + $0x50] sm:$0xff] %vm2701, %v6098
      %6115 = vst.msk [vmem:[%s1193 + $0x58] sm:$0xff] %vm2701, %v6099
      %6116 = vst.msk [vmem:[%s1193 + $0x60] sm:$0xff] %vm2701, %v6100
      %6117 = vst.msk [vmem:[%s1193 + $0x68] sm:$0xff] %vm2701, %v6101
      %6118 = vst.msk [vmem:[%s1193 + $0x70] sm:$0xff] %vm2701, %v6102
      %6119 = vst.msk [vmem:[%s1193 + $0x78] sm:$0xff] %vm2701, %v6103
      %s6120 = smul.u32 8, %s41
      %p6121 = scmp.lt.s32.totalorder %s40, 1
      %s6122 = scalar_select %p6121, %s40, 1
      %p6123 = scmp.lt.s32.totalorder %s6120, 15
      %s6124 = scalar_select %p6123, %s6120, 15
      %s6125 = smul.addr %s6124, 2
      %s6126 = smul.addr %s6122, 32
      %s6127 = sadd.s32 %s6125, %s6126
      %s6128 = smul.addr %s6127, 8
      %s6129 = scalar_lea.vmem %s25, %s6128
      // Predicated region
      $region121: #{dense_block_forward.1} parent=119 // pred_check
        %p6130 = pneg %p694
      $region122: #{dense_block_forward.1} parent=119 // pred_check_branch
        %6132 = sbr.rel (%p6130) target = $region124
      $region123: #{dense_block_forward.1} parent=119 // pred_region
        %s6133 = smul.u32 8, %s41
      $region124: #{dense_block_forward.1} parent=119 // pred_fallthru
        _
    $region120: #{dense_block_forward.1} parent=5 // pred_fallthru
      _
    %p6134 = scmp.le.s32.totalorder 2, %s31
    // Predicated region
    $region125: #{dense_block_forward.1} parent=5 // pred_check
      %p6135 = pneg %p6134
    $region126: #{dense_block_forward.1} parent=5 // pred_check_branch
      %6137 = sbr.rel (%p6135) target = $region128
    $region127: #{dense_block_forward.1} parent=5 // pred_region
      %s6138 = ssub.s32 %s31, 2
      // Predicated region
      $region129: #{dense_block_forward.1} parent=127 // pred_check
        %p6139 = pneg %p700
      $region130: #{dense_block_forward.1} parent=127 // pred_check_branch
        %6141 = sbr.rel (%p6139) target = $region132
      $region131: #{dense_block_forward.1} parent=127 // pred_region
        %s6142 = smul.u32 8, %s43
        %p6143 = scmp.lt.s32.totalorder %s42, 1
        %s6144 = scalar_select %p6143, %s42, 1
        %p6145 = scmp.lt.s32.totalorder %s6142, 15
        %s6146 = scalar_select %p6145, %s6142, 15
        %s6147 = smul.addr %s6146, 2
        %s6148 = smul.addr %s6144, 32
        %s6149 = sadd.s32 %s6147, %s6148
        %s6150 = smul.addr %s6149, 8
        %s6151 = scalar_lea.vmem %s25, %s6150
      $region132: #{dense_block_forward.1} parent=127 // pred_fallthru
        _
    $region128: #{dense_block_forward.1} parent=5 // pred_fallthru
      _
  $region6: #{dense_block_forward.1} parent=0 // loop_footer
    %s35 = sadd.s32 1, %s31
  $region7: #{dense_block_forward.1} parent=0 // loop_footer_branch
    %30 = sbr.rel target = $region3
  $region8: #{dense_block_forward.1} parent=0 // loop_exit
    _

</llo_original>
